<compile_context>
chip_gen: v7x
topology: tpu7x:2x2x1
jax: 0.10.0
libtpu: 0.0.40
codegen_flags: <defaults>
</compile_context>

<pallas_src>
import functools

import jax
import jax.numpy as jnp
from jax.experimental import pallas as pl
from jax.experimental.pallas import tpu as pltpu


def _round_up(x, m):
    return (x + m - 1) // m * m


# --------------------------- fused Pallas kernel ----------------------------

def _fused_generator_kernel(lhs1_ref, w1_ref, w2_ref, w3_ref, tail_ref, o_ref,
                            x2_ref, x3_ref, *, Ws, K2, K3, M1p, M2p, M3p, F,
                            group):
    """One image per grid step; the full 6-conv pipeline, VMEM resident.

      lhs1_ref : [1, M1p, 49] bf16  wrapper-built im2col of the 7x7/s2 layer
      w1_ref   : [49, F]      bf16
      w2_ref   : [K2*K2*F, F] bf16  (row = tap*F + cin, taps kh-major)
      w3_ref   : [K3*K3*F, F] bf16
      tail_ref : [1, F]       f32   fused fb2 o fb3 o final 1x1 weights
      o_ref    : [1, M3p, 1]  f32   flat stride-1 layer-3 output (pre-subsample)
      x2_ref   : [M1p+8, F]   bf16  layer-1 output (flat, stored width Ws)
      x3_ref   : [M2p+8, F]   bf16  layer-2 output (flat, stored width Ws)
    """
    # ---- Layer 1: 7x7 stride-2 conv as one GEMM over the wrapper-built patches.
    y1 = jnp.dot(lhs1_ref[0], w1_ref[...], preferred_element_type=jnp.float32)
    x2_ref[pl.ds(0, M1p), :] = y1.astype(jnp.bfloat16)

    def conv_s1(x_ref, w_ref, K, rows):
        # VALID stride-1 conv on the flattened VMEM image (stored width Ws): for
        # tap (kh, kw) the LHS is the contiguous slab starting at kh*Ws + kw.
        # Taps are lane-concatenated in groups of `group`, so each dot feeds the
        # MXU a group*F-deep (=256) contraction.  Rows whose flattened column
        # exceeds the valid width are junk and are ignored downstream.
        taps = [kh * Ws + kw for kh in range(K) for kw in range(K)]
        acc = jnp.zeros((rows, F), jnp.float32)
        for g0 in range(0, K * K, group):
            offs = taps[g0:g0 + group]
            slabs = [x_ref[pl.ds(o, rows), :] for o in offs]
            lhs = slabs[0] if len(slabs) == 1 else jnp.concatenate(slabs, axis=1)
            acc = acc + jnp.dot(lhs, w_ref[pl.ds(g0 * F, len(offs) * F), :],
                                preferred_element_type=jnp.float32)
        return acc

    # ---- Layer 2: 5x5 stride-1 conv.
    y2 = conv_s1(x2_ref, w2_ref, K2, M2p)
    x3_ref[pl.ds(0, M2p), :] = y2.astype(jnp.bfloat16)

    # ---- Layer 3: 3x3 conv evaluated at stride 1 (subsampled by the wrapper),
    # fused with the three trailing 1x1 convs, applied in f32.
    y3 = conv_s1(x3_ref, w3_ref, K3, M3p)
    o_ref[0] = jnp.sum(y3 * tail_ref[...], axis=-1, keepdims=True)


# ----------------------------- forward wrapper ------------------------------

def init_params(key, features=64):
    # struct = [7, 5, 3, 1, 1, 1]; all convs bias=False (PyTorch OIHW shapes).
    shapes = [
        ("first", (features, 1, 7, 7)),         # stride 2
        ("fb0",   (features, features, 5, 5)),  # stride 1
        ("fb1",   (features, features, 3, 3)),  # stride 2
        ("fb2",   (features, features, 1, 1)),
        ("fb3",   (features, features, 1, 1)),
        ("final", (1, features, 1, 1)),
    ]
    params = {}
    for name, shp in shapes:
        key, sub = jax.random.split(key)
        fan_in = shp[1] * shp[2] * shp[3]
        params[name] = jax.random.normal(sub, shp, jnp.float32) / jnp.sqrt(
            jnp.float32(fan_in))
    return params


def generator_dn_x4_forward(x_nchw, params, features=64):
    """x_nchw: [B, 3, H, W] f32 -> [B, 3, Ho, Wo] f32 (same map as the PyTorch module)."""
    F = features
    B, C, H, W = x_nchw.shape
    assert C == 3
    N = B * 3
    K1, K2, K3 = 7, 5, 3

    # Layer geometry (all convs VALID).
    Ho1, Wo1 = (H - K1) // 2 + 1, (W - K1) // 2 + 1        # first (stride 2)
    Ho2, Wo2 = Ho1 - K2 + 1, Wo1 - K2 + 1                  # fb0
    Ho3, Wo3 = (Ho2 - K3) // 2 + 1, (Wo2 - K3) // 2 + 1    # fb1 (stride 2)
    assert Ho3 >= 1 and Wo3 >= 1, "input too small for Generator_DN_x4"

    M1 = Ho1 * Wo1                                         # layer-1 output positions
    Mv2 = (Ho2 - 1) * Wo1 + Wo2                            # flat-slab rows, layer 2
    Mv3 = (Ho2 - K3) * Wo1 + (Wo2 - K3 + 1)                # flat-slab rows, layer 3 (s1)
    M1p, M2p, M3p = _round_up(M1, 8), _round_up(Mv2, 8), _round_up(Mv3, 8)

    # make_1ch: [B,3,H,W] -> [3B,H,W] single-channel images.
    x1 = x_nchw.reshape(N, H, W).astype(jnp.float32)

    # Wrapper-side im2col for the first layer only (tiny, read once):
    #   lhs1[n, ho*Wo1+wo, kh*7+kw] = x[n, 2*ho+kh, 2*wo+kw]
    slabs = [x1[:, kh:kh + 2 * Ho1 - 1:2, kw:kw + 2 * Wo1 - 1:2]
             for kh in range(K1) for kw in range(K1)]
    lhs1 = jnp.stack(slabs, axis=-1).reshape(N, M1, K1 * K1)
    lhs1 = jnp.pad(lhs1, ((0, 0), (0, M1p - M1), (0, 0))).astype(jnp.bfloat16)

    # Weights: [Cout, Cin, K, K] -> [K*K*Cin, Cout] (tap-major rows).
    w1 = params["first"][:, 0].reshape(F, K1 * K1).T.astype(jnp.bfloat16)
    w2 = jnp.transpose(params["fb0"], (2, 3, 1, 0)).reshape(K2 * K2 * F, F)
    w3 = jnp.transpose(params["fb1"], (2, 3, 1, 0)).reshape(K3 * K3 * F, F)
    w2, w3 = w2.astype(jnp.bfloat16), w3.astype(jnp.bfloat16)
    # fb2 o fb3 o final collapse to a single [F] vector (no nonlinearities).
    tail = (params["fb2"][:, :, 0, 0].T
            @ params["fb3"][:, :, 0, 0].T
            @ params["final"][:, :, 0, 0].T)               # [F, 1]
    tail_row = tail.T.astype(jnp.float32)                  # [1, F]

    kernel = functools.partial(
        _fused_generator_kernel, Ws=Wo1, K2=K2, K3=K3,
        M1p=M1p, M2p=M2p, M3p=M3p, F=F, group=4)

    flops = 2 * N * (M1p * (K1 * K1) * F + M2p * (K2 * K2 * F) * F
                     + M3p * (K3 * K3 * F) * F + M3p * F)
    bytes_accessed = (lhs1.size * 2 + w1.size * 2 + w2.size * 2 + w3.size * 2
                      + tail_row.size * 4 + N * M3p * 4)

    out_flat = pl.pallas_call(
        kernel,
        out_shape=jax.ShapeDtypeStruct((N, M3p, 1), jnp.float32),
        grid=(N,),
        in_specs=[
            pl.BlockSpec((1, M1p, K1 * K1), lambda n: (n, 0, 0)),
            pl.BlockSpec((K1 * K1, F), lambda n: (0, 0)),
            pl.BlockSpec((K2 * K2 * F, F), lambda n: (0, 0)),
            pl.BlockSpec((K3 * K3 * F, F), lambda n: (0, 0)),
            pl.BlockSpec((1, F), lambda n: (0, 0)),
        ],
        out_specs=pl.BlockSpec((1, M3p, 1), lambda n: (n, 0, 0)),
        scratch_shapes=[
            pltpu.VMEM((M1p + 8, F), jnp.bfloat16),   # layer-1 output (flat)
            pltpu.VMEM((M2p + 8, F), jnp.bfloat16),   # layer-2 output (flat)
        ],
        compiler_params=pltpu.CompilerParams(
            dimension_semantics=("parallel",),
            vmem_limit_bytes=32 * 1024 * 1024,
        ),
        cost_estimate=pl.CostEstimate(flops=flops, transcendentals=0,
                                      bytes_accessed=bytes_accessed),
    )(lhs1, w1, w2, w3, tail_row)

    # Strip flat-slab junk rows and apply the layer-3 stride-2 subsampling (tiny).
    flat = out_flat[:, :, 0]                               # [N, M3p]
    needed = (2 * Ho3 - 1) * Wo1
    if needed > M3p:
        flat = jnp.pad(flat, ((0, 0), (0, needed - M3p)))
    else:
        flat = flat[:, :needed]
    out = flat.reshape(N, 2 * Ho3 - 1, Wo1)[:, ::2, :2 * Wo3 - 1:2]

    # make_3ch: [3B, Ho3, Wo3] -> [B, 3, Ho3, Wo3]
    return out.reshape(B, 3, Ho3, Wo3)


# Pure-JAX reference (lax conv, f32 HIGHEST) for correctness check.
def reference_forward(x_nchw, params):
    B, C, H, W = x_nchw.shape
    x = x_nchw.reshape(B * C, 1, H, W)

    def conv(x, w, s):
        return jax.lax.conv_general_dilated(
            x, w, window_strides=(s, s), padding="VALID",
            dimension_numbers=("NCHW", "OIHW", "NCHW"),
            precision=jax.lax.Precision.HIGHEST,
        )

    x = conv(x, params["first"], 2)
    x = conv(x, params["fb0"], 1)
    x = conv(x, params["fb1"], 2)
    x = conv(x, params["fb2"], 1)
    x = conv(x, params["fb3"], 1)
    x = conv(x, params["final"], 1)
    _, _, Ho, Wo = x.shape
    return x.reshape(B, C, Ho, Wo)


# TODO(synk): calc_ker()/analytic_kernel_w is offline kernel analysis (not part of
# forward) and is intentionally not implemented.

if __name__ == "__main__":
    key = jax.random.PRNGKey(0)
    kx, kp = jax.random.split(key)
    x = jax.random.normal(kx, (2, 3, 32, 32), jnp.float32)
    params = init_params(kp, features=64)

    fwd = jax.jit(generator_dn_x4_forward)
    out = jax.block_until_ready(fwd(x, params))

    ref = reference_forward(x, params)
    assert out.shape == (2, 3, 4, 4), out.shape
    assert ref.shape == out.shape
    # bf16 MXU path vs f32-HIGHEST reference: loose but structure-sensitive check.
    rel = float(jnp.linalg.norm(out - ref) / jnp.linalg.norm(ref))
    mae = float(jnp.max(jnp.abs(out - ref)))
    assert rel < 5e-2 and mae < 2.5e-1, (rel, mae)
    print("KERNEL_OK")
</pallas_src>

<mosaic_0001>
module attributes {stable_mosaic.version = 11 : i64} {
  func.func @_fused_generator_kernel(%arg0: i32, %arg1: memref<1x176x49xbf16, #tpu.memory_space<vmem>>, %arg2: memref<49x64xbf16, #tpu.memory_space<vmem>>, %arg3: memref<1600x64xbf16, #tpu.memory_space<vmem>>, %arg4: memref<576x64xbf16, #tpu.memory_space<vmem>>, %arg5: memref<1x64xf32, #tpu.memory_space<vmem>>, %arg6: memref<1x88x1xf32, #tpu.memory_space<vmem>>, %arg7: memref<184x64xbf16, #tpu.memory_space<vmem>>, %arg8: memref<128x64xbf16, #tpu.memory_space<vmem>>) attributes {dimension_semantics = [#tpu.dimension_semantics<parallel>], iteration_bounds = array<i64: 6>, scalar_prefetch = 0 : i64, scratch_operands = 2 : i64, tpu.core_type = #tpu.core_type<tc>, window_params = [{transform_indices = @transform_0, window_bounds = array<i64: 1, 176, 49>}, {pipeline_mode = #tpu.pipeline_mode<synchronous>, transform_indices = @transform_1, window_bounds = array<i64: 49, 64>}, {pipeline_mode = #tpu.pipeline_mode<synchronous>, transform_indices = @transform_2, window_bounds = array<i64: 1600, 64>}, {pipeline_mode = #tpu.pipeline_mode<synchronous>, transform_indices = @transform_3, window_bounds = array<i64: 576, 64>}, {pipeline_mode = #tpu.pipeline_mode<synchronous>, transform_indices = @transform_4, window_bounds = array<i64: 1, 64>}, {transform_indices = @transform_5, window_bounds = array<i64: 1, 88, 1>}]} {
    %c0 = arith.constant 0 : index
    %c0_0 = arith.constant 0 : index
    %c0_1 = arith.constant 0 : index
    %0 = vector.load %arg1[%c0, %c0_0, %c0_1] : memref<1x176x49xbf16, #tpu.memory_space<vmem>>, vector<1x176x49xbf16>
    %1 = vector.shape_cast %0 : vector<1x176x49xbf16> to vector<176x49xbf16>
    %c0_2 = arith.constant 0 : index
    %c0_3 = arith.constant 0 : index
    %2 = vector.load %arg2[%c0_2, %c0_3] : memref<49x64xbf16, #tpu.memory_space<vmem>>, vector<49x64xbf16>
    %cst = arith.constant dense<0.000000e+00> : vector<176x64xf32>
    %3 = tpu.matmul %1, %2, %cst {dimension_numbers = #tpu.dot_dimension_numbers<[1], [0], [0], [1], [0, 0, 1, 1], [], []>} : vector<176x49xbf16>, vector<49x64xbf16>, vector<176x64xf32> -> vector<176x64xf32>
    %4 = arith.truncf %3 : vector<176x64xf32> to vector<176x64xbf16>
    %c0_4 = arith.constant 0 : index
    %c0_5 = arith.constant 0 : index
    %5 = vector.load %arg7[%c0_4, %c0_5] : memref<184x64xbf16, #tpu.memory_space<vmem>>, vector<176x64xbf16>
    tpu.vector_store %arg7[%c0_4, %c0_5], %4 {strides = array<i32>} : memref<184x64xbf16, #tpu.memory_space<vmem>>, vector<176x64xbf16>,
    %cst_6 = arith.constant 0.000000e+00 : f32
    %6 = vector.broadcast %cst_6 : f32 to vector<120x64xf32>
    %c0_7 = arith.constant 0 : index
    %c0_8 = arith.constant 0 : index
    %7 = vector.load %arg7[%c0_7, %c0_8] : memref<184x64xbf16, #tpu.memory_space<vmem>>, vector<120x64xbf16>
    %c1 = arith.constant 1 : index
    %c0_9 = arith.constant 0 : index
    %8 = vector.load %arg7[%c1, %c0_9] : memref<184x64xbf16, #tpu.memory_space<vmem>>, vector<120x64xbf16>
    %c2 = arith.constant 2 : index
    %c0_10 = arith.constant 0 : index
    %9 = vector.load %arg7[%c2, %c0_10] : memref<184x64xbf16, #tpu.memory_space<vmem>>, vector<120x64xbf16>
    %c3 = arith.constant 3 : index
    %c0_11 = arith.constant 0 : index
    %10 = vector.load %arg7[%c3, %c0_11] : memref<184x64xbf16, #tpu.memory_space<vmem>>, vector<120x64xbf16>
    %11 = tpu.concatenate %7, %8, %9, %10 in 1 : vector<120x64xbf16>, vector<120x64xbf16>, vector<120x64xbf16>, vector<120x64xbf16> -> vector<120x256xbf16>
    %c0_12 = arith.constant 0 : index
    %c0_13 = arith.constant 0 : index
    %12 = vector.load %arg3[%c0_12, %c0_13] : memref<1600x64xbf16, #tpu.memory_space<vmem>>, vector<256x64xbf16>
    %cst_14 = arith.constant dense<0.000000e+00> : vector<120x64xf32>
    %13 = tpu.matmul %11, %12, %cst_14 {dimension_numbers = #tpu.dot_dimension_numbers<[1], [0], [0], [1], [0, 0, 1, 1], [], []>} : vector<120x256xbf16>, vector<256x64xbf16>, vector<120x64xf32> -> vector<120x64xf32>
    %14 = arith.addf %6, %13 : vector<120x64xf32>
    %c4 = arith.constant 4 : index
    %c0_15 = arith.constant 0 : index
    %15 = vector.load %arg7[%c4, %c0_15] : memref<184x64xbf16, #tpu.memory_space<vmem>>, vector<120x64xbf16>
    %c13 = arith.constant 13 : index
    %c0_16 = arith.constant 0 : index
    %16 = vector.load %arg7[%c13, %c0_16] : memref<184x64xbf16, #tpu.memory_space<vmem>>, vector<120x64xbf16>
    %c14 = arith.constant 14 : index
    %c0_17 = arith.constant 0 : index
    %17 = vector.load %arg7[%c14, %c0_17] : memref<184x64xbf16, #tpu.memory_space<vmem>>, vector<120x64xbf16>
    %c15 = arith.constant 15 : index
    %c0_18 = arith.constant 0 : index
    %18 = vector.load %arg7[%c15, %c0_18] : memref<184x64xbf16, #tpu.memory_space<vmem>>, vector<120x64xbf16>
    %19 = tpu.concatenate %15, %16, %17, %18 in 1 : vector<120x64xbf16>, vector<120x64xbf16>, vector<120x64xbf16>, vector<120x64xbf16> -> vector<120x256xbf16>
    %c256 = arith.constant 256 : index
    %c0_19 = arith.constant 0 : index
    %20 = vector.load %arg3[%c256, %c0_19] : memref<1600x64xbf16, #tpu.memory_space<vmem>>, vector<256x64xbf16>
    %cst_20 = arith.constant dense<0.000000e+00> : vector<120x64xf32>
    %21 = tpu.matmul %19, %20, %cst_20 {dimension_numbers = #tpu.dot_dimension_numbers<[1], [0], [0], [1], [0, 0, 1, 1], [], []>} : vector<120x256xbf16>, vector<256x64xbf16>, vector<120x64xf32> -> vector<120x64xf32>
    %22 = arith.addf %14, %21 : vector<120x64xf32>
    %c16 = arith.constant 16 : index
    %c0_21 = arith.constant 0 : index
    %23 = vector.load %arg7[%c16, %c0_21] : memref<184x64xbf16, #tpu.memory_space<vmem>>, vector<120x64xbf16>
    %c17 = arith.constant 17 : index
    %c0_22 = arith.constant 0 : index
    %24 = vector.load %arg7[%c17, %c0_22] : memref<184x64xbf16, #tpu.memory_space<vmem>>, vector<120x64xbf16>
    %c26 = arith.constant 26 : index
    %c0_23 = arith.constant 0 : index
    %25 = vector.load %arg7[%c26, %c0_23] : memref<184x64xbf16, #tpu.memory_space<vmem>>, vector<120x64xbf16>
    %c27 = arith.constant 27 : index
    %c0_24 = arith.constant 0 : index
    %26 = vector.load %arg7[%c27, %c0_24] : memref<184x64xbf16, #tpu.memory_space<vmem>>, vector<120x64xbf16>
    %27 = tpu.concatenate %23, %24, %25, %26 in 1 : vector<120x64xbf16>, vector<120x64xbf16>, vector<120x64xbf16>, vector<120x64xbf16> -> vector<120x256xbf16>
    %c512 = arith.constant 512 : index
    %c0_25 = arith.constant 0 : index
    %28 = vector.load %arg3[%c512, %c0_25] : memref<1600x64xbf16, #tpu.memory_space<vmem>>, vector<256x64xbf16>
    %cst_26 = arith.constant dense<0.000000e+00> : vector<120x64xf32>
    %29 = tpu.matmul %27, %28, %cst_26 {dimension_numbers = #tpu.dot_dimension_numbers<[1], [0], [0], [1], [0, 0, 1, 1], [], []>} : vector<120x256xbf16>, vector<256x64xbf16>, vector<120x64xf32> -> vector<120x64xf32>
    %30 = arith.addf %22, %29 : vector<120x64xf32>
    %c28 = arith.constant 28 : index
    %c0_27 = arith.constant 0 : index
    %31 = vector.load %arg7[%c28, %c0_27] : memref<184x64xbf16, #tpu.memory_space<vmem>>, vector<120x64xbf16>
    %c29 = arith.constant 29 : index
    %c0_28 = arith.constant 0 : index
    %32 = vector.load %arg7[%c29, %c0_28] : memref<184x64xbf16, #tpu.memory_space<vmem>>, vector<120x64xbf16>
    %c30 = arith.constant 30 : index
    %c0_29 = arith.constant 0 : index
    %33 = vector.load %arg7[%c30, %c0_29] : memref<184x64xbf16, #tpu.memory_space<vmem>>, vector<120x64xbf16>
    %c39 = arith.constant 39 : index
    %c0_30 = arith.constant 0 : index
    %34 = vector.load %arg7[%c39, %c0_30] : memref<184x64xbf16, #tpu.memory_space<vmem>>, vector<120x64xbf16>
    %35 = tpu.concatenate %31, %32, %33, %34 in 1 : vector<120x64xbf16>, vector<120x64xbf16>, vector<120x64xbf16>, vector<120x64xbf16> -> vector<120x256xbf16>
    %c768 = arith.constant 768 : index
    %c0_31 = arith.constant 0 : index
    %36 = vector.load %arg3[%c768, %c0_31] : memref<1600x64xbf16, #tpu.memory_space<vmem>>, vector<256x64xbf16>
    %cst_32 = arith.constant dense<0.000000e+00> : vector<120x64xf32>
    %37 = tpu.matmul %35, %36, %cst_32 {dimension_numbers = #tpu.dot_dimension_numbers<[1], [0], [0], [1], [0, 0, 1, 1], [], []>} : vector<120x256xbf16>, vector<256x64xbf16>, vector<120x64xf32> -> vector<120x64xf32>
    %38 = arith.addf %30, %37 : vector<120x64xf32>
    %c40 = arith.constant 40 : index
    %c0_33 = arith.constant 0 : index
    %39 = vector.load %arg7[%c40, %c0_33] : memref<184x64xbf16, #tpu.memory_space<vmem>>, vector<120x64xbf16>
    %c41 = arith.constant 41 : index
    %c0_34 = arith.constant 0 : index
    %40 = vector.load %arg7[%c41, %c0_34] : memref<184x64xbf16, #tpu.memory_space<vmem>>, vector<120x64xbf16>
    %c42 = arith.constant 42 : index
    %c0_35 = arith.constant 0 : index
    %41 = vector.load %arg7[%c42, %c0_35] : memref<184x64xbf16, #tpu.memory_space<vmem>>, vector<120x64xbf16>
    %c43 = arith.constant 43 : index
    %c0_36 = arith.constant 0 : index
    %42 = vector.load %arg7[%c43, %c0_36] : memref<184x64xbf16, #tpu.memory_space<vmem>>, vector<120x64xbf16>
    %43 = tpu.concatenate %39, %40, %41, %42 in 1 : vector<120x64xbf16>, vector<120x64xbf16>, vector<120x64xbf16>, vector<120x64xbf16> -> vector<120x256xbf16>
    %c1024 = arith.constant 1024 : index
    %c0_37 = arith.constant 0 : index
    %44 = vector.load %arg3[%c1024, %c0_37] : memref<1600x64xbf16, #tpu.memory_space<vmem>>, vector<256x64xbf16>
    %cst_38 = arith.constant dense<0.000000e+00> : vector<120x64xf32>
    %45 = tpu.matmul %43, %44, %cst_38 {dimension_numbers = #tpu.dot_dimension_numbers<[1], [0], [0], [1], [0, 0, 1, 1], [], []>} : vector<120x256xbf16>, vector<256x64xbf16>, vector<120x64xf32> -> vector<120x64xf32>
    %46 = arith.addf %38, %45 : vector<120x64xf32>
    %c52 = arith.constant 52 : index
    %c0_39 = arith.constant 0 : index
    %47 = vector.load %arg7[%c52, %c0_39] : memref<184x64xbf16, #tpu.memory_space<vmem>>, vector<120x64xbf16>
    %c53 = arith.constant 53 : index
    %c0_40 = arith.constant 0 : index
    %48 = vector.load %arg7[%c53, %c0_40] : memref<184x64xbf16, #tpu.memory_space<vmem>>, vector<120x64xbf16>
    %c54 = arith.constant 54 : index
    %c0_41 = arith.constant 0 : index
    %49 = vector.load %arg7[%c54, %c0_41] : memref<184x64xbf16, #tpu.memory_space<vmem>>, vector<120x64xbf16>
    %c55 = arith.constant 55 : index
    %c0_42 = arith.constant 0 : index
    %50 = vector.load %arg7[%c55, %c0_42] : memref<184x64xbf16, #tpu.memory_space<vmem>>, vector<120x64xbf16>
    %51 = tpu.concatenate %47, %48, %49, %50 in 1 : vector<120x64xbf16>, vector<120x64xbf16>, vector<120x64xbf16>, vector<120x64xbf16> -> vector<120x256xbf16>
    %c1280 = arith.constant 1280 : index
    %c0_43 = arith.constant 0 : index
    %52 = vector.load %arg3[%c1280, %c0_43] : memref<1600x64xbf16, #tpu.memory_space<vmem>>, vector<256x64xbf16>
    %cst_44 = arith.constant dense<0.000000e+00> : vector<120x64xf32>
    %53 = tpu.matmul %51, %52, %cst_44 {dimension_numbers = #tpu.dot_dimension_numbers<[1], [0], [0], [1], [0, 0, 1, 1], [], []>} : vector<120x256xbf16>, vector<256x64xbf16>, vector<120x64xf32> -> vector<120x64xf32>
    %54 = arith.addf %46, %53 : vector<120x64xf32>
    %c56 = arith.constant 56 : index
    %c0_45 = arith.constant 0 : index
    %55 = vector.load %arg7[%c56, %c0_45] : memref<184x64xbf16, #tpu.memory_space<vmem>>, vector<120x64xbf16>
    %c1536 = arith.constant 1536 : index
    %c0_46 = arith.constant 0 : index
    %56 = vector.load %arg3[%c1536, %c0_46] : memref<1600x64xbf16, #tpu.memory_space<vmem>>, vector<64x64xbf16>
    %cst_47 = arith.constant dense<0.000000e+00> : vector<120x64xf32>
    %57 = tpu.matmul %55, %56, %cst_47 {dimension_numbers = #tpu.dot_dimension_numbers<[1], [0], [0], [1], [0, 0, 1, 1], [], []>} : vector<120x64xbf16>, vector<64x64xbf16>, vector<120x64xf32> -> vector<120x64xf32>
    %58 = arith.addf %54, %57 : vector<120x64xf32>
    %59 = arith.truncf %58 : vector<120x64xf32> to vector<120x64xbf16>
    %c0_48 = arith.constant 0 : index
    %c0_49 = arith.constant 0 : index
    %60 = vector.load %arg8[%c0_48, %c0_49] : memref<128x64xbf16, #tpu.memory_space<vmem>>, vector<120x64xbf16>
    tpu.vector_store %arg8[%c0_48, %c0_49], %59 {strides = array<i32>} : memref<128x64xbf16, #tpu.memory_space<vmem>>, vector<120x64xbf16>,
    %cst_50 = arith.constant 0.000000e+00 : f32
    %61 = vector.broadcast %cst_50 : f32 to vector<88x64xf32>
    %c0_51 = arith.constant 0 : index
    %c0_52 = arith.constant 0 : index
    %62 = vector.load %arg8[%c0_51, %c0_52] : memref<128x64xbf16, #tpu.memory_space<vmem>>, vector<88x64xbf16>
    %c1_53 = arith.constant 1 : index
    %c0_54 = arith.constant 0 : index
    %63 = vector.load %arg8[%c1_53, %c0_54] : memref<128x64xbf16, #tpu.memory_space<vmem>>, vector<88x64xbf16>
    %c2_55 = arith.constant 2 : index
    %c0_56 = arith.constant 0 : index
    %64 = vector.load %arg8[%c2_55, %c0_56] : memref<128x64xbf16, #tpu.memory_space<vmem>>, vector<88x64xbf16>
    %c13_57 = arith.constant 13 : index
    %c0_58 = arith.constant 0 : index
    %65 = vector.load %arg8[%c13_57, %c0_58] : memref<128x64xbf16, #tpu.memory_space<vmem>>, vector<88x64xbf16>
    %66 = tpu.concatenate %62, %63, %64, %65 in 1 : vector<88x64xbf16>, vector<88x64xbf16>, vector<88x64xbf16>, vector<88x64xbf16> -> vector<88x256xbf16>
    %c0_59 = arith.constant 0 : index
    %c0_60 = arith.constant 0 : index
    %67 = vector.load %arg4[%c0_59, %c0_60] : memref<576x64xbf16, #tpu.memory_space<vmem>>, vector<256x64xbf16>
    %cst_61 = arith.constant dense<0.000000e+00> : vector<88x64xf32>
    %68 = tpu.matmul %66, %67, %cst_61 {dimension_numbers = #tpu.dot_dimension_numbers<[1], [0], [0], [1], [0, 0, 1, 1], [], []>} : vector<88x256xbf16>, vector<256x64xbf16>, vector<88x64xf32> -> vector<88x64xf32>
    %69 = arith.addf %61, %68 : vector<88x64xf32>
    %c14_62 = arith.constant 14 : index
    %c0_63 = arith.constant 0 : index
    %70 = vector.load %arg8[%c14_62, %c0_63] : memref<128x64xbf16, #tpu.memory_space<vmem>>, vector<88x64xbf16>
    %c15_64 = arith.constant 15 : index
    %c0_65 = arith.constant 0 : index
    %71 = vector.load %arg8[%c15_64, %c0_65] : memref<128x64xbf16, #tpu.memory_space<vmem>>, vector<88x64xbf16>
    %c26_66 = arith.constant 26 : index
    %c0_67 = arith.constant 0 : index
    %72 = vector.load %arg8[%c26_66, %c0_67] : memref<128x64xbf16, #tpu.memory_space<vmem>>, vector<88x64xbf16>
    %c27_68 = arith.constant 27 : index
    %c0_69 = arith.constant 0 : index
    %73 = vector.load %arg8[%c27_68, %c0_69] : memref<128x64xbf16, #tpu.memory_space<vmem>>, vector<88x64xbf16>
    %74 = tpu.concatenate %70, %71, %72, %73 in 1 : vector<88x64xbf16>, vector<88x64xbf16>, vector<88x64xbf16>, vector<88x64xbf16> -> vector<88x256xbf16>
    %c256_70 = arith.constant 256 : index
    %c0_71 = arith.constant 0 : index
    %75 = vector.load %arg4[%c256_70, %c0_71] : memref<576x64xbf16, #tpu.memory_space<vmem>>, vector<256x64xbf16>
    %cst_72 = arith.constant dense<0.000000e+00> : vector<88x64xf32>
    %76 = tpu.matmul %74, %75, %cst_72 {dimension_numbers = #tpu.dot_dimension_numbers<[1], [0], [0], [1], [0, 0, 1, 1], [], []>} : vector<88x256xbf16>, vector<256x64xbf16>, vector<88x64xf32> -> vector<88x64xf32>
    %77 = arith.addf %69, %76 : vector<88x64xf32>
    %c28_73 = arith.constant 28 : index
    %c0_74 = arith.constant 0 : index
    %78 = vector.load %arg8[%c28_73, %c0_74] : memref<128x64xbf16, #tpu.memory_space<vmem>>, vector<88x64xbf16>
    %c512_75 = arith.constant 512 : index
    %c0_76 = arith.constant 0 : index
    %79 = vector.load %arg4[%c512_75, %c0_76] : memref<576x64xbf16, #tpu.memory_space<vmem>>, vector<64x64xbf16>
    %cst_77 = arith.constant dense<0.000000e+00> : vector<88x64xf32>
    %80 = tpu.matmul %78, %79, %cst_77 {dimension_numbers = #tpu.dot_dimension_numbers<[1], [0], [0], [1], [0, 0, 1, 1], [], []>} : vector<88x64xbf16>, vector<64x64xbf16>, vector<88x64xf32> -> vector<88x64xf32>
    %81 = arith.addf %77, %80 : vector<88x64xf32>
    %c0_78 = arith.constant 0 : index
    %c0_79 = arith.constant 0 : index
    %82 = vector.load %arg5[%c0_78, %c0_79] : memref<1x64xf32, #tpu.memory_space<vmem>>, vector<1x64xf32>
    %83 = vector.broadcast %82 : vector<1x64xf32> to vector<88x64xf32>
    %84 = arith.mulf %81, %83 : vector<88x64xf32>
    %cst_80 = arith.constant dense<0.000000e+00> : vector<88xf32>
    %85 = vector.multi_reduction <add>, %84, %cst_80 [1] : vector<88x64xf32> to vector<88xf32>
    %86 = vector.shape_cast %85 : vector<88xf32> to vector<88x1xf32>
    %c0_81 = arith.constant 0 : index
    %c0_82 = arith.constant 0 : index
    %c0_83 = arith.constant 0 : index
    %87 = vector.load %arg6[%c0_81, %c0_82, %c0_83] : memref<1x88x1xf32, #tpu.memory_space<vmem>>, vector<1x88x1xf32>
    %88 = vector.shape_cast %87 : vector<1x88x1xf32> to vector<88x1xf32>
    %89 = vector.shape_cast %86 : vector<88x1xf32> to vector<1x88x1xf32>
    tpu.vector_store %arg6[%c0_81, %c0_82, %c0_83], %89 {strides = array<i32>} : memref<1x88x1xf32, #tpu.memory_space<vmem>>, vector<1x88x1xf32>,
    return
  }
  func.func @transform_0(%arg0: i32) -> (i32, i32, i32) {
    %c0_i32 = arith.constant 0 : i32
    %c0_i32_0 = arith.constant 0 : i32
    %c0_i32_1 = arith.constant 0 : i32
    return %arg0, %c0_i32, %c0_i32_0 : i32, i32, i32
  }
  func.func @transform_1(%arg0: i32) -> (i32, i32) {
    %c0_i32 = arith.constant 0 : i32
    %c0_i32_0 = arith.constant 0 : i32
    %c0_i32_1 = arith.constant 0 : i32
    return %c0_i32, %c0_i32_0 : i32, i32
  }
  func.func @transform_2(%arg0: i32) -> (i32, i32) {
    %c0_i32 = arith.constant 0 : i32
    %c0_i32_0 = arith.constant 0 : i32
    %c0_i32_1 = arith.constant 0 : i32
    return %c0_i32, %c0_i32_0 : i32, i32
  }
  func.func @transform_3(%arg0: i32) -> (i32, i32) {
    %c0_i32 = arith.constant 0 : i32
    %c0_i32_0 = arith.constant 0 : i32
    %c0_i32_1 = arith.constant 0 : i32
    return %c0_i32, %c0_i32_0 : i32, i32
  }
  func.func @transform_4(%arg0: i32) -> (i32, i32) {
    %c0_i32 = arith.constant 0 : i32
    %c0_i32_0 = arith.constant 0 : i32
    %c0_i32_1 = arith.constant 0 : i32
    return %c0_i32, %c0_i32_0 : i32, i32
  }
  func.func @transform_5(%arg0: i32) -> (i32, i32, i32) {
    %c0_i32 = arith.constant 0 : i32
    %c0_i32_0 = arith.constant 0 : i32
    %c0_i32_1 = arith.constant 0 : i32
    return %arg0, %c0_i32, %c0_i32_0 : i32, i32, i32
  }
}

</mosaic_0001>

<llo_original>
// kernel: generator_dn_x4_forward.1
$region0: #{generator_dn_x4_forward.1}
  #allocation0 [shape = 'u32[]', space=smem, size = 0x4, offset = 0x4, fixed_abs, tag = 'smem constant byte address 0x4 - core index']
  #allocation1 [shape = 'u32[144,128]{1,0:T(1,128)}', space=vmem, size = 0x12000, scoped, tag = 'internal scratch']
  #allocation2 [shape = 'bf16[184,64]{1,0:T(8,128)(2,1)}', space=vmem, size = 0xb800, scoped, tag = 'scratch operand']
  #allocation3 [shape = 'bf16[128,64]{1,0:T(16,128)(2,1)}', space=vmem, size = 0x8000, scoped, tag = 'scratch operand']
  %s0 = inlined_call_operand.vmem [shape: bf16[6,176,49], index: 0, kind: input, shape index: {}]
  %s1 = inlined_call_operand.vmem [shape: bf16[49,64], index: 1, kind: input, shape index: {}]
  %s2 = inlined_call_operand.vmem [shape: bf16[1600,64], index: 2, kind: input, shape index: {}]
  %s3 = inlined_call_operand.vmem [shape: bf16[576,64], index: 3, kind: input, shape index: {}]
  %s4 = inlined_call_operand.vmem [shape: f32[1,64], index: 4, kind: input, shape index: {}]
  %s5 = inlined_call_operand.vmem [shape: f32[6,88,1], index: 5, kind: output, shape index: {}]
  %s6 = sld [smem:[#allocation0]]
  $region53: #{generator_dn_x4_forward.1} parent=0
    _
  %s8 = ssub.s32 1, %s6
  %s9 = scalar_select 0, %s8, %s6
  loop: start=0, step=1, limit=8
  $region2: #{generator_dn_x4_forward.1} parent=0 // loop_pre_header
    _
  $region3: #{generator_dn_x4_forward.1} parent=0 // loop_header
    %s11 = sphi 0, %s15
    %p12 = scmp.ge.s32.totalorder %s11, 8
    %s21 = sphi 0, %s23
    %s24 = sphi 0, %s21
    %s25 = sphi 0, %s24
    %s41 = sphi 0, %s25
    %s45 = sphi 0, %s45
    %s47 = sphi 0, %s45
    %s48 = sphi 0, %s47
    %s62 = sphi 0, %s48
    %s66 = sphi 0, %s66
    %s68 = sphi 0, %s66
    %s69 = sphi 0, %s68
    %s83 = sphi 0, %s69
    %s87 = sphi 0, %s87
    %s89 = sphi 0, %s87
    %s90 = sphi 0, %s89
    %s104 = sphi 0, %s90
    %s108 = sphi 0, %s108
    %s110 = sphi 0, %s108
    %s111 = sphi 0, %s110
    %s125 = sphi 0, %s111
    %s131 = sphi 0, %s133
    %s134 = sphi 0, %s131
    %s135 = sphi 0, %s134
    %s151 = sphi 0, %s135
  $region4: #{generator_dn_x4_forward.1} parent=0 // loop_header_branch
    %14 = sbr.rel (%p12) target = $region8
  $region5: #{generator_dn_x4_forward.1} parent=0 // loop_body
    %s16 = ssub.s32 %s11, 1
    %s17 = ssub.s32 %s11, 2
    %s18 = sadd.s32 %s11, 1
    %s19 = ssub.s32 %s11, %s18
    %p20 = scmp.eq.s32.totalorder %s19, 0
    %s22 = sadd.s32 %s21, 1
    %s23 = scalar_select %p20, %s21, %s22
    %p26 = pneg %p20
    %p27 = scmp.eq.s32.totalorder %s11, 5
    %p28 = por %p26, %p27
    %p29 = scmp.ne.s32.totalorder %s21, %s24
    %p30 = scmp.eq.s32.totalorder %s11, 0
    %p31 = por %p29, %p30
    %p32 = scmp.ne.s32.totalorder %s21, %s24
    %p33 = scmp.eq.s32.totalorder %s16, 5
    %p34 = por %p32, %p33
    %p35 = scmp.ne.s32.totalorder %s24, %s25
    %p36 = scmp.eq.s32.totalorder %s16, 0
    %p37 = por %p35, %p36
    %p38 = scmp.ne.s32.totalorder %s24, %s25
    %p39 = scmp.eq.s32.totalorder %s17, 5
    %p40 = por %p38, %p39
    %p42 = scmp.ne.s32.totalorder %s25, %s41
    %p43 = scmp.eq.s32.totalorder %s17, 0
    %p44 = por %p42, %p43
    %s46 = sadd.s32 %s45, 1
    %p49 = scmp.eq.s32.totalorder %s11, 5
    %p50 = scmp.ne.s32.totalorder %s45, %s47
    %p51 = scmp.eq.s32.totalorder %s11, 0
    %p52 = por %p50, %p51
    %p53 = scmp.ne.s32.totalorder %s45, %s47
    %p54 = scmp.eq.s32.totalorder %s16, 5
    %p55 = por %p53, %p54
    %p56 = scmp.ne.s32.totalorder %s47, %s48
    %p57 = scmp.eq.s32.totalorder %s16, 0
    %p58 = por %p56, %p57
    %p59 = scmp.ne.s32.totalorder %s47, %s48
    %p60 = scmp.eq.s32.totalorder %s17, 5
    %p61 = por %p59, %p60
    %p63 = scmp.ne.s32.totalorder %s48, %s62
    %p64 = scmp.eq.s32.totalorder %s17, 0
    %p65 = por %p63, %p64
    %s67 = sadd.s32 %s66, 1
    %p70 = scmp.eq.s32.totalorder %s11, 5
    %p71 = scmp.ne.s32.totalorder %s66, %s68
    %p72 = scmp.eq.s32.totalorder %s11, 0
    %p73 = por %p71, %p72
    %p74 = scmp.ne.s32.totalorder %s66, %s68
    %p75 = scmp.eq.s32.totalorder %s16, 5
    %p76 = por %p74, %p75
    %p77 = scmp.ne.s32.totalorder %s68, %s69
    %p78 = scmp.eq.s32.totalorder %s16, 0
    %p79 = por %p77, %p78
    %p80 = scmp.ne.s32.totalorder %s68, %s69
    %p81 = scmp.eq.s32.totalorder %s17, 5
    %p82 = por %p80, %p81
    %p84 = scmp.ne.s32.totalorder %s69, %s83
    %p85 = scmp.eq.s32.totalorder %s17, 0
    %p86 = por %p84, %p85
    %s88 = sadd.s32 %s87, 1
    %p91 = scmp.eq.s32.totalorder %s11, 5
    %p92 = scmp.ne.s32.totalorder %s87, %s89
    %p93 = scmp.eq.s32.totalorder %s11, 0
    %p94 = por %p92, %p93
    %p95 = scmp.ne.s32.totalorder %s87, %s89
    %p96 = scmp.eq.s32.totalorder %s16, 5
    %p97 = por %p95, %p96
    %p98 = scmp.ne.s32.totalorder %s89, %s90
    %p99 = scmp.eq.s32.totalorder %s16, 0
    %p100 = por %p98, %p99
    %p101 = scmp.ne.s32.totalorder %s89, %s90
    %p102 = scmp.eq.s32.totalorder %s17, 5
    %p103 = por %p101, %p102
    %p105 = scmp.ne.s32.totalorder %s90, %s104
    %p106 = scmp.eq.s32.totalorder %s17, 0
    %p107 = por %p105, %p106
    %s109 = sadd.s32 %s108, 1
    %p112 = scmp.eq.s32.totalorder %s11, 5
    %p113 = scmp.ne.s32.totalorder %s108, %s110
    %p114 = scmp.eq.s32.totalorder %s11, 0
    %p115 = por %p113, %p114
    %p116 = scmp.ne.s32.totalorder %s108, %s110
    %p117 = scmp.eq.s32.totalorder %s16, 5
    %p118 = por %p116, %p117
    %p119 = scmp.ne.s32.totalorder %s110, %s111
    %p120 = scmp.eq.s32.totalorder %s16, 0
    %p121 = por %p119, %p120
    %p122 = scmp.ne.s32.totalorder %s110, %s111
    %p123 = scmp.eq.s32.totalorder %s17, 5
    %p124 = por %p122, %p123
    %p126 = scmp.ne.s32.totalorder %s111, %s125
    %p127 = scmp.eq.s32.totalorder %s17, 0
    %p128 = por %p126, %p127
    %s129 = ssub.s32 %s11, %s18
    %p130 = scmp.eq.s32.totalorder %s129, 0
    %s132 = sadd.s32 %s131, 1
    %s133 = scalar_select %p130, %s131, %s132
    %p136 = pneg %p130
    %p137 = scmp.eq.s32.totalorder %s11, 5
    %p138 = por %p136, %p137
    %p139 = scmp.ne.s32.totalorder %s131, %s134
    %p140 = scmp.eq.s32.totalorder %s11, 0
    %p141 = por %p139, %p140
    %p142 = scmp.ne.s32.totalorder %s131, %s134
    %p143 = scmp.eq.s32.totalorder %s16, 5
    %p144 = por %p142, %p143
    %p145 = scmp.ne.s32.totalorder %s134, %s135
    %p146 = scmp.eq.s32.totalorder %s16, 0
    %p147 = por %p145, %p146
    %p148 = scmp.ne.s32.totalorder %s134, %s135
    %p149 = scmp.eq.s32.totalorder %s17, 5
    %p150 = por %p148, %p149
    %p152 = scmp.ne.s32.totalorder %s135, %s151
    %p153 = scmp.eq.s32.totalorder %s17, 0
    %p154 = por %p152, %p153
    %p155 = scmp.le.s32.totalorder 1, %s11
    %p156 = scmp.lt.s32.totalorder %s11, 7
    %p157 = pnand %p155, %p156
    %p158 = pneg %p157
    // Predicated region
    $region9: #{generator_dn_x4_forward.1} parent=5 // pred_check
      _
    $region10: #{generator_dn_x4_forward.1} parent=5 // pred_check_branch
      %160 = sbr.rel (%p157) target = $region12
    $region11: #{generator_dn_x4_forward.1} parent=5 // pred_region
      %s161 = ssub.s32 %s11, 1
      // Predicated region
      $region13: #{generator_dn_x4_forward.1} parent=11 // pred_check
        %p162 = pneg %p58
      $region14: #{generator_dn_x4_forward.1} parent=11 // pred_check_branch
        %164 = sbr.rel (%p162) target = $region16
      $region15: #{generator_dn_x4_forward.1} parent=11 // pred_region
        _
      $region16: #{generator_dn_x4_forward.1} parent=11 // pred_fallthru
        _
      // Predicated region
      $region17: #{generator_dn_x4_forward.1} parent=11 // pred_check
        %p165 = pneg %p79
      $region18: #{generator_dn_x4_forward.1} parent=11 // pred_check_branch
        %167 = sbr.rel (%p165) target = $region20
      $region19: #{generator_dn_x4_forward.1} parent=11 // pred_region
        _
      $region20: #{generator_dn_x4_forward.1} parent=11 // pred_fallthru
        _
      // Predicated region
      $region21: #{generator_dn_x4_forward.1} parent=11 // pred_check
        %p168 = pneg %p100
      $region22: #{generator_dn_x4_forward.1} parent=11 // pred_check_branch
        %170 = sbr.rel (%p168) target = $region24
      $region23: #{generator_dn_x4_forward.1} parent=11 // pred_region
        _
      $region24: #{generator_dn_x4_forward.1} parent=11 // pred_fallthru
        _
      // Predicated region
      $region25: #{generator_dn_x4_forward.1} parent=11 // pred_check
        %p171 = pneg %p121
      $region26: #{generator_dn_x4_forward.1} parent=11 // pred_check_branch
        %173 = sbr.rel (%p171) target = $region28
      $region27: #{generator_dn_x4_forward.1} parent=11 // pred_region
        _
      $region28: #{generator_dn_x4_forward.1} parent=11 // pred_fallthru
        _
    $region12: #{generator_dn_x4_forward.1} parent=5 // pred_fallthru
      _
    %p174 = scmp.lt.s32.totalorder %s11, 6
    // Predicated region
    $region29: #{generator_dn_x4_forward.1} parent=5 // pred_check
      %p175 = pneg %p174
    $region30: #{generator_dn_x4_forward.1} parent=5 // pred_check_branch
      %177 = sbr.rel (%p175) target = $region32
    $region31: #{generator_dn_x4_forward.1} parent=5 // pred_region
      // Predicated region
      $region33: #{generator_dn_x4_forward.1} parent=31 // pred_check
        %p178 = pneg %p31
      $region34: #{generator_dn_x4_forward.1} parent=31 // pred_check_branch
        %180 = sbr.rel (%p178) target = $region36
      $region35: #{generator_dn_x4_forward.1} parent=31 // pred_region
        %p181 = scmp.lt.s32.totalorder %s11, 5
        %s182 = scalar_select %p181, %s11, 5
        %s183 = smul.addr %s182, 22
        %s184 = smul.addr %s183, 4
        %s185 = scalar_lea.vmem %s0, %s184
      $region36: #{generator_dn_x4_forward.1} parent=31 // pred_fallthru
        _
    $region32: #{generator_dn_x4_forward.1} parent=5 // pred_fallthru
      _
    %p186 = scmp.le.s32.totalorder 1, %s11
    %p187 = scmp.lt.s32.totalorder %s11, 7
    %p188 = pnand %p186, %p187
    %p189 = pneg %p188
    // Predicated region
    $region37: #{generator_dn_x4_forward.1} parent=5 // pred_check
      _
    $region38: #{generator_dn_x4_forward.1} parent=5 // pred_check_branch
      %191 = sbr.rel (%p188) target = $region40
    $region39: #{generator_dn_x4_forward.1} parent=5 // pred_region
      %s192 = ssub.s32 %s11, 1
      %p193 = scmp.lt.s32.totalorder %s16, 5
      %s194 = scalar_select %p193, %s16, 5
      %s195 = smul.addr %s194, 22
      %s196 = smul.addr %s195, 4
      %s197 = scalar_lea.vmem %s0, %s196
      %p198 = pneg %p37
      %p199 = pneg %p34
      %p200 = pneg %p58
      %p201 = pneg %p55
      %p202 = pneg %p79
      %p203 = pneg %p76
      %p204 = pneg %p100
      %p205 = pneg %p97
      %p206 = pneg %p121
      %p207 = pneg %p118
      %p208 = pneg %p147
      %p209 = pneg %p144
      %p210 = scmp.lt.s32.totalorder %s16, 5
      %s211 = scalar_select %p210, %s16, 5
      %s212 = smul.addr %s211, 11
      %s213 = smul.addr %s212, 8
      %s214 = scalar_lea.vmem %s5, %s213
      %p215 = scmp.lt.s32.totalorder %s16, 5
      %s216 = scalar_select %p215, %s16, 5
      %s217 = smul.addr %s216, 22
      %s218 = smul.addr %s217, 4
      %s219 = scalar_lea.vmem %s0, %s218
      %p220 = scmp.lt.s32.totalorder %s16, 5
      %s221 = scalar_select %p220, %s16, 5
      %s222 = smul.addr %s221, 11
      %s223 = smul.addr %s222, 8
      %s224 = scalar_lea.vmem %s5, %s223
      %v226 = vld [vmem:[%s219] sm:$0xf]
      %v227 = vld [vmem:[%s219 + $0x4] sm:$0xf]
      %v228 = vld [vmem:[%s219 + $0x8] sm:$0xf]
      %v229 = vld [vmem:[%s219 + $0xc] sm:$0xf]
      %v230 = vld [vmem:[%s219 + $0x10] sm:$0xf]
      %v231 = vld [vmem:[%s219 + $0x14] sm:$0xf]
      %v232 = vld [vmem:[%s219 + $0x18] sm:$0xf]
      %v233 = vld [vmem:[%s219 + $0x1c] sm:$0xf]
      %v234 = vld [vmem:[%s219 + $0x20] sm:$0xf]
      %v235 = vld [vmem:[%s219 + $0x24] sm:$0xf]
      %v236 = vld [vmem:[%s219 + $0x28] sm:$0xf]
      %v237 = vld [vmem:[%s219 + $0x2c] sm:$0xf]
      %v238 = vld [vmem:[%s219 + $0x30] sm:$0xf]
      %v239 = vld [vmem:[%s219 + $0x34] sm:$0xf]
      %v240 = vld [vmem:[%s219 + $0x38] sm:$0xf]
      %v241 = vld [vmem:[%s219 + $0x3c] sm:$0xf]
      %v242 = vld [vmem:[%s219 + $0x40] sm:$0xf]
      %v243 = vld [vmem:[%s219 + $0x44] sm:$0xf]
      %v244 = vld [vmem:[%s219 + $0x48] sm:$0xf]
      %v245 = vld [vmem:[%s219 + $0x4c] sm:$0xf]
      %v246 = vld [vmem:[%s219 + $0x50] sm:$0xf]
      %v247 = vld [vmem:[%s219 + $0x54] sm:$0xf]
      %v248 = vld [vmem:[%s1] sm:$0xf]
      %v249 = vld [vmem:[%s1 + $0x4] sm:$0xf]
      %v250 = vld [vmem:[%s1 + $0x8] sm:$0xf]
      %v251 = vld [vmem:[%s1 + $0xc] sm:$0xf]
      %v252 = vld [vmem:[%s1 + $0x10] sm:$0xf]
      %v253 = vld [vmem:[%s1 + $0x14] sm:$0xf]
      %v254 = vld [vmem:[%s1 + $0x18] sm:$0x1]
      %v277 = vunpack.c.l.b16 %v226
      %v278 = vunpack.c.l.b16 %v227
      %v279 = vunpack.c.l.b16 %v228
      %v280 = vunpack.c.l.b16 %v229
      %v281 = vunpack.c.l.b16 %v230
      %v282 = vunpack.c.l.b16 %v231
      %v283 = vunpack.c.l.b16 %v232
      %v284 = vunpack.c.l.b16 %v233
      %v285 = vunpack.c.l.b16 %v234
      %v286 = vunpack.c.l.b16 %v235
      %v287 = vunpack.c.l.b16 %v236
      %v288 = vunpack.c.l.b16 %v237
      %v289 = vunpack.c.l.b16 %v238
      %v290 = vunpack.c.l.b16 %v239
      %v291 = vunpack.c.l.b16 %v240
      %v292 = vunpack.c.l.b16 %v241
      %v293 = vunpack.c.l.b16 %v242
      %v294 = vunpack.c.l.b16 %v243
      %v295 = vunpack.c.l.b16 %v244
      %v296 = vunpack.c.l.b16 %v245
      %v297 = vunpack.c.l.b16 %v246
      %v298 = vunpack.c.l.b16 %v247
      %v299 = vpack.c.b16 %v278, %v277
      %v300 = vpack.c.b16 %v280, %v279
      %v301 = vpack.c.b16 %v282, %v281
      %v302 = vpack.c.b16 %v284, %v283
      %v303 = vpack.c.b16 %v286, %v285
      %v304 = vpack.c.b16 %v288, %v287
      %v305 = vpack.c.b16 %v290, %v289
      %v306 = vpack.c.b16 %v292, %v291
      %v307 = vpack.c.b16 %v294, %v293
      %v308 = vpack.c.b16 %v296, %v295
      %v309 = vpack.c.b16 %v298, %v297
      %v317 = vunpack.c.l.b16 %v248
      %v318 = vunpack.c.l.b16 %v249
      %v319 = vunpack.c.l.b16 %v250
      %v320 = vunpack.c.l.b16 %v251
      %v321 = vunpack.c.l.b16 %v252
      %v322 = vunpack.c.l.b16 %v253
      %v323 = vunpack.c.l.b16 %v254
      %v324 = vpack.c.b16 %v318, %v317
      %v325 = vpack.c.b16 %v320, %v319
      %v326 = vpack.c.b16 %v322, %v321
      %v327 = vpack.c.b16 %v323, %v323
      %vm331 = vcmask 400384
      %v333 = vsel %vm331, %v299, 0
      %v336 = vsel %vm331, %v300, 0
      %v339 = vsel %vm331, %v301, 0
      %v342 = vsel %vm331, %v302, 0
      %v345 = vsel %vm331, %v303, 0
      %v348 = vsel %vm331, %v304, 0
      %v351 = vsel %vm331, %v305, 0
      %v354 = vsel %vm331, %v306, 0
      %v357 = vsel %vm331, %v307, 0
      %v360 = vsel %vm331, %v308, 0
      %v363 = vsel %vm331, %v309, 0
      %vm365 = vcmask 1040384
      %v366 = vsel 0, 4294967295, 65535
      %v367 = vsel %vm365, %v366, 0
      %v369 = vand.u32 %v327, %v367
      %371 = vmatprep.subr.bf16.mxu0 0
      %372 = vmatpush1.bf16.msra.mxu0 %v324
      %373 = vmatprep.subr.bf16.mxu0 0
      %374 = vmatpush1.bf16.msra.mxu0 %v325
      %375 = vmatprep.subr.bf16.mxu0 0
      %376 = vmatpush1.bf16.msra.mxu0 %v326
      %377 = vmatprep.subr.bf16.mxu0 0
      %378 = vmatpush1.bf16.msra.mxu0 %v369
      %379 = vmatprep.subr.bf16.mxu0 0
      %380 = vmatpush1.bf16.msra.mxu0 0
      %381 = vmatprep.subr.bf16.mxu0 0
      %382 = vmatpush1.bf16.msra.mxu0 0
      %383 = vmatprep.subr.bf16.mxu0 0
      %384 = vmatpush1.bf16.msra.mxu0 0
      %385 = vmatprep.subr.bf16.mxu0 0
      %386 = vmatpush1.bf16.msra.mxu0 0
      %387 = vmatprep.subr.bf16.mxu0 0
      %388 = vmatpush1.bf16.msra.mxu0 0
      %389 = vmatprep.subr.bf16.mxu0 0
      %390 = vmatpush1.bf16.msra.mxu0 0
      %391 = vmatprep.subr.bf16.mxu0 0
      %392 = vmatpush1.bf16.msra.mxu0 0
      %393 = vmatprep.subr.bf16.mxu0 0
      %394 = vmatpush1.bf16.msra.mxu0 0
      %395 = vmatprep.subr.bf16.mxu0 0
      %396 = vmatpush1.bf16.msra.mxu0 0
      %397 = vmatprep.subr.bf16.mxu0 0
      %398 = vmatpush1.bf16.msra.mxu0 0
      %399 = vmatprep.subr.bf16.mxu0 0
      %400 = vmatpush1.bf16.msra.mxu0 0
      %401 = vmatprep.subr.bf16.mxu0 0
      %402 = vmatpush1.bf16.msra.mxu0 0
      %403 = vmatprep.mubr.bf16.mxu0 0
      %404 = vmatmul.mubr.bf16.gmra.mrb[0].mxu0 %v333
      %v405 = vpop.f32.mrb[0].mxu0
      %v406 = vadd.f32 0.0, %v405
      %v407 = vpop.f32.mrb[0].mxu0
      %v408 = vpop.f32.mrb[0].mxu0
      %v409 = vadd.f32 0.0, %v408
      %v410 = vpop.f32.mrb[0].mxu0
      %411 = vmatprep.mubr.bf16.mxu0 0
      %412 = vmatmul.mubr.bf16.gmra.mrb[0].mxu0 %v336
      %v413 = vpop.f32.mrb[0].mxu0
      %v414 = vadd.f32 0.0, %v413
      %v415 = vpop.f32.mrb[0].mxu0
      %v416 = vpop.f32.mrb[0].mxu0
      %v417 = vadd.f32 0.0, %v416
      %v418 = vpop.f32.mrb[0].mxu0
      %419 = vmatprep.mubr.bf16.mxu0 0
      %420 = vmatmul.mubr.bf16.gmra.mrb[0].mxu0 %v339
      %v421 = vpop.f32.mrb[0].mxu0
      %v422 = vadd.f32 0.0, %v421
      %v423 = vpop.f32.mrb[0].mxu0
      %v424 = vpop.f32.mrb[0].mxu0
      %v425 = vadd.f32 0.0, %v424
      %v426 = vpop.f32.mrb[0].mxu0
      %427 = vmatprep.mubr.bf16.mxu0 0
      %428 = vmatmul.mubr.bf16.gmra.mrb[0].mxu0 %v342
      %v429 = vpop.f32.mrb[0].mxu0
      %v430 = vadd.f32 0.0, %v429
      %v431 = vpop.f32.mrb[0].mxu0
      %v432 = vpop.f32.mrb[0].mxu0
      %v433 = vadd.f32 0.0, %v432
      %v434 = vpop.f32.mrb[0].mxu0
      %435 = vmatprep.mubr.bf16.mxu0 0
      %436 = vmatmul.mubr.bf16.gmra.mrb[0].mxu0 %v345
      %v437 = vpop.f32.mrb[0].mxu0
      %v438 = vadd.f32 0.0, %v437
      %v439 = vpop.f32.mrb[0].mxu0
      %v440 = vpop.f32.mrb[0].mxu0
      %v441 = vadd.f32 0.0, %v440
      %v442 = vpop.f32.mrb[0].mxu0
      %443 = vmatprep.mubr.bf16.mxu0 0
      %444 = vmatmul.mubr.bf16.gmra.mrb[0].mxu0 %v348
      %v445 = vpop.f32.mrb[0].mxu0
      %v446 = vadd.f32 0.0, %v445
      %v447 = vpop.f32.mrb[0].mxu0
      %v448 = vpop.f32.mrb[0].mxu0
      %v449 = vadd.f32 0.0, %v448
      %v450 = vpop.f32.mrb[0].mxu0
      %451 = vmatprep.mubr.bf16.mxu0 0
      %452 = vmatmul.mubr.bf16.gmra.mrb[0].mxu0 %v351
      %v453 = vpop.f32.mrb[0].mxu0
      %v454 = vadd.f32 0.0, %v453
      %v455 = vpop.f32.mrb[0].mxu0
      %v456 = vpop.f32.mrb[0].mxu0
      %v457 = vadd.f32 0.0, %v456
      %v458 = vpop.f32.mrb[0].mxu0
      %459 = vmatprep.mubr.bf16.mxu0 0
      %460 = vmatmul.mubr.bf16.gmra.mrb[0].mxu0 %v354
      %v461 = vpop.f32.mrb[0].mxu0
      %v462 = vadd.f32 0.0, %v461
      %v463 = vpop.f32.mrb[0].mxu0
      %v464 = vpop.f32.mrb[0].mxu0
      %v465 = vadd.f32 0.0, %v464
      %v466 = vpop.f32.mrb[0].mxu0
      %467 = vmatprep.mubr.bf16.mxu0 0
      %468 = vmatmul.mubr.bf16.gmra.mrb[0].mxu0 %v357
      %v469 = vpop.f32.mrb[0].mxu0
      %v470 = vadd.f32 0.0, %v469
      %v471 = vpop.f32.mrb[0].mxu0
      %v472 = vpop.f32.mrb[0].mxu0
      %v473 = vadd.f32 0.0, %v472
      %v474 = vpop.f32.mrb[0].mxu0
      %475 = vmatprep.mubr.bf16.mxu0 0
      %476 = vmatmul.mubr.bf16.gmra.mrb[0].mxu0 %v360
      %v477 = vpop.f32.mrb[0].mxu0
      %v478 = vadd.f32 0.0, %v477
      %v479 = vpop.f32.mrb[0].mxu0
      %v480 = vpop.f32.mrb[0].mxu0
      %v481 = vadd.f32 0.0, %v480
      %v482 = vpop.f32.mrb[0].mxu0
      %483 = vmatprep.mubr.bf16.mxu0 0
      %484 = vmatmul.mubr.bf16.gmra.mrb[0].mxu0 %v363
      %v485 = vpop.f32.mrb[0].mxu0
      %v486 = vadd.f32 0.0, %v485
      %v487 = vpop.f32.mrb[0].mxu0
      %v488 = vpop.f32.mrb[0].mxu0
      %v489 = vadd.f32 0.0, %v488
      %v490 = vpop.f32.mrb[0].mxu0
      %491 = vdwg.mxu0
      %v492 = vpack.c.bf16 %v409, %v406
      %v493 = vpack.c.bf16 %v417, %v414
      %v494 = vpack.c.bf16 %v425, %v422
      %v495 = vpack.c.bf16 %v433, %v430
      %v496 = vpack.c.bf16 %v441, %v438
      %v497 = vpack.c.bf16 %v449, %v446
      %v498 = vpack.c.bf16 %v457, %v454
      %v499 = vpack.c.bf16 %v465, %v462
      %v500 = vpack.c.bf16 %v473, %v470
      %v501 = vpack.c.bf16 %v481, %v478
      %v502 = vpack.c.bf16 %v489, %v486
      %v514 = vunpack.c.l.b16 %v492
      %v515 = vunpack.c.h.b16 %v492
      %v516 = vunpack.c.l.b16 %v493
      %v517 = vunpack.c.h.b16 %v493
      %v518 = vunpack.c.l.b16 %v494
      %v519 = vunpack.c.h.b16 %v494
      %v520 = vunpack.c.l.b16 %v495
      %v521 = vunpack.c.h.b16 %v495
      %v522 = vunpack.c.l.b16 %v496
      %v523 = vunpack.c.h.b16 %v496
      %v524 = vunpack.c.l.b16 %v497
      %v525 = vunpack.c.h.b16 %v497
      %v526 = vunpack.c.l.b16 %v498
      %v527 = vunpack.c.h.b16 %v498
      %v528 = vunpack.c.l.b16 %v499
      %v529 = vunpack.c.h.b16 %v499
      %v530 = vunpack.c.l.b16 %v500
      %v531 = vunpack.c.h.b16 %v500
      %v532 = vunpack.c.l.b16 %v501
      %v533 = vunpack.c.h.b16 %v501
      %v534 = vunpack.c.l.b16 %v502
      %v535 = vunpack.c.h.b16 %v502
      %v536 = vpack.c.b16 %v514, %v514
      %v537 = vpack.c.b16 %v515, %v515
      %v538 = vpack.c.b16 %v516, %v516
      %v539 = vpack.c.b16 %v517, %v517
      %v540 = vpack.c.b16 %v518, %v518
      %v541 = vpack.c.b16 %v519, %v519
      %v542 = vpack.c.b16 %v520, %v520
      %v543 = vpack.c.b16 %v521, %v521
      %v544 = vpack.c.b16 %v522, %v522
      %v545 = vpack.c.b16 %v523, %v523
      %v546 = vpack.c.b16 %v524, %v524
      %v547 = vpack.c.b16 %v525, %v525
      %v548 = vpack.c.b16 %v526, %v526
      %v549 = vpack.c.b16 %v527, %v527
      %v550 = vpack.c.b16 %v528, %v528
      %v551 = vpack.c.b16 %v529, %v529
      %v552 = vpack.c.b16 %v530, %v530
      %v553 = vpack.c.b16 %v531, %v531
      %v554 = vpack.c.b16 %v532, %v532
      %v555 = vpack.c.b16 %v533, %v533
      %v556 = vpack.c.b16 %v534, %v534
      %v557 = vpack.c.b16 %v535, %v535
      %vm580 = vcmask 519168
      %581 = vst.msk [vmem:[#allocation2] sm:$0xf] %vm580, %v536
      %582 = vst.msk [vmem:[#allocation2 + $0x4] sm:$0xf] %vm580, %v537
      %583 = vst.msk [vmem:[#allocation2 + $0x8] sm:$0xf] %vm580, %v538
      %584 = vst.msk [vmem:[#allocation2 + $0xc] sm:$0xf] %vm580, %v539
      %585 = vst.msk [vmem:[#allocation2 + $0x10] sm:$0xf] %vm580, %v540
      %586 = vst.msk [vmem:[#allocation2 + $0x14] sm:$0xf] %vm580, %v541
      %587 = vst.msk [vmem:[#allocation2 + $0x18] sm:$0xf] %vm580, %v542
      %588 = vst.msk [vmem:[#allocation2 + $0x1c] sm:$0xf] %vm580, %v543
      %589 = vst.msk [vmem:[#allocation2 + $0x20] sm:$0xf] %vm580, %v544
      %590 = vst.msk [vmem:[#allocation2 + $0x24] sm:$0xf] %vm580, %v545
      %591 = vst.msk [vmem:[#allocation2 + $0x28] sm:$0xf] %vm580, %v546
      %592 = vst.msk [vmem:[#allocation2 + $0x2c] sm:$0xf] %vm580, %v547
      %593 = vst.msk [vmem:[#allocation2 + $0x30] sm:$0xf] %vm580, %v548
      %594 = vst.msk [vmem:[#allocation2 + $0x34] sm:$0xf] %vm580, %v549
      %595 = vst.msk [vmem:[#allocation2 + $0x38] sm:$0xf] %vm580, %v550
      %596 = vst.msk [vmem:[#allocation2 + $0x3c] sm:$0xf] %vm580, %v551
      %597 = vst.msk [vmem:[#allocation2 + $0x40] sm:$0xf] %vm580, %v552
      %598 = vst.msk [vmem:[#allocation2 + $0x44] sm:$0xf] %vm580, %v553
      %599 = vst.msk [vmem:[#allocation2 + $0x48] sm:$0xf] %vm580, %v554
      %600 = vst.msk [vmem:[#allocation2 + $0x4c] sm:$0xf] %vm580, %v555
      %601 = vst.msk [vmem:[#allocation2 + $0x50] sm:$0xf] %vm580, %v556
      %602 = vst.msk [vmem:[#allocation2 + $0x54] sm:$0xf] %vm580, %v557
      %v603 = vld [vmem:[#allocation2] sm:$0xf]
      %v604 = vld [vmem:[#allocation2 + $0x4] sm:$0xf]
      %v605 = vld [vmem:[#allocation2 + $0x8] sm:$0xf]
      %v606 = vld [vmem:[#allocation2 + $0xc] sm:$0xf]
      %v607 = vld [vmem:[#allocation2 + $0x10] sm:$0xf]
      %v608 = vld [vmem:[#allocation2 + $0x14] sm:$0xf]
      %v609 = vld [vmem:[#allocation2 + $0x18] sm:$0xf]
      %v610 = vld [vmem:[#allocation2 + $0x1c] sm:$0xf]
      %v611 = vld [vmem:[#allocation2 + $0x20] sm:$0xf]
      %v612 = vld [vmem:[#allocation2 + $0x24] sm:$0xf]
      %v613 = vld [vmem:[#allocation2 + $0x28] sm:$0xf]
      %v614 = vld [vmem:[#allocation2 + $0x2c] sm:$0xf]
      %v615 = vld [vmem:[#allocation2 + $0x30] sm:$0xf]
      %v616 = vld [vmem:[#allocation2 + $0x34] sm:$0xf]
      %v617 = vld [vmem:[#allocation2 + $0x38] sm:$0xf]
      %v618 = vld [vmem:[#allocation2 + $0x3c] sm:$0x1]
      %v619 = vld [vmem:[#allocation2] sm:$0xe]
      %v620 = vld [vmem:[#allocation2 + $0x3c] sm:$0x3]
      %v636 = vunpack.c.l.b16 %v603
      %v637 = vunpack.c.l.b16 %v604
      %v638 = vunpack.c.l.b16 %v605
      %v639 = vunpack.c.l.b16 %v606
      %v640 = vunpack.c.l.b16 %v607
      %v641 = vunpack.c.l.b16 %v608
      %v642 = vunpack.c.l.b16 %v609
      %v643 = vunpack.c.l.b16 %v610
      %v644 = vunpack.c.l.b16 %v611
      %v645 = vunpack.c.l.b16 %v612
      %v646 = vunpack.c.l.b16 %v613
      %v647 = vunpack.c.l.b16 %v614
      %v648 = vunpack.c.l.b16 %v615
      %v649 = vunpack.c.l.b16 %v616
      %v650 = vunpack.c.l.b16 %v617
      %v651 = vpack.c.b16 %v637, %v636
      %v652 = vpack.c.b16 %v639, %v638
      %v653 = vpack.c.b16 %v641, %v640
      %v654 = vpack.c.b16 %v643, %v642
      %v655 = vpack.c.b16 %v645, %v644
      %v656 = vpack.c.b16 %v647, %v646
      %v657 = vpack.c.b16 %v649, %v648
      %v658 = vpack.c.b16 %v650, %v650
      %v660 = vunpack.c.l.b16 %v618
      %v661 = vpack.c.b16 %v660, %v650
      %vm662 = vsmask.f32 7424
      %v664 = vshrl.u32 %v651, 16
      %v666 = vshll.u32 %v651, 16
      %v668 = vrot.slane %v666, 1
      %v669 = vor.u32 %v664, %v668
      %v671 = vshll.u32 %v652, 16
      %v673 = vrot.slane %v671, 1
      %v674 = vsel %vm662, %v669, %v673
      %v675 = vshrl.u32 %v652, 16
      %v677 = vor.u32 %v675, %v673
      %v679 = vshll.u32 %v653, 16
      %v681 = vrot.slane %v679, 1
      %v682 = vsel %vm662, %v677, %v681
      %v683 = vshrl.u32 %v653, 16
      %v685 = vor.u32 %v683, %v681
      %v687 = vshll.u32 %v654, 16
      %v689 = vrot.slane %v687, 1
      %v690 = vsel %vm662, %v685, %v689
      %v691 = vshrl.u32 %v654, 16
      %v693 = vor.u32 %v691, %v689
      %v695 = vshll.u32 %v655, 16
      %v697 = vrot.slane %v695, 1
      %v698 = vsel %vm662, %v693, %v697
      %v699 = vshrl.u32 %v655, 16
      %v701 = vor.u32 %v699, %v697
      %v703 = vshll.u32 %v656, 16
      %v705 = vrot.slane %v703, 1
      %v706 = vsel %vm662, %v701, %v705
      %v707 = vshrl.u32 %v656, 16
      %v709 = vor.u32 %v707, %v705
      %v711 = vshll.u32 %v657, 16
      %v713 = vrot.slane %v711, 1
      %v714 = vsel %vm662, %v709, %v713
      %v715 = vshrl.u32 %v657, 16
      %v717 = vor.u32 %v715, %v713
      %v719 = vshll.u32 %v661, 16
      %v721 = vrot.slane %v719, 1
      %v722 = vsel %vm662, %v717, %v721
      %v723 = vshrl.u32 %v661, 16
      %v725 = vor.u32 %v723, %v721
      %726 = vrot.lane.b32.xlu0 %v674, 64
      %v727 = vpop.permute.xlu0 %726
      %728 = vrot.lane.b32.xlu0 %v682, 64
      %v729 = vpop.permute.xlu0 %728
      %730 = vrot.lane.b32.xlu0 %v690, 64
      %v731 = vpop.permute.xlu0 %730
      %732 = vrot.lane.b32.xlu0 %v698, 64
      %v733 = vpop.permute.xlu0 %732
      %734 = vrot.lane.b32.xlu0 %v706, 64
      %v735 = vpop.permute.xlu0 %734
      %736 = vrot.lane.b32.xlu0 %v714, 64
      %v737 = vpop.permute.xlu0 %736
      %738 = vrot.lane.b32.xlu0 %v722, 64
      %v739 = vpop.permute.xlu0 %738
      %740 = vrot.lane.b32.xlu0 %v725, 64
      %v741 = vpop.permute.xlu0 %740
      %v743 = vunpack.c.l.b16 %v619
      %v744 = vpack.c.b16 %v637, %v743
      %vm745 = vcmask 1046528
      %v746 = vrot.slane %v744, 1
      %v747 = vrot.slane %v652, 1
      %v748 = vsel %vm745, %v746, %v747
      %v749 = vrot.slane %v653, 1
      %v750 = vsel %vm745, %v747, %v749
      %v751 = vrot.slane %v654, 1
      %v752 = vsel %vm745, %v749, %v751
      %v753 = vrot.slane %v655, 1
      %v754 = vsel %vm745, %v751, %v753
      %v755 = vrot.slane %v656, 1
      %v756 = vsel %vm745, %v753, %v755
      %v757 = vrot.slane %v657, 1
      %v758 = vsel %vm745, %v755, %v757
      %v759 = vrot.slane %v661, 1
      %v760 = vsel %vm745, %v757, %v759
      %v762 = vunpack.c.l.b16 %v620
      %v763 = vpack.c.b16 %v762, %v650
      %vm764 = vsmask.f32 6400
      %v766 = vshrl.u32 %v744, 16
      %v768 = vrot.slane %v766, 1
      %v769 = vshll.u32 %v744, 16
      %v771 = vrot.slane %v769, 2
      %v772 = vor.u32 %v768, %v771
      %v773 = vrot.slane %v675, 1
      %v774 = vrot.slane %v671, 2
      %v775 = vor.u32 %v773, %v774
      %v776 = vsel %vm764, %v772, %v775
      %v777 = vrot.slane %v683, 1
      %v778 = vrot.slane %v679, 2
      %v779 = vor.u32 %v777, %v778
      %v780 = vsel %vm764, %v775, %v779
      %v781 = vrot.slane %v691, 1
      %v782 = vrot.slane %v687, 2
      %v783 = vor.u32 %v781, %v782
      %v784 = vsel %vm764, %v779, %v783
      %v785 = vrot.slane %v699, 1
      %v786 = vrot.slane %v695, 2
      %v787 = vor.u32 %v785, %v786
      %v788 = vsel %vm764, %v783, %v787
      %v789 = vrot.slane %v707, 1
      %v790 = vrot.slane %v703, 2
      %v791 = vor.u32 %v789, %v790
      %v792 = vsel %vm764, %v787, %v791
      %v793 = vrot.slane %v715, 1
      %v794 = vrot.slane %v711, 2
      %v795 = vor.u32 %v793, %v794
      %v796 = vsel %vm764, %v791, %v795
      %v798 = vshrl.u32 %v763, 16
      %v800 = vrot.slane %v798, 1
      %v801 = vshll.u32 %v763, 16
      %v803 = vrot.slane %v801, 2
      %v804 = vor.u32 %v800, %v803
      %v805 = vsel %vm764, %v795, %v804
      %806 = vrot.lane.b32.xlu0 %v776, 64
      %v807 = vpop.permute.xlu0 %806
      %808 = vrot.lane.b32.xlu0 %v780, 64
      %v809 = vpop.permute.xlu0 %808
      %810 = vrot.lane.b32.xlu0 %v784, 64
      %v811 = vpop.permute.xlu0 %810
      %812 = vrot.lane.b32.xlu0 %v788, 64
      %v813 = vpop.permute.xlu0 %812
      %814 = vrot.lane.b32.xlu0 %v792, 64
      %v815 = vpop.permute.xlu0 %814
      %816 = vrot.lane.b32.xlu0 %v796, 64
      %v817 = vpop.permute.xlu0 %816
      %818 = vrot.lane.b32.xlu0 %v805, 64
      %v819 = vpop.permute.xlu0 %818
      %820 = vrot.lane.b32.xlu0 %v804, 64
      %v821 = vpop.permute.xlu0 %820
      %vm822 = vcmask 523264
      %v824 = vsel %vm822, %v651, %v727
      %v827 = vsel %vm822, %v652, %v729
      %v830 = vsel %vm822, %v653, %v731
      %v833 = vsel %vm822, %v654, %v733
      %v836 = vsel %vm822, %v655, %v735
      %v839 = vsel %vm822, %v656, %v737
      %v842 = vsel %vm822, %v657, %v739
      %v846 = vsel %vm822, %v658, %v741
      %v850 = vsel %vm822, %v748, %v807
      %v854 = vsel %vm822, %v750, %v809
      %v858 = vsel %vm822, %v752, %v811
      %v862 = vsel %vm822, %v754, %v813
      %v866 = vsel %vm822, %v756, %v815
      %v870 = vsel %vm822, %v758, %v817
      %v874 = vsel %vm822, %v760, %v819
      %v878 = vsel %vm822, %v759, %v821
      %v880 = vld [vmem:[%s2] sm:$0xf]
      %v881 = vld [vmem:[%s2 + $0x4] sm:$0xf]
      %v882 = vld [vmem:[%s2 + $0x8] sm:$0xf]
      %v883 = vld [vmem:[%s2 + $0xc] sm:$0xf]
      %v884 = vld [vmem:[%s2 + $0x10] sm:$0xf]
      %v885 = vld [vmem:[%s2 + $0x14] sm:$0xf]
      %v886 = vld [vmem:[%s2 + $0x18] sm:$0xf]
      %v887 = vld [vmem:[%s2 + $0x1c] sm:$0xf]
      %v888 = vld [vmem:[%s2 + $0x20] sm:$0xf]
      %v889 = vld [vmem:[%s2 + $0x24] sm:$0xf]
      %v890 = vld [vmem:[%s2 + $0x28] sm:$0xf]
      %v891 = vld [vmem:[%s2 + $0x2c] sm:$0xf]
      %v892 = vld [vmem:[%s2 + $0x30] sm:$0xf]
      %v893 = vld [vmem:[%s2 + $0x34] sm:$0xf]
      %v894 = vld [vmem:[%s2 + $0x38] sm:$0xf]
      %v895 = vld [vmem:[%s2 + $0x3c] sm:$0xf]
      %v896 = vld [vmem:[%s2 + $0x40] sm:$0xf]
      %v897 = vld [vmem:[%s2 + $0x44] sm:$0xf]
      %v898 = vld [vmem:[%s2 + $0x48] sm:$0xf]
      %v899 = vld [vmem:[%s2 + $0x4c] sm:$0xf]
      %v900 = vld [vmem:[%s2 + $0x50] sm:$0xf]
      %v901 = vld [vmem:[%s2 + $0x54] sm:$0xf]
      %v902 = vld [vmem:[%s2 + $0x58] sm:$0xf]
      %v903 = vld [vmem:[%s2 + $0x5c] sm:$0xf]
      %v904 = vld [vmem:[%s2 + $0x60] sm:$0xf]
      %v905 = vld [vmem:[%s2 + $0x64] sm:$0xf]
      %v906 = vld [vmem:[%s2 + $0x68] sm:$0xf]
      %v907 = vld [vmem:[%s2 + $0x6c] sm:$0xf]
      %v908 = vld [vmem:[%s2 + $0x70] sm:$0xf]
      %v909 = vld [vmem:[%s2 + $0x74] sm:$0xf]
      %v910 = vld [vmem:[%s2 + $0x78] sm:$0xf]
      %v911 = vld [vmem:[%s2 + $0x7c] sm:$0xf]
      %v912 = vld [vmem:[#allocation2] sm:$0xc]
      %v913 = vld [vmem:[#allocation2 + $0x4] sm:$0xc]
      %v914 = vld [vmem:[#allocation2 + $0x3c] sm:$0xf]
      %v915 = vld [vmem:[#allocation2 + $0x40] sm:$0x7]
      %v916 = vld [vmem:[#allocation2 + $0x4] sm:$0x8]
      %v917 = vld [vmem:[#allocation2 + $0x40] sm:$0xf]
      %v919 = vunpack.c.l.b16 %v912
      %v920 = vpack.c.b16 %v637, %v919
      %v924 = vunpack.c.l.b16 %v913
      %v925 = vunpack.c.l.b16 %v914
      %v926 = vunpack.c.l.b16 %v915
      %v927 = vpack.c.b16 %v638, %v924
      %v928 = vpack.c.b16 %v640, %v639
      %v929 = vpack.c.b16 %v642, %v641
      %v930 = vpack.c.b16 %v644, %v643
      %v931 = vpack.c.b16 %v646, %v645
      %v932 = vpack.c.b16 %v648, %v647
      %v933 = vpack.c.b16 %v650, %v649
      %v934 = vpack.c.b16 %v926, %v925
      %v936 = vshrl.u32 %v927, 16
      %v938 = vshll.u32 %v927, 16
      %v940 = vrot.slane %v938, 1
      %v941 = vor.u32 %v936, %v940
      %v943 = vshll.u32 %v928, 16
      %v945 = vrot.slane %v943, 1
      %v946 = vsel %vm662, %v941, %v945
      %v947 = vshrl.u32 %v928, 16
      %v949 = vor.u32 %v947, %v945
      %v951 = vshll.u32 %v929, 16
      %v953 = vrot.slane %v951, 1
      %v954 = vsel %vm662, %v949, %v953
      %v955 = vshrl.u32 %v929, 16
      %v957 = vor.u32 %v955, %v953
      %v959 = vshll.u32 %v930, 16
      %v961 = vrot.slane %v959, 1
      %v962 = vsel %vm662, %v957, %v961
      %v963 = vshrl.u32 %v930, 16
      %v965 = vor.u32 %v963, %v961
      %v967 = vshll.u32 %v931, 16
      %v969 = vrot.slane %v967, 1
      %v970 = vsel %vm662, %v965, %v969
      %v971 = vshrl.u32 %v931, 16
      %v973 = vor.u32 %v971, %v969
      %v975 = vshll.u32 %v932, 16
      %v977 = vrot.slane %v975, 1
      %v978 = vsel %vm662, %v973, %v977
      %v979 = vshrl.u32 %v932, 16
      %v981 = vor.u32 %v979, %v977
      %v983 = vshll.u32 %v933, 16
      %v985 = vrot.slane %v983, 1
      %v986 = vsel %vm662, %v981, %v985
      %v987 = vshrl.u32 %v933, 16
      %v989 = vor.u32 %v987, %v985
      %v991 = vshll.u32 %v934, 16
      %v993 = vrot.slane %v991, 1
      %v994 = vsel %vm662, %v989, %v993
      %v995 = vshrl.u32 %v934, 16
      %v997 = vor.u32 %v995, %v993
      %998 = vrot.lane.b32.xlu0 %v946, 64
      %v999 = vpop.permute.xlu0 %998
      %1000 = vrot.lane.b32.xlu0 %v954, 64
      %v1001 = vpop.permute.xlu0 %1000
      %1002 = vrot.lane.b32.xlu0 %v962, 64
      %v1003 = vpop.permute.xlu0 %1002
      %1004 = vrot.lane.b32.xlu0 %v970, 64
      %v1005 = vpop.permute.xlu0 %1004
      %1006 = vrot.lane.b32.xlu0 %v978, 64
      %v1007 = vpop.permute.xlu0 %1006
      %1008 = vrot.lane.b32.xlu0 %v986, 64
      %v1009 = vpop.permute.xlu0 %1008
      %1010 = vrot.lane.b32.xlu0 %v994, 64
      %v1011 = vpop.permute.xlu0 %1010
      %1012 = vrot.lane.b32.xlu0 %v997, 64
      %v1013 = vpop.permute.xlu0 %1012
      %v1015 = vunpack.c.l.b16 %v916
      %v1016 = vpack.c.b16 %v638, %v1015
      %v1017 = vrot.slane %v1016, 1
      %v1018 = vrot.slane %v928, 1
      %v1019 = vsel %vm745, %v1017, %v1018
      %v1020 = vrot.slane %v929, 1
      %v1021 = vsel %vm745, %v1018, %v1020
      %v1022 = vrot.slane %v930, 1
      %v1023 = vsel %vm745, %v1020, %v1022
      %v1024 = vrot.slane %v931, 1
      %v1025 = vsel %vm745, %v1022, %v1024
      %v1026 = vrot.slane %v932, 1
      %v1027 = vsel %vm745, %v1024, %v1026
      %v1028 = vrot.slane %v933, 1
      %v1029 = vsel %vm745, %v1026, %v1028
      %v1030 = vrot.slane %v934, 1
      %v1031 = vsel %vm745, %v1028, %v1030
      %v1033 = vunpack.c.l.b16 %v917
      %v1034 = vpack.c.b16 %v1033, %v925
      %v1036 = vshrl.u32 %v1016, 16
      %v1038 = vrot.slane %v1036, 1
      %v1039 = vshll.u32 %v1016, 16
      %v1041 = vrot.slane %v1039, 2
      %v1042 = vor.u32 %v1038, %v1041
      %v1043 = vrot.slane %v947, 1
      %v1044 = vrot.slane %v943, 2
      %v1045 = vor.u32 %v1043, %v1044
      %v1046 = vsel %vm764, %v1042, %v1045
      %v1047 = vrot.slane %v955, 1
      %v1048 = vrot.slane %v951, 2
      %v1049 = vor.u32 %v1047, %v1048
      %v1050 = vsel %vm764, %v1045, %v1049
      %v1051 = vrot.slane %v963, 1
      %v1052 = vrot.slane %v959, 2
      %v1053 = vor.u32 %v1051, %v1052
      %v1054 = vsel %vm764, %v1049, %v1053
      %v1055 = vrot.slane %v971, 1
      %v1056 = vrot.slane %v967, 2
      %v1057 = vor.u32 %v1055, %v1056
      %v1058 = vsel %vm764, %v1053, %v1057
      %v1059 = vrot.slane %v979, 1
      %v1060 = vrot.slane %v975, 2
      %v1061 = vor.u32 %v1059, %v1060
      %v1062 = vsel %vm764, %v1057, %v1061
      %v1063 = vrot.slane %v987, 1
      %v1064 = vrot.slane %v983, 2
      %v1065 = vor.u32 %v1063, %v1064
      %v1066 = vsel %vm764, %v1061, %v1065
      %v1068 = vshrl.u32 %v1034, 16
      %v1070 = vrot.slane %v1068, 1
      %v1071 = vshll.u32 %v1034, 16
      %v1073 = vrot.slane %v1071, 2
      %v1074 = vor.u32 %v1070, %v1073
      %v1075 = vsel %vm764, %v1065, %v1074
      %1076 = vrot.lane.b32.xlu0 %v1046, 64
      %v1077 = vpop.permute.xlu0 %1076
      %1078 = vrot.lane.b32.xlu0 %v1050, 64
      %v1079 = vpop.permute.xlu0 %1078
      %1080 = vrot.lane.b32.xlu0 %v1054, 64
      %v1081 = vpop.permute.xlu0 %1080
      %1082 = vrot.lane.b32.xlu0 %v1058, 64
      %v1083 = vpop.permute.xlu0 %1082
      %1084 = vrot.lane.b32.xlu0 %v1062, 64
      %v1085 = vpop.permute.xlu0 %1084
      %1086 = vrot.lane.b32.xlu0 %v1066, 64
      %v1087 = vpop.permute.xlu0 %1086
      %1088 = vrot.lane.b32.xlu0 %v1075, 64
      %v1089 = vpop.permute.xlu0 %1088
      %1090 = vrot.lane.b32.xlu0 %v1074, 64
      %v1091 = vpop.permute.xlu0 %1090
      %v1094 = vsel %vm822, %v920, %v999
      %v1096 = vsel %vm822, %v652, %v1001
      %v1098 = vsel %vm822, %v653, %v1003
      %v1100 = vsel %vm822, %v654, %v1005
      %v1102 = vsel %vm822, %v655, %v1007
      %v1104 = vsel %vm822, %v656, %v1009
      %v1106 = vsel %vm822, %v657, %v1011
      %v1108 = vsel %vm822, %v763, %v1013
      %v1111 = vsel %vm822, %v1019, %v1077
      %v1114 = vsel %vm822, %v1021, %v1079
      %v1117 = vsel %vm822, %v1023, %v1081
      %v1120 = vsel %vm822, %v1025, %v1083
      %v1123 = vsel %vm822, %v1027, %v1085
      %v1126 = vsel %vm822, %v1029, %v1087
      %v1129 = vsel %vm822, %v1031, %v1089
      %v1132 = vsel %vm822, %v1030, %v1091
      %v1133 = vld [vmem:[%s2 + $0x80] sm:$0xf]
      %v1134 = vld [vmem:[%s2 + $0x84] sm:$0xf]
      %v1135 = vld [vmem:[%s2 + $0x88] sm:$0xf]
      %v1136 = vld [vmem:[%s2 + $0x8c] sm:$0xf]
      %v1137 = vld [vmem:[%s2 + $0x90] sm:$0xf]
      %v1138 = vld [vmem:[%s2 + $0x94] sm:$0xf]
      %v1139 = vld [vmem:[%s2 + $0x98] sm:$0xf]
      %v1140 = vld [vmem:[%s2 + $0x9c] sm:$0xf]
      %v1141 = vld [vmem:[%s2 + $0xa0] sm:$0xf]
      %v1142 = vld [vmem:[%s2 + $0xa4] sm:$0xf]
      %v1143 = vld [vmem:[%s2 + $0xa8] sm:$0xf]
      %v1144 = vld [vmem:[%s2 + $0xac] sm:$0xf]
      %v1145 = vld [vmem:[%s2 + $0xb0] sm:$0xf]
      %v1146 = vld [vmem:[%s2 + $0xb4] sm:$0xf]
      %v1147 = vld [vmem:[%s2 + $0xb8] sm:$0xf]
      %v1148 = vld [vmem:[%s2 + $0xbc] sm:$0xf]
      %v1149 = vld [vmem:[%s2 + $0xc0] sm:$0xf]
      %v1150 = vld [vmem:[%s2 + $0xc4] sm:$0xf]
      %v1151 = vld [vmem:[%s2 + $0xc8] sm:$0xf]
      %v1152 = vld [vmem:[%s2 + $0xcc] sm:$0xf]
      %v1153 = vld [vmem:[%s2 + $0xd0] sm:$0xf]
      %v1154 = vld [vmem:[%s2 + $0xd4] sm:$0xf]
      %v1155 = vld [vmem:[%s2 + $0xd8] sm:$0xf]
      %v1156 = vld [vmem:[%s2 + $0xdc] sm:$0xf]
      %v1157 = vld [vmem:[%s2 + $0xe0] sm:$0xf]
      %v1158 = vld [vmem:[%s2 + $0xe4] sm:$0xf]
      %v1159 = vld [vmem:[%s2 + $0xe8] sm:$0xf]
      %v1160 = vld [vmem:[%s2 + $0xec] sm:$0xf]
      %v1161 = vld [vmem:[%s2 + $0xf0] sm:$0xf]
      %v1162 = vld [vmem:[%s2 + $0xf4] sm:$0xf]
      %v1163 = vld [vmem:[%s2 + $0xf8] sm:$0xf]
      %v1164 = vld [vmem:[%s2 + $0xfc] sm:$0xf]
      %vm1181 = vcmask 1045504
      %v1182 = vrot.slane %v1094, 2
      %v1183 = vrot.slane %v1096, 2
      %v1184 = vsel %vm1181, %v1182, %v1183
      %v1185 = vrot.slane %v1111, 2
      %v1186 = vrot.slane %v1114, 2
      %v1187 = vsel %vm1181, %v1185, %v1186
      %v1188 = vrot.slane %v1098, 2
      %v1189 = vsel %vm1181, %v1183, %v1188
      %v1190 = vrot.slane %v1117, 2
      %v1191 = vsel %vm1181, %v1186, %v1190
      %v1192 = vrot.slane %v1100, 2
      %v1193 = vsel %vm1181, %v1188, %v1192
      %v1194 = vrot.slane %v1120, 2
      %v1195 = vsel %vm1181, %v1190, %v1194
      %v1196 = vrot.slane %v1102, 2
      %v1197 = vsel %vm1181, %v1192, %v1196
      %v1198 = vrot.slane %v1123, 2
      %v1199 = vsel %vm1181, %v1194, %v1198
      %v1200 = vrot.slane %v1104, 2
      %v1201 = vsel %vm1181, %v1196, %v1200
      %v1202 = vrot.slane %v1126, 2
      %v1203 = vsel %vm1181, %v1198, %v1202
      %v1204 = vrot.slane %v1106, 2
      %v1205 = vsel %vm1181, %v1200, %v1204
      %v1206 = vrot.slane %v1129, 2
      %v1207 = vsel %vm1181, %v1202, %v1206
      %v1208 = vrot.slane %v1108, 2
      %v1209 = vsel %vm1181, %v1204, %v1208
      %v1210 = vrot.slane %v1132, 2
      %v1211 = vsel %vm1181, %v1206, %v1210
      %v1260 = vunpack.c.l.b16 %v1133
      %v1261 = vunpack.c.l.b16 %v1134
      %v1262 = vunpack.c.l.b16 %v1135
      %v1263 = vunpack.c.l.b16 %v1136
      %v1264 = vunpack.c.l.b16 %v1137
      %v1265 = vunpack.c.l.b16 %v1138
      %v1266 = vunpack.c.l.b16 %v1139
      %v1267 = vunpack.c.l.b16 %v1140
      %v1268 = vunpack.c.l.b16 %v1141
      %v1269 = vunpack.c.l.b16 %v1142
      %v1270 = vunpack.c.l.b16 %v1143
      %v1271 = vunpack.c.l.b16 %v1144
      %v1272 = vunpack.c.l.b16 %v1145
      %v1273 = vunpack.c.l.b16 %v1146
      %v1274 = vunpack.c.l.b16 %v1147
      %v1275 = vunpack.c.l.b16 %v1148
      %v1276 = vunpack.c.l.b16 %v1149
      %v1277 = vunpack.c.l.b16 %v1150
      %v1278 = vunpack.c.l.b16 %v1151
      %v1279 = vunpack.c.l.b16 %v1152
      %v1280 = vunpack.c.l.b16 %v1153
      %v1281 = vunpack.c.l.b16 %v1154
      %v1282 = vunpack.c.l.b16 %v1155
      %v1283 = vunpack.c.l.b16 %v1156
      %v1284 = vunpack.c.l.b16 %v1157
      %v1285 = vunpack.c.l.b16 %v1158
      %v1286 = vunpack.c.l.b16 %v1159
      %v1287 = vunpack.c.l.b16 %v1160
      %v1288 = vunpack.c.l.b16 %v1161
      %v1289 = vunpack.c.l.b16 %v1162
      %v1290 = vunpack.c.l.b16 %v1163
      %v1291 = vunpack.c.l.b16 %v1164
      %v1292 = vpack.c.b16 %v1261, %v1260
      %v1293 = vpack.c.b16 %v1263, %v1262
      %v1294 = vpack.c.b16 %v1265, %v1264
      %v1295 = vpack.c.b16 %v1267, %v1266
      %v1296 = vpack.c.b16 %v1269, %v1268
      %v1297 = vpack.c.b16 %v1271, %v1270
      %v1298 = vpack.c.b16 %v1273, %v1272
      %v1299 = vpack.c.b16 %v1275, %v1274
      %v1300 = vpack.c.b16 %v1277, %v1276
      %v1301 = vpack.c.b16 %v1279, %v1278
      %v1302 = vpack.c.b16 %v1281, %v1280
      %v1303 = vpack.c.b16 %v1283, %v1282
      %v1304 = vpack.c.b16 %v1285, %v1284
      %v1305 = vpack.c.b16 %v1287, %v1286
      %v1306 = vpack.c.b16 %v1289, %v1288
      %v1307 = vpack.c.b16 %v1291, %v1290
      %1324 = vmatprep.subr.bf16.mxu0 0
      %1325 = vmatpush1.bf16.msra.mxu0 %v1292
      %1326 = vmatprep.subr.bf16.mxu0 0
      %1327 = vmatpush1.bf16.msra.mxu0 %v1293
      %1328 = vmatprep.subr.bf16.mxu0 0
      %1329 = vmatpush1.bf16.msra.mxu0 %v1294
      %1330 = vmatprep.subr.bf16.mxu0 0
      %1331 = vmatpush1.bf16.msra.mxu0 %v1295
      %1332 = vmatprep.subr.bf16.mxu0 0
      %1333 = vmatpush1.bf16.msra.mxu0 %v1296
      %1334 = vmatprep.subr.bf16.mxu0 0
      %1335 = vmatpush1.bf16.msra.mxu0 %v1297
      %1336 = vmatprep.subr.bf16.mxu0 0
      %1337 = vmatpush1.bf16.msra.mxu0 %v1298
      %1338 = vmatprep.subr.bf16.mxu0 0
      %1339 = vmatpush1.bf16.msra.mxu0 %v1299
      %1340 = vmatprep.subr.bf16.mxu0 0
      %1341 = vmatpush1.bf16.msra.mxu0 %v1300
      %1342 = vmatprep.subr.bf16.mxu0 0
      %1343 = vmatpush1.bf16.msra.mxu0 %v1301
      %1344 = vmatprep.subr.bf16.mxu0 0
      %1345 = vmatpush1.bf16.msra.mxu0 %v1302
      %1346 = vmatprep.subr.bf16.mxu0 0
      %1347 = vmatpush1.bf16.msra.mxu0 %v1303
      %1348 = vmatprep.subr.bf16.mxu0 0
      %1349 = vmatpush1.bf16.msra.mxu0 %v1304
      %1350 = vmatprep.subr.bf16.mxu0 0
      %1351 = vmatpush1.bf16.msra.mxu0 %v1305
      %1352 = vmatprep.subr.bf16.mxu0 0
      %1353 = vmatpush1.bf16.msra.mxu0 %v1306
      %1354 = vmatprep.subr.bf16.mxu0 0
      %1355 = vmatpush1.bf16.msra.mxu0 %v1307
      %1356 = vmatprep.mubr.bf16.mxu0 %v1187
      %1357 = vmatmul.mubr.bf16.gmra.mrb[0].mxu0 %v1184
      %v1358 = vpop.f32.mrb[0].mxu0
      %v1359 = vadd.f32 0.0, %v1358
      %v1360 = vpop.f32.mrb[0].mxu0
      %v1361 = vpop.f32.mrb[0].mxu0
      %v1362 = vadd.f32 0.0, %v1361
      %v1363 = vpop.f32.mrb[0].mxu0
      %1364 = vmatprep.mubr.bf16.mxu0 %v1191
      %1365 = vmatmul.mubr.bf16.gmra.mrb[0].mxu0 %v1189
      %v1366 = vpop.f32.mrb[0].mxu0
      %v1367 = vadd.f32 0.0, %v1366
      %v1368 = vpop.f32.mrb[0].mxu0
      %v1369 = vpop.f32.mrb[0].mxu0
      %v1370 = vadd.f32 0.0, %v1369
      %v1371 = vpop.f32.mrb[0].mxu0
      %1372 = vmatprep.mubr.bf16.mxu0 %v1195
      %1373 = vmatmul.mubr.bf16.gmra.mrb[0].mxu0 %v1193
      %v1374 = vpop.f32.mrb[0].mxu0
      %v1375 = vadd.f32 0.0, %v1374
      %v1376 = vpop.f32.mrb[0].mxu0
      %v1377 = vpop.f32.mrb[0].mxu0
      %v1378 = vadd.f32 0.0, %v1377
      %v1379 = vpop.f32.mrb[0].mxu0
      %1380 = vmatprep.mubr.bf16.mxu0 %v1199
      %1381 = vmatmul.mubr.bf16.gmra.mrb[0].mxu0 %v1197
      %v1382 = vpop.f32.mrb[0].mxu0
      %v1383 = vadd.f32 0.0, %v1382
      %v1384 = vpop.f32.mrb[0].mxu0
      %v1385 = vpop.f32.mrb[0].mxu0
      %v1386 = vadd.f32 0.0, %v1385
      %v1387 = vpop.f32.mrb[0].mxu0
      %1388 = vmatprep.mubr.bf16.mxu0 %v1203
      %1389 = vmatmul.mubr.bf16.gmra.mrb[0].mxu0 %v1201
      %v1390 = vpop.f32.mrb[0].mxu0
      %v1391 = vadd.f32 0.0, %v1390
      %v1392 = vpop.f32.mrb[0].mxu0
      %v1393 = vpop.f32.mrb[0].mxu0
      %v1394 = vadd.f32 0.0, %v1393
      %v1395 = vpop.f32.mrb[0].mxu0
      %1396 = vmatprep.mubr.bf16.mxu0 %v1207
      %1397 = vmatmul.mubr.bf16.gmra.mrb[0].mxu0 %v1205
      %v1398 = vpop.f32.mrb[0].mxu0
      %v1399 = vadd.f32 0.0, %v1398
      %v1400 = vpop.f32.mrb[0].mxu0
      %v1401 = vpop.f32.mrb[0].mxu0
      %v1402 = vadd.f32 0.0, %v1401
      %v1403 = vpop.f32.mrb[0].mxu0
      %1404 = vmatprep.mubr.bf16.mxu0 %v1211
      %1405 = vmatmul.mubr.bf16.gmra.mrb[0].mxu0 %v1209
      %v1406 = vpop.f32.mrb[0].mxu0
      %v1407 = vadd.f32 0.0, %v1406
      %v1408 = vpop.f32.mrb[0].mxu0
      %v1409 = vpop.f32.mrb[0].mxu0
      %v1410 = vadd.f32 0.0, %v1409
      %v1411 = vpop.f32.mrb[0].mxu0
      %1412 = vmatprep.mubr.bf16.mxu0 %v1210
      %1413 = vmatmul.mubr.bf16.gmra.mrb[0].mxu0 %v1208
      %v1414 = vpop.f32.mrb[0].mxu0
      %v1415 = vadd.f32 0.0, %v1414
      %v1416 = vpop.f32.mrb[0].mxu0
      %v1417 = vpop.f32.mrb[0].mxu0
      %v1418 = vpop.f32.mrb[0].mxu0
      %1419 = vdwg.mxu0
      %v1452 = vunpack.c.l.b16 %v880
      %v1453 = vunpack.c.l.b16 %v881
      %v1454 = vunpack.c.l.b16 %v882
      %v1455 = vunpack.c.l.b16 %v883
      %v1456 = vunpack.c.l.b16 %v884
      %v1457 = vunpack.c.l.b16 %v885
      %v1458 = vunpack.c.l.b16 %v886
      %v1459 = vunpack.c.l.b16 %v887
      %v1460 = vunpack.c.l.b16 %v888
      %v1461 = vunpack.c.l.b16 %v889
      %v1462 = vunpack.c.l.b16 %v890
      %v1463 = vunpack.c.l.b16 %v891
      %v1464 = vunpack.c.l.b16 %v892
      %v1465 = vunpack.c.l.b16 %v893
      %v1466 = vunpack.c.l.b16 %v894
      %v1467 = vunpack.c.l.b16 %v895
      %v1468 = vunpack.c.l.b16 %v896
      %v1469 = vunpack.c.l.b16 %v897
      %v1470 = vunpack.c.l.b16 %v898
      %v1471 = vunpack.c.l.b16 %v899
      %v1472 = vunpack.c.l.b16 %v900
      %v1473 = vunpack.c.l.b16 %v901
      %v1474 = vunpack.c.l.b16 %v902
      %v1475 = vunpack.c.l.b16 %v903
      %v1476 = vunpack.c.l.b16 %v904
      %v1477 = vunpack.c.l.b16 %v905
      %v1478 = vunpack.c.l.b16 %v906
      %v1479 = vunpack.c.l.b16 %v907
      %v1480 = vunpack.c.l.b16 %v908
      %v1481 = vunpack.c.l.b16 %v909
      %v1482 = vunpack.c.l.b16 %v910
      %v1483 = vunpack.c.l.b16 %v911
      %v1484 = vpack.c.b16 %v1453, %v1452
      %v1485 = vpack.c.b16 %v1455, %v1454
      %v1486 = vpack.c.b16 %v1457, %v1456
      %v1487 = vpack.c.b16 %v1459, %v1458
      %v1488 = vpack.c.b16 %v1461, %v1460
      %v1489 = vpack.c.b16 %v1463, %v1462
      %v1490 = vpack.c.b16 %v1465, %v1464
      %v1491 = vpack.c.b16 %v1467, %v1466
      %v1492 = vpack.c.b16 %v1469, %v1468
      %v1493 = vpack.c.b16 %v1471, %v1470
      %v1494 = vpack.c.b16 %v1473, %v1472
      %v1495 = vpack.c.b16 %v1475, %v1474
      %v1496 = vpack.c.b16 %v1477, %v1476
      %v1497 = vpack.c.b16 %v1479, %v1478
      %v1498 = vpack.c.b16 %v1481, %v1480
      %v1499 = vpack.c.b16 %v1483, %v1482
      %1516 = vmatprep.subr.bf16.mxu0 0
      %1517 = vmatpush1.bf16.msra.mxu0 %v1484
      %1518 = vmatprep.subr.bf16.mxu0 0
      %1519 = vmatpush1.bf16.msra.mxu0 %v1485
      %1520 = vmatprep.subr.bf16.mxu0 0
      %1521 = vmatpush1.bf16.msra.mxu0 %v1486
      %1522 = vmatprep.subr.bf16.mxu0 0
      %1523 = vmatpush1.bf16.msra.mxu0 %v1487
      %1524 = vmatprep.subr.bf16.mxu0 0
      %1525 = vmatpush1.bf16.msra.mxu0 %v1488
      %1526 = vmatprep.subr.bf16.mxu0 0
      %1527 = vmatpush1.bf16.msra.mxu0 %v1489
      %1528 = vmatprep.subr.bf16.mxu0 0
      %1529 = vmatpush1.bf16.msra.mxu0 %v1490
      %1530 = vmatprep.subr.bf16.mxu0 0
      %1531 = vmatpush1.bf16.msra.mxu0 %v1491
      %1532 = vmatprep.subr.bf16.mxu0 0
      %1533 = vmatpush1.bf16.msra.mxu0 %v1492
      %1534 = vmatprep.subr.bf16.mxu0 0
      %1535 = vmatpush1.bf16.msra.mxu0 %v1493
      %1536 = vmatprep.subr.bf16.mxu0 0
      %1537 = vmatpush1.bf16.msra.mxu0 %v1494
      %1538 = vmatprep.subr.bf16.mxu0 0
      %1539 = vmatpush1.bf16.msra.mxu0 %v1495
      %1540 = vmatprep.subr.bf16.mxu0 0
      %1541 = vmatpush1.bf16.msra.mxu0 %v1496
      %1542 = vmatprep.subr.bf16.mxu0 0
      %1543 = vmatpush1.bf16.msra.mxu0 %v1497
      %1544 = vmatprep.subr.bf16.mxu0 0
      %1545 = vmatpush1.bf16.msra.mxu0 %v1498
      %1546 = vmatprep.subr.bf16.mxu0 0
      %1547 = vmatpush1.bf16.msra.mxu0 %v1499
      %1548 = vmatprep.mubr.bf16.mxu0 %v850
      %1549 = vmatmul.mubr.bf16.gmra.mrb[0].mxu0 %v824
      %v1550 = vpop.f32.mrb[0].mxu0
      %v1551 = vadd.f32 %v1359, %v1550
      %v1552 = vpop.f32.mrb[0].mxu0
      %v1553 = vpop.f32.mrb[0].mxu0
      %v1554 = vadd.f32 %v1362, %v1553
      %v1555 = vpop.f32.mrb[0].mxu0
      %1556 = vmatprep.mubr.bf16.mxu0 %v854
      %1557 = vmatmul.mubr.bf16.gmra.mrb[0].mxu0 %v827
      %v1558 = vpop.f32.mrb[0].mxu0
      %v1559 = vadd.f32 %v1367, %v1558
      %v1560 = vpop.f32.mrb[0].mxu0
      %v1561 = vpop.f32.mrb[0].mxu0
      %v1562 = vadd.f32 %v1370, %v1561
      %v1563 = vpop.f32.mrb[0].mxu0
      %1564 = vmatprep.mubr.bf16.mxu0 %v858
      %1565 = vmatmul.mubr.bf16.gmra.mrb[0].mxu0 %v830
      %v1566 = vpop.f32.mrb[0].mxu0
      %v1567 = vadd.f32 %v1375, %v1566
      %v1568 = vpop.f32.mrb[0].mxu0
      %v1569 = vpop.f32.mrb[0].mxu0
      %v1570 = vadd.f32 %v1378, %v1569
      %v1571 = vpop.f32.mrb[0].mxu0
      %1572 = vmatprep.mubr.bf16.mxu0 %v862
      %1573 = vmatmul.mubr.bf16.gmra.mrb[0].mxu0 %v833
      %v1574 = vpop.f32.mrb[0].mxu0
      %v1575 = vadd.f32 %v1383, %v1574
      %v1576 = vpop.f32.mrb[0].mxu0
      %v1577 = vpop.f32.mrb[0].mxu0
      %v1578 = vadd.f32 %v1386, %v1577
      %v1579 = vpop.f32.mrb[0].mxu0
      %1580 = vmatprep.mubr.bf16.mxu0 %v866
      %1581 = vmatmul.mubr.bf16.gmra.mrb[0].mxu0 %v836
      %v1582 = vpop.f32.mrb[0].mxu0
      %v1583 = vadd.f32 %v1391, %v1582
      %v1584 = vpop.f32.mrb[0].mxu0
      %v1585 = vpop.f32.mrb[0].mxu0
      %v1586 = vadd.f32 %v1394, %v1585
      %v1587 = vpop.f32.mrb[0].mxu0
      %1588 = vmatprep.mubr.bf16.mxu0 %v870
      %1589 = vmatmul.mubr.bf16.gmra.mrb[0].mxu0 %v839
      %v1590 = vpop.f32.mrb[0].mxu0
      %v1591 = vadd.f32 %v1399, %v1590
      %v1592 = vpop.f32.mrb[0].mxu0
      %v1593 = vpop.f32.mrb[0].mxu0
      %v1594 = vadd.f32 %v1402, %v1593
      %v1595 = vpop.f32.mrb[0].mxu0
      %1596 = vmatprep.mubr.bf16.mxu0 %v874
      %1597 = vmatmul.mubr.bf16.gmra.mrb[0].mxu0 %v842
      %v1598 = vpop.f32.mrb[0].mxu0
      %v1599 = vadd.f32 %v1407, %v1598
      %v1600 = vpop.f32.mrb[0].mxu0
      %v1601 = vpop.f32.mrb[0].mxu0
      %v1602 = vadd.f32 %v1410, %v1601
      %v1603 = vpop.f32.mrb[0].mxu0
      %1604 = vmatprep.mubr.bf16.mxu0 %v878
      %1605 = vmatmul.mubr.bf16.gmra.mrb[0].mxu0 %v846
      %v1606 = vpop.f32.mrb[0].mxu0
      %v1607 = vadd.f32 %v1415, %v1606
      %v1608 = vpop.f32.mrb[0].mxu0
      %v1609 = vpop.f32.mrb[0].mxu0
      %v1610 = vpop.f32.mrb[0].mxu0
      %1611 = vdwg.mxu0
      %v1612 = vld [vmem:[#allocation2 + $0x8] sm:$0xf]
      %v1613 = vld [vmem:[#allocation2 + $0xc] sm:$0xf]
      %v1614 = vld [vmem:[#allocation2 + $0x10] sm:$0xf]
      %v1615 = vld [vmem:[#allocation2 + $0x14] sm:$0xf]
      %v1616 = vld [vmem:[#allocation2 + $0x18] sm:$0xf]
      %v1617 = vld [vmem:[#allocation2 + $0x1c] sm:$0xf]
      %v1618 = vld [vmem:[#allocation2 + $0x20] sm:$0xf]
      %v1619 = vld [vmem:[#allocation2 + $0x24] sm:$0xf]
      %v1620 = vld [vmem:[#allocation2 + $0x28] sm:$0xf]
      %v1621 = vld [vmem:[#allocation2 + $0x2c] sm:$0xf]
      %v1622 = vld [vmem:[#allocation2 + $0x30] sm:$0xf]
      %v1623 = vld [vmem:[#allocation2 + $0x34] sm:$0xf]
      %v1624 = vld [vmem:[#allocation2 + $0x38] sm:$0xf]
      %v1625 = vld [vmem:[#allocation2 + $0x3c] sm:$0xf]
      %v1626 = vld [vmem:[#allocation2 + $0x40] sm:$0xf]
      %v1627 = vld [vmem:[#allocation2 + $0x44] sm:$0x1]
      %v1628 = vld [vmem:[#allocation2 + $0xc] sm:$0xe]
      %v1629 = vld [vmem:[#allocation2 + $0x44] sm:$0xf]
      %v1630 = vld [vmem:[#allocation2 + $0x48] sm:$0x1]
      %v1631 = vld [vmem:[#allocation2 + $0x48] sm:$0x3]
      %v1632 = vpack.c.b16 %v925, %v650
      %v1633 = vpack.c.b16 %v1033, %v1033
      %v1650 = vunpack.c.l.b16 %v1612
      %v1651 = vunpack.c.l.b16 %v1613
      %v1652 = vunpack.c.l.b16 %v1614
      %v1653 = vunpack.c.l.b16 %v1615
      %v1654 = vunpack.c.l.b16 %v1616
      %v1655 = vunpack.c.l.b16 %v1617
      %v1656 = vunpack.c.l.b16 %v1618
      %v1657 = vunpack.c.l.b16 %v1619
      %v1658 = vunpack.c.l.b16 %v1620
      %v1659 = vunpack.c.l.b16 %v1621
      %v1660 = vunpack.c.l.b16 %v1622
      %v1661 = vunpack.c.l.b16 %v1623
      %v1662 = vunpack.c.l.b16 %v1624
      %v1663 = vunpack.c.l.b16 %v1625
      %v1664 = vunpack.c.l.b16 %v1626
      %v1665 = vunpack.c.l.b16 %v1627
      %v1666 = vpack.c.b16 %v1651, %v1650
      %v1667 = vpack.c.b16 %v1653, %v1652
      %v1668 = vpack.c.b16 %v1655, %v1654
      %v1669 = vpack.c.b16 %v1657, %v1656
      %v1670 = vpack.c.b16 %v1659, %v1658
      %v1671 = vpack.c.b16 %v1661, %v1660
      %v1672 = vpack.c.b16 %v1663, %v1662
      %v1673 = vpack.c.b16 %v1665, %v1664
      %v1675 = vshrl.u32 %v1666, 16
      %v1677 = vshll.u32 %v1666, 16
      %v1679 = vrot.slane %v1677, 1
      %v1680 = vor.u32 %v1675, %v1679
      %v1682 = vshll.u32 %v1667, 16
      %v1684 = vrot.slane %v1682, 1
      %v1685 = vsel %vm662, %v1680, %v1684
      %v1686 = vshrl.u32 %v1667, 16
      %v1688 = vor.u32 %v1686, %v1684
      %v1690 = vshll.u32 %v1668, 16
      %v1692 = vrot.slane %v1690, 1
      %v1693 = vsel %vm662, %v1688, %v1692
      %v1694 = vshrl.u32 %v1668, 16
      %v1696 = vor.u32 %v1694, %v1692
      %v1698 = vshll.u32 %v1669, 16
      %v1700 = vrot.slane %v1698, 1
      %v1701 = vsel %vm662, %v1696, %v1700
      %v1702 = vshrl.u32 %v1669, 16
      %v1704 = vor.u32 %v1702, %v1700
      %v1706 = vshll.u32 %v1670, 16
      %v1708 = vrot.slane %v1706, 1
      %v1709 = vsel %vm662, %v1704, %v1708
      %v1710 = vshrl.u32 %v1670, 16
      %v1712 = vor.u32 %v1710, %v1708
      %v1714 = vshll.u32 %v1671, 16
      %v1716 = vrot.slane %v1714, 1
      %v1717 = vsel %vm662, %v1712, %v1716
      %v1718 = vshrl.u32 %v1671, 16
      %v1720 = vor.u32 %v1718, %v1716
      %v1722 = vshll.u32 %v1672, 16
      %v1724 = vrot.slane %v1722, 1
      %v1725 = vsel %vm662, %v1720, %v1724
      %v1726 = vshrl.u32 %v1672, 16
      %v1728 = vor.u32 %v1726, %v1724
      %v1730 = vshll.u32 %v1673, 16
      %v1732 = vrot.slane %v1730, 1
      %v1733 = vsel %vm662, %v1728, %v1732
      %v1734 = vshrl.u32 %v1673, 16
      %v1736 = vor.u32 %v1734, %v1732
      %1737 = vrot.lane.b32.xlu0 %v1685, 64
      %v1738 = vpop.permute.xlu0 %1737
      %1739 = vrot.lane.b32.xlu0 %v1693, 64
      %v1740 = vpop.permute.xlu0 %1739
      %1741 = vrot.lane.b32.xlu0 %v1701, 64
      %v1742 = vpop.permute.xlu0 %1741
      %1743 = vrot.lane.b32.xlu0 %v1709, 64
      %v1744 = vpop.permute.xlu0 %1743
      %1745 = vrot.lane.b32.xlu0 %v1717, 64
      %v1746 = vpop.permute.xlu0 %1745
      %1747 = vrot.lane.b32.xlu0 %v1725, 64
      %v1748 = vpop.permute.xlu0 %1747
      %1749 = vrot.lane.b32.xlu0 %v1733, 64
      %v1750 = vpop.permute.xlu0 %1749
      %1751 = vrot.lane.b32.xlu0 %v1736, 64
      %v1752 = vpop.permute.xlu0 %1751
      %v1756 = vunpack.c.l.b16 %v1628
      %v1757 = vunpack.c.l.b16 %v1629
      %v1758 = vunpack.c.l.b16 %v1630
      %v1759 = vpack.c.b16 %v1652, %v1756
      %v1760 = vpack.c.b16 %v1654, %v1653
      %v1761 = vpack.c.b16 %v1656, %v1655
      %v1762 = vpack.c.b16 %v1658, %v1657
      %v1763 = vpack.c.b16 %v1660, %v1659
      %v1764 = vpack.c.b16 %v1662, %v1661
      %v1765 = vpack.c.b16 %v1664, %v1663
      %v1766 = vpack.c.b16 %v1758, %v1757
      %v1767 = vrot.slane %v1759, 1
      %v1768 = vrot.slane %v1760, 1
      %v1769 = vsel %vm745, %v1767, %v1768
      %v1770 = vrot.slane %v1761, 1
      %v1771 = vsel %vm745, %v1768, %v1770
      %v1772 = vrot.slane %v1762, 1
      %v1773 = vsel %vm745, %v1770, %v1772
      %v1774 = vrot.slane %v1763, 1
      %v1775 = vsel %vm745, %v1772, %v1774
      %v1776 = vrot.slane %v1764, 1
      %v1777 = vsel %vm745, %v1774, %v1776
      %v1778 = vrot.slane %v1765, 1
      %v1779 = vsel %vm745, %v1776, %v1778
      %v1780 = vrot.slane %v1766, 1
      %v1781 = vsel %vm745, %v1778, %v1780
      %v1783 = vunpack.c.l.b16 %v1631
      %v1784 = vpack.c.b16 %v1783, %v1757
      %v1786 = vshrl.u32 %v1759, 16
      %v1788 = vrot.slane %v1786, 1
      %v1789 = vshll.u32 %v1759, 16
      %v1791 = vrot.slane %v1789, 2
      %v1792 = vor.u32 %v1788, %v1791
      %v1794 = vshrl.u32 %v1760, 16
      %v1796 = vrot.slane %v1794, 1
      %v1797 = vshll.u32 %v1760, 16
      %v1799 = vrot.slane %v1797, 2
      %v1800 = vor.u32 %v1796, %v1799
      %v1801 = vsel %vm764, %v1792, %v1800
      %v1803 = vshrl.u32 %v1761, 16
      %v1805 = vrot.slane %v1803, 1
      %v1806 = vshll.u32 %v1761, 16
      %v1808 = vrot.slane %v1806, 2
      %v1809 = vor.u32 %v1805, %v1808
      %v1810 = vsel %vm764, %v1800, %v1809
      %v1812 = vshrl.u32 %v1762, 16
      %v1814 = vrot.slane %v1812, 1
      %v1815 = vshll.u32 %v1762, 16
      %v1817 = vrot.slane %v1815, 2
      %v1818 = vor.u32 %v1814, %v1817
      %v1819 = vsel %vm764, %v1809, %v1818
      %v1821 = vshrl.u32 %v1763, 16
      %v1823 = vrot.slane %v1821, 1
      %v1824 = vshll.u32 %v1763, 16
      %v1826 = vrot.slane %v1824, 2
      %v1827 = vor.u32 %v1823, %v1826
      %v1828 = vsel %vm764, %v1818, %v1827
      %v1830 = vshrl.u32 %v1764, 16
      %v1832 = vrot.slane %v1830, 1
      %v1833 = vshll.u32 %v1764, 16
      %v1835 = vrot.slane %v1833, 2
      %v1836 = vor.u32 %v1832, %v1835
      %v1837 = vsel %vm764, %v1827, %v1836
      %v1839 = vshrl.u32 %v1765, 16
      %v1841 = vrot.slane %v1839, 1
      %v1842 = vshll.u32 %v1765, 16
      %v1844 = vrot.slane %v1842, 2
      %v1845 = vor.u32 %v1841, %v1844
      %v1846 = vsel %vm764, %v1836, %v1845
      %v1848 = vshrl.u32 %v1784, 16
      %v1850 = vrot.slane %v1848, 1
      %v1851 = vshll.u32 %v1784, 16
      %v1853 = vrot.slane %v1851, 2
      %v1854 = vor.u32 %v1850, %v1853
      %v1855 = vsel %vm764, %v1845, %v1854
      %1856 = vrot.lane.b32.xlu0 %v1801, 64
      %v1857 = vpop.permute.xlu0 %1856
      %1858 = vrot.lane.b32.xlu0 %v1810, 64
      %v1859 = vpop.permute.xlu0 %1858
      %1860 = vrot.lane.b32.xlu0 %v1819, 64
      %v1861 = vpop.permute.xlu0 %1860
      %1862 = vrot.lane.b32.xlu0 %v1828, 64
      %v1863 = vpop.permute.xlu0 %1862
      %1864 = vrot.lane.b32.xlu0 %v1837, 64
      %v1865 = vpop.permute.xlu0 %1864
      %1866 = vrot.lane.b32.xlu0 %v1846, 64
      %v1867 = vpop.permute.xlu0 %1866
      %1868 = vrot.lane.b32.xlu0 %v1855, 64
      %v1869 = vpop.permute.xlu0 %1868
      %1870 = vrot.lane.b32.xlu0 %v1854, 64
      %v1871 = vpop.permute.xlu0 %1870
      %v1873 = vsel %vm822, %v652, %v1738
      %v1876 = vsel %vm822, %v653, %v1740
      %v1879 = vsel %vm822, %v654, %v1742
      %v1882 = vsel %vm822, %v655, %v1744
      %v1885 = vsel %vm822, %v656, %v1746
      %v1888 = vsel %vm822, %v657, %v1748
      %v1892 = vsel %vm822, %v1632, %v1750
      %v1896 = vsel %vm822, %v1633, %v1752
      %v1900 = vsel %vm822, %v1769, %v1857
      %v1904 = vsel %vm822, %v1771, %v1859
      %v1908 = vsel %vm822, %v1773, %v1861
      %v1912 = vsel %vm822, %v1775, %v1863
      %v1916 = vsel %vm822, %v1777, %v1865
      %v1920 = vsel %vm822, %v1779, %v1867
      %v1924 = vsel %vm822, %v1781, %v1869
      %v1928 = vsel %vm822, %v1780, %v1871
      %v1930 = vld [vmem:[%s2 + $0x100] sm:$0xf]
      %v1931 = vld [vmem:[%s2 + $0x104] sm:$0xf]
      %v1932 = vld [vmem:[%s2 + $0x108] sm:$0xf]
      %v1933 = vld [vmem:[%s2 + $0x10c] sm:$0xf]
      %v1934 = vld [vmem:[%s2 + $0x110] sm:$0xf]
      %v1935 = vld [vmem:[%s2 + $0x114] sm:$0xf]
      %v1936 = vld [vmem:[%s2 + $0x118] sm:$0xf]
      %v1937 = vld [vmem:[%s2 + $0x11c] sm:$0xf]
      %v1938 = vld [vmem:[%s2 + $0x120] sm:$0xf]
      %v1939 = vld [vmem:[%s2 + $0x124] sm:$0xf]
      %v1940 = vld [vmem:[%s2 + $0x128] sm:$0xf]
      %v1941 = vld [vmem:[%s2 + $0x12c] sm:$0xf]
      %v1942 = vld [vmem:[%s2 + $0x130] sm:$0xf]
      %v1943 = vld [vmem:[%s2 + $0x134] sm:$0xf]
      %v1944 = vld [vmem:[%s2 + $0x138] sm:$0xf]
      %v1945 = vld [vmem:[%s2 + $0x13c] sm:$0xf]
      %v1946 = vld [vmem:[%s2 + $0x140] sm:$0xf]
      %v1947 = vld [vmem:[%s2 + $0x144] sm:$0xf]
      %v1948 = vld [vmem:[%s2 + $0x148] sm:$0xf]
      %v1949 = vld [vmem:[%s2 + $0x14c] sm:$0xf]
      %v1950 = vld [vmem:[%s2 + $0x150] sm:$0xf]
      %v1951 = vld [vmem:[%s2 + $0x154] sm:$0xf]
      %v1952 = vld [vmem:[%s2 + $0x158] sm:$0xf]
      %v1953 = vld [vmem:[%s2 + $0x15c] sm:$0xf]
      %v1954 = vld [vmem:[%s2 + $0x160] sm:$0xf]
      %v1955 = vld [vmem:[%s2 + $0x164] sm:$0xf]
      %v1956 = vld [vmem:[%s2 + $0x168] sm:$0xf]
      %v1957 = vld [vmem:[%s2 + $0x16c] sm:$0xf]
      %v1958 = vld [vmem:[%s2 + $0x170] sm:$0xf]
      %v1959 = vld [vmem:[%s2 + $0x174] sm:$0xf]
      %v1960 = vld [vmem:[%s2 + $0x178] sm:$0xf]
      %v1961 = vld [vmem:[%s2 + $0x17c] sm:$0xf]
      %v1994 = vunpack.c.l.b16 %v1930
      %v1995 = vunpack.c.l.b16 %v1931
      %v1996 = vunpack.c.l.b16 %v1932
      %v1997 = vunpack.c.l.b16 %v1933
      %v1998 = vunpack.c.l.b16 %v1934
      %v1999 = vunpack.c.l.b16 %v1935
      %v2000 = vunpack.c.l.b16 %v1936
      %v2001 = vunpack.c.l.b16 %v1937
      %v2002 = vunpack.c.l.b16 %v1938
      %v2003 = vunpack.c.l.b16 %v1939
      %v2004 = vunpack.c.l.b16 %v1940
      %v2005 = vunpack.c.l.b16 %v1941
      %v2006 = vunpack.c.l.b16 %v1942
      %v2007 = vunpack.c.l.b16 %v1943
      %v2008 = vunpack.c.l.b16 %v1944
      %v2009 = vunpack.c.l.b16 %v1945
      %v2010 = vunpack.c.l.b16 %v1946
      %v2011 = vunpack.c.l.b16 %v1947
      %v2012 = vunpack.c.l.b16 %v1948
      %v2013 = vunpack.c.l.b16 %v1949
      %v2014 = vunpack.c.l.b16 %v1950
      %v2015 = vunpack.c.l.b16 %v1951
      %v2016 = vunpack.c.l.b16 %v1952
      %v2017 = vunpack.c.l.b16 %v1953
      %v2018 = vunpack.c.l.b16 %v1954
      %v2019 = vunpack.c.l.b16 %v1955
      %v2020 = vunpack.c.l.b16 %v1956
      %v2021 = vunpack.c.l.b16 %v1957
      %v2022 = vunpack.c.l.b16 %v1958
      %v2023 = vunpack.c.l.b16 %v1959
      %v2024 = vunpack.c.l.b16 %v1960
      %v2025 = vunpack.c.l.b16 %v1961
      %v2026 = vpack.c.b16 %v1995, %v1994
      %v2027 = vpack.c.b16 %v1997, %v1996
      %v2028 = vpack.c.b16 %v1999, %v1998
      %v2029 = vpack.c.b16 %v2001, %v2000
      %v2030 = vpack.c.b16 %v2003, %v2002
      %v2031 = vpack.c.b16 %v2005, %v2004
      %v2032 = vpack.c.b16 %v2007, %v2006
      %v2033 = vpack.c.b16 %v2009, %v2008
      %v2034 = vpack.c.b16 %v2011, %v2010
      %v2035 = vpack.c.b16 %v2013, %v2012
      %v2036 = vpack.c.b16 %v2015, %v2014
      %v2037 = vpack.c.b16 %v2017, %v2016
      %v2038 = vpack.c.b16 %v2019, %v2018
      %v2039 = vpack.c.b16 %v2021, %v2020
      %v2040 = vpack.c.b16 %v2023, %v2022
      %v2041 = vpack.c.b16 %v2025, %v2024
      %2058 = vmatprep.subr.bf16.mxu0 0
      %2059 = vmatpush1.bf16.msra.mxu0 %v2026
      %2060 = vmatprep.subr.bf16.mxu0 0
      %2061 = vmatpush1.bf16.msra.mxu0 %v2027
      %2062 = vmatprep.subr.bf16.mxu0 0
      %2063 = vmatpush1.bf16.msra.mxu0 %v2028
      %2064 = vmatprep.subr.bf16.mxu0 0
      %2065 = vmatpush1.bf16.msra.mxu0 %v2029
      %2066 = vmatprep.subr.bf16.mxu0 0
      %2067 = vmatpush1.bf16.msra.mxu0 %v2030
      %2068 = vmatprep.subr.bf16.mxu0 0
      %2069 = vmatpush1.bf16.msra.mxu0 %v2031
      %2070 = vmatprep.subr.bf16.mxu0 0
      %2071 = vmatpush1.bf16.msra.mxu0 %v2032
      %2072 = vmatprep.subr.bf16.mxu0 0
      %2073 = vmatpush1.bf16.msra.mxu0 %v2033
      %2074 = vmatprep.subr.bf16.mxu0 0
      %2075 = vmatpush1.bf16.msra.mxu0 %v2034
      %2076 = vmatprep.subr.bf16.mxu0 0
      %2077 = vmatpush1.bf16.msra.mxu0 %v2035
      %2078 = vmatprep.subr.bf16.mxu0 0
      %2079 = vmatpush1.bf16.msra.mxu0 %v2036
      %2080 = vmatprep.subr.bf16.mxu0 0
      %2081 = vmatpush1.bf16.msra.mxu0 %v2037
      %2082 = vmatprep.subr.bf16.mxu0 0
      %2083 = vmatpush1.bf16.msra.mxu0 %v2038
      %2084 = vmatprep.subr.bf16.mxu0 0
      %2085 = vmatpush1.bf16.msra.mxu0 %v2039
      %2086 = vmatprep.subr.bf16.mxu0 0
      %2087 = vmatpush1.bf16.msra.mxu0 %v2040
      %2088 = vmatprep.subr.bf16.mxu0 0
      %2089 = vmatpush1.bf16.msra.mxu0 %v2041
      %2090 = vmatprep.mubr.bf16.mxu0 %v1900
      %2091 = vmatmul.mubr.bf16.gmra.mrb[0].mxu0 %v1873
      %v2092 = vpop.f32.mrb[0].mxu0
      %v2093 = vadd.f32 0.0, %v2092
      %v2094 = vpop.f32.mrb[0].mxu0
      %v2095 = vpop.f32.mrb[0].mxu0
      %v2096 = vadd.f32 0.0, %v2095
      %v2097 = vpop.f32.mrb[0].mxu0
      %2098 = vmatprep.mubr.bf16.mxu0 %v1904
      %2099 = vmatmul.mubr.bf16.gmra.mrb[0].mxu0 %v1876
      %v2100 = vpop.f32.mrb[0].mxu0
      %v2101 = vadd.f32 0.0, %v2100
      %v2102 = vpop.f32.mrb[0].mxu0
      %v2103 = vpop.f32.mrb[0].mxu0
      %v2104 = vadd.f32 0.0, %v2103
      %v2105 = vpop.f32.mrb[0].mxu0
      %2106 = vmatprep.mubr.bf16.mxu0 %v1908
      %2107 = vmatmul.mubr.bf16.gmra.mrb[0].mxu0 %v1879
      %v2108 = vpop.f32.mrb[0].mxu0
      %v2109 = vadd.f32 0.0, %v2108
      %v2110 = vpop.f32.mrb[0].mxu0
      %v2111 = vpop.f32.mrb[0].mxu0
      %v2112 = vadd.f32 0.0, %v2111
      %v2113 = vpop.f32.mrb[0].mxu0
      %2114 = vmatprep.mubr.bf16.mxu0 %v1912
      %2115 = vmatmul.mubr.bf16.gmra.mrb[0].mxu0 %v1882
      %v2116 = vpop.f32.mrb[0].mxu0
      %v2117 = vadd.f32 0.0, %v2116
      %v2118 = vpop.f32.mrb[0].mxu0
      %v2119 = vpop.f32.mrb[0].mxu0
      %v2120 = vadd.f32 0.0, %v2119
      %v2121 = vpop.f32.mrb[0].mxu0
      %2122 = vmatprep.mubr.bf16.mxu0 %v1916
      %2123 = vmatmul.mubr.bf16.gmra.mrb[0].mxu0 %v1885
      %v2124 = vpop.f32.mrb[0].mxu0
      %v2125 = vadd.f32 0.0, %v2124
      %v2126 = vpop.f32.mrb[0].mxu0
      %v2127 = vpop.f32.mrb[0].mxu0
      %v2128 = vadd.f32 0.0, %v2127
      %v2129 = vpop.f32.mrb[0].mxu0
      %2130 = vmatprep.mubr.bf16.mxu0 %v1920
      %2131 = vmatmul.mubr.bf16.gmra.mrb[0].mxu0 %v1888
      %v2132 = vpop.f32.mrb[0].mxu0
      %v2133 = vadd.f32 0.0, %v2132
      %v2134 = vpop.f32.mrb[0].mxu0
      %v2135 = vpop.f32.mrb[0].mxu0
      %v2136 = vadd.f32 0.0, %v2135
      %v2137 = vpop.f32.mrb[0].mxu0
      %2138 = vmatprep.mubr.bf16.mxu0 %v1924
      %2139 = vmatmul.mubr.bf16.gmra.mrb[0].mxu0 %v1892
      %v2140 = vpop.f32.mrb[0].mxu0
      %v2141 = vadd.f32 0.0, %v2140
      %v2142 = vpop.f32.mrb[0].mxu0
      %v2143 = vpop.f32.mrb[0].mxu0
      %v2144 = vadd.f32 0.0, %v2143
      %v2145 = vpop.f32.mrb[0].mxu0
      %2146 = vmatprep.mubr.bf16.mxu0 %v1928
      %2147 = vmatmul.mubr.bf16.gmra.mrb[0].mxu0 %v1896
      %v2148 = vpop.f32.mrb[0].mxu0
      %v2149 = vadd.f32 0.0, %v2148
      %v2150 = vpop.f32.mrb[0].mxu0
      %v2151 = vpop.f32.mrb[0].mxu0
      %v2152 = vpop.f32.mrb[0].mxu0
      %2153 = vdwg.mxu0
      %v2154 = vadd.f32 %v1551, %v2093
      %v2155 = vadd.f32 %v1554, %v2096
      %v2156 = vadd.f32 %v1559, %v2101
      %v2157 = vadd.f32 %v1562, %v2104
      %v2158 = vadd.f32 %v1567, %v2109
      %v2159 = vadd.f32 %v1570, %v2112
      %v2160 = vadd.f32 %v1575, %v2117
      %v2161 = vadd.f32 %v1578, %v2120
      %v2162 = vadd.f32 %v1583, %v2125
      %v2163 = vadd.f32 %v1586, %v2128
      %v2164 = vadd.f32 %v1591, %v2133
      %v2165 = vadd.f32 %v1594, %v2136
      %v2166 = vadd.f32 %v1599, %v2141
      %v2167 = vadd.f32 %v1602, %v2144
      %v2168 = vadd.f32 %v1607, %v2149
      %v2169 = vld [vmem:[#allocation2 + $0xc] sm:$0xc]
      %v2170 = vld [vmem:[#allocation2 + $0x48] sm:$0x7]
      %v2171 = vld [vmem:[#allocation2 + $0xc] sm:$0x8]
      %v2172 = vld [vmem:[#allocation2 + $0x10] sm:$0x8]
      %v2173 = vld [vmem:[#allocation2 + $0x14] sm:$0xf]
      %v2174 = vld [vmem:[#allocation2 + $0x18] sm:$0xf]
      %v2175 = vld [vmem:[#allocation2 + $0x1c] sm:$0xf]
      %v2176 = vld [vmem:[#allocation2 + $0x20] sm:$0xf]
      %v2177 = vld [vmem:[#allocation2 + $0x24] sm:$0xf]
      %v2178 = vld [vmem:[#allocation2 + $0x28] sm:$0xf]
      %v2179 = vld [vmem:[#allocation2 + $0x2c] sm:$0xf]
      %v2180 = vld [vmem:[#allocation2 + $0x30] sm:$0xf]
      %v2181 = vld [vmem:[#allocation2 + $0x34] sm:$0xf]
      %v2182 = vld [vmem:[#allocation2 + $0x38] sm:$0xf]
      %v2183 = vld [vmem:[#allocation2 + $0x3c] sm:$0xf]
      %v2184 = vld [vmem:[#allocation2 + $0x40] sm:$0xf]
      %v2185 = vld [vmem:[#allocation2 + $0x44] sm:$0xf]
      %v2186 = vld [vmem:[#allocation2 + $0x48] sm:$0xf]
      %v2187 = vld [vmem:[#allocation2 + $0x4c] sm:$0xf]
      %v2189 = vunpack.c.l.b16 %v2169
      %v2190 = vpack.c.b16 %v1652, %v2189
      %v2192 = vunpack.c.l.b16 %v2170
      %v2193 = vpack.c.b16 %v2192, %v1757
      %v2195 = vshrl.u32 %v2190, 16
      %v2197 = vshll.u32 %v2190, 16
      %v2199 = vrot.slane %v2197, 1
      %v2200 = vor.u32 %v2195, %v2199
      %v2201 = vrot.slane %v1797, 1
      %v2202 = vsel %vm662, %v2200, %v2201
      %v2203 = vor.u32 %v1794, %v2201
      %v2204 = vrot.slane %v1806, 1
      %v2205 = vsel %vm662, %v2203, %v2204
      %v2206 = vor.u32 %v1803, %v2204
      %v2207 = vrot.slane %v1815, 1
      %v2208 = vsel %vm662, %v2206, %v2207
      %v2209 = vor.u32 %v1812, %v2207
      %v2210 = vrot.slane %v1824, 1
      %v2211 = vsel %vm662, %v2209, %v2210
      %v2212 = vor.u32 %v1821, %v2210
      %v2213 = vrot.slane %v1833, 1
      %v2214 = vsel %vm662, %v2212, %v2213
      %v2215 = vor.u32 %v1830, %v2213
      %v2216 = vrot.slane %v1842, 1
      %v2217 = vsel %vm662, %v2215, %v2216
      %v2218 = vor.u32 %v1839, %v2216
      %v2220 = vshll.u32 %v2193, 16
      %v2222 = vrot.slane %v2220, 1
      %v2223 = vsel %vm662, %v2218, %v2222
      %v2224 = vshrl.u32 %v2193, 16
      %v2226 = vor.u32 %v2224, %v2222
      %2227 = vrot.lane.b32.xlu0 %v2202, 64
      %v2228 = vpop.permute.xlu0 %2227
      %2229 = vrot.lane.b32.xlu0 %v2205, 64
      %v2230 = vpop.permute.xlu0 %2229
      %2231 = vrot.lane.b32.xlu0 %v2208, 64
      %v2232 = vpop.permute.xlu0 %2231
      %2233 = vrot.lane.b32.xlu0 %v2211, 64
      %v2234 = vpop.permute.xlu0 %2233
      %2235 = vrot.lane.b32.xlu0 %v2214, 64
      %v2236 = vpop.permute.xlu0 %2235
      %2237 = vrot.lane.b32.xlu0 %v2217, 64
      %v2238 = vpop.permute.xlu0 %2237
      %2239 = vrot.lane.b32.xlu0 %v2223, 64
      %v2240 = vpop.permute.xlu0 %2239
      %2241 = vrot.lane.b32.xlu0 %v2226, 64
      %v2242 = vpop.permute.xlu0 %2241
      %v2244 = vunpack.c.l.b16 %v2171
      %v2245 = vpack.c.b16 %v1652, %v2244
      %v2246 = vrot.slane %v2245, 1
      %v2247 = vsel %vm745, %v2246, %v1768
      %v2248 = vrot.slane %v2193, 1
      %v2249 = vsel %vm745, %v1778, %v2248
      %v2266 = vunpack.c.l.b16 %v2172
      %v2267 = vunpack.c.l.b16 %v2173
      %v2268 = vunpack.c.l.b16 %v2174
      %v2269 = vunpack.c.l.b16 %v2175
      %v2270 = vunpack.c.l.b16 %v2176
      %v2271 = vunpack.c.l.b16 %v2177
      %v2272 = vunpack.c.l.b16 %v2178
      %v2273 = vunpack.c.l.b16 %v2179
      %v2274 = vunpack.c.l.b16 %v2180
      %v2275 = vunpack.c.l.b16 %v2181
      %v2276 = vunpack.c.l.b16 %v2182
      %v2277 = vunpack.c.l.b16 %v2183
      %v2278 = vunpack.c.l.b16 %v2184
      %v2279 = vunpack.c.l.b16 %v2185
      %v2280 = vunpack.c.l.b16 %v2186
      %v2281 = vunpack.c.l.b16 %v2187
      %v2282 = vpack.c.b16 %v2267, %v2266
      %v2283 = vpack.c.b16 %v2269, %v2268
      %v2284 = vpack.c.b16 %v2271, %v2270
      %v2285 = vpack.c.b16 %v2273, %v2272
      %v2286 = vpack.c.b16 %v2275, %v2274
      %v2287 = vpack.c.b16 %v2277, %v2276
      %v2288 = vpack.c.b16 %v2279, %v2278
      %v2289 = vpack.c.b16 %v2281, %v2280
      %v2291 = vshrl.u32 %v2282, 16
      %v2293 = vrot.slane %v2291, 1
      %v2294 = vshll.u32 %v2282, 16
      %v2296 = vrot.slane %v2294, 2
      %v2297 = vor.u32 %v2293, %v2296
      %v2299 = vshrl.u32 %v2283, 16
      %v2301 = vrot.slane %v2299, 1
      %v2302 = vshll.u32 %v2283, 16
      %v2304 = vrot.slane %v2302, 2
      %v2305 = vor.u32 %v2301, %v2304
      %v2306 = vsel %vm764, %v2297, %v2305
      %v2308 = vshrl.u32 %v2284, 16
      %v2310 = vrot.slane %v2308, 1
      %v2311 = vshll.u32 %v2284, 16
      %v2313 = vrot.slane %v2311, 2
      %v2314 = vor.u32 %v2310, %v2313
      %v2315 = vsel %vm764, %v2305, %v2314
      %v2317 = vshrl.u32 %v2285, 16
      %v2319 = vrot.slane %v2317, 1
      %v2320 = vshll.u32 %v2285, 16
      %v2322 = vrot.slane %v2320, 2
      %v2323 = vor.u32 %v2319, %v2322
      %v2324 = vsel %vm764, %v2314, %v2323
      %v2326 = vshrl.u32 %v2286, 16
      %v2328 = vrot.slane %v2326, 1
      %v2329 = vshll.u32 %v2286, 16
      %v2331 = vrot.slane %v2329, 2
      %v2332 = vor.u32 %v2328, %v2331
      %v2333 = vsel %vm764, %v2323, %v2332
      %v2335 = vshrl.u32 %v2287, 16
      %v2337 = vrot.slane %v2335, 1
      %v2338 = vshll.u32 %v2287, 16
      %v2340 = vrot.slane %v2338, 2
      %v2341 = vor.u32 %v2337, %v2340
      %v2342 = vsel %vm764, %v2332, %v2341
      %v2344 = vshrl.u32 %v2288, 16
      %v2346 = vrot.slane %v2344, 1
      %v2347 = vshll.u32 %v2288, 16
      %v2349 = vrot.slane %v2347, 2
      %v2350 = vor.u32 %v2346, %v2349
      %v2351 = vsel %vm764, %v2341, %v2350
      %v2353 = vshrl.u32 %v2289, 16
      %v2355 = vrot.slane %v2353, 1
      %v2356 = vshll.u32 %v2289, 16
      %v2358 = vrot.slane %v2356, 2
      %v2359 = vor.u32 %v2355, %v2358
      %v2360 = vsel %vm764, %v2350, %v2359
      %2361 = vrot.lane.b32.xlu0 %v2306, 64
      %v2362 = vpop.permute.xlu0 %2361
      %2363 = vrot.lane.b32.xlu0 %v2315, 64
      %v2364 = vpop.permute.xlu0 %2363
      %2365 = vrot.lane.b32.xlu0 %v2324, 64
      %v2366 = vpop.permute.xlu0 %2365
      %2367 = vrot.lane.b32.xlu0 %v2333, 64
      %v2368 = vpop.permute.xlu0 %2367
      %2369 = vrot.lane.b32.xlu0 %v2342, 64
      %v2370 = vpop.permute.xlu0 %2369
      %2371 = vrot.lane.b32.xlu0 %v2351, 64
      %v2372 = vpop.permute.xlu0 %2371
      %2373 = vrot.lane.b32.xlu0 %v2360, 64
      %v2374 = vpop.permute.xlu0 %2373
      %2375 = vrot.lane.b32.xlu0 %v2359, 64
      %v2376 = vpop.permute.xlu0 %2375
      %v2378 = vsel %vm822, %v2190, %v2228
      %v2380 = vsel %vm822, %v1760, %v2230
      %v2382 = vsel %vm822, %v1761, %v2232
      %v2384 = vsel %vm822, %v1762, %v2234
      %v2386 = vsel %vm822, %v1763, %v2236
      %v2388 = vsel %vm822, %v1764, %v2238
      %v2390 = vsel %vm822, %v1765, %v2240
      %v2392 = vsel %vm822, %v1784, %v2242
      %v2395 = vsel %vm822, %v2247, %v2362
      %v2397 = vsel %vm822, %v1771, %v2364
      %v2399 = vsel %vm822, %v1773, %v2366
      %v2401 = vsel %vm822, %v1775, %v2368
      %v2403 = vsel %vm822, %v1777, %v2370
      %v2405 = vsel %vm822, %v1779, %v2372
      %v2408 = vsel %vm822, %v2249, %v2374
      %v2411 = vsel %vm822, %v2248, %v2376
      %v2412 = vld [vmem:[%s2 + $0x180] sm:$0xf]
      %v2413 = vld [vmem:[%s2 + $0x184] sm:$0xf]
      %v2414 = vld [vmem:[%s2 + $0x188] sm:$0xf]
      %v2415 = vld [vmem:[%s2 + $0x18c] sm:$0xf]
      %v2416 = vld [vmem:[%s2 + $0x190] sm:$0xf]
      %v2417 = vld [vmem:[%s2 + $0x194] sm:$0xf]
      %v2418 = vld [vmem:[%s2 + $0x198] sm:$0xf]
      %v2419 = vld [vmem:[%s2 + $0x19c] sm:$0xf]
      %v2420 = vld [vmem:[%s2 + $0x1a0] sm:$0xf]
      %v2421 = vld [vmem:[%s2 + $0x1a4] sm:$0xf]
      %v2422 = vld [vmem:[%s2 + $0x1a8] sm:$0xf]
      %v2423 = vld [vmem:[%s2 + $0x1ac] sm:$0xf]
      %v2424 = vld [vmem:[%s2 + $0x1b0] sm:$0xf]
      %v2425 = vld [vmem:[%s2 + $0x1b4] sm:$0xf]
      %v2426 = vld [vmem:[%s2 + $0x1b8] sm:$0xf]
      %v2427 = vld [vmem:[%s2 + $0x1bc] sm:$0xf]
      %v2428 = vld [vmem:[%s2 + $0x1c0] sm:$0xf]
      %v2429 = vld [vmem:[%s2 + $0x1c4] sm:$0xf]
      %v2430 = vld [vmem:[%s2 + $0x1c8] sm:$0xf]
      %v2431 = vld [vmem:[%s2 + $0x1cc] sm:$0xf]
      %v2432 = vld [vmem:[%s2 + $0x1d0] sm:$0xf]
      %v2433 = vld [vmem:[%s2 + $0x1d4] sm:$0xf]
      %v2434 = vld [vmem:[%s2 + $0x1d8] sm:$0xf]
      %v2435 = vld [vmem:[%s2 + $0x1dc] sm:$0xf]
      %v2436 = vld [vmem:[%s2 + $0x1e0] sm:$0xf]
      %v2437 = vld [vmem:[%s2 + $0x1e4] sm:$0xf]
      %v2438 = vld [vmem:[%s2 + $0x1e8] sm:$0xf]
      %v2439 = vld [vmem:[%s2 + $0x1ec] sm:$0xf]
      %v2440 = vld [vmem:[%s2 + $0x1f0] sm:$0xf]
      %v2441 = vld [vmem:[%s2 + $0x1f4] sm:$0xf]
      %v2442 = vld [vmem:[%s2 + $0x1f8] sm:$0xf]
      %v2443 = vld [vmem:[%s2 + $0x1fc] sm:$0xf]
      %v2460 = vrot.slane %v2378, 2
      %v2461 = vrot.slane %v2380, 2
      %v2462 = vsel %vm1181, %v2460, %v2461
      %v2463 = vrot.slane %v2395, 2
      %v2464 = vrot.slane %v2397, 2
      %v2465 = vsel %vm1181, %v2463, %v2464
      %v2466 = vrot.slane %v2382, 2
      %v2467 = vsel %vm1181, %v2461, %v2466
      %v2468 = vrot.slane %v2399, 2
      %v2469 = vsel %vm1181, %v2464, %v2468
      %v2470 = vrot.slane %v2384, 2
      %v2471 = vsel %vm1181, %v2466, %v2470
      %v2472 = vrot.slane %v2401, 2
      %v2473 = vsel %vm1181, %v2468, %v2472
      %v2474 = vrot.slane %v2386, 2
      %v2475 = vsel %vm1181, %v2470, %v2474
      %v2476 = vrot.slane %v2403, 2
      %v2477 = vsel %vm1181, %v2472, %v2476
      %v2478 = vrot.slane %v2388, 2
      %v2479 = vsel %vm1181, %v2474, %v2478
      %v2480 = vrot.slane %v2405, 2
      %v2481 = vsel %vm1181, %v2476, %v2480
      %v2482 = vrot.slane %v2390, 2
      %v2483 = vsel %vm1181, %v2478, %v2482
      %v2484 = vrot.slane %v2408, 2
      %v2485 = vsel %vm1181, %v2480, %v2484
      %v2486 = vrot.slane %v2392, 2
      %v2487 = vsel %vm1181, %v2482, %v2486
      %v2488 = vrot.slane %v2411, 2
      %v2489 = vsel %vm1181, %v2484, %v2488
      %v2538 = vunpack.c.l.b16 %v2412
      %v2539 = vunpack.c.l.b16 %v2413
      %v2540 = vunpack.c.l.b16 %v2414
      %v2541 = vunpack.c.l.b16 %v2415
      %v2542 = vunpack.c.l.b16 %v2416
      %v2543 = vunpack.c.l.b16 %v2417
      %v2544 = vunpack.c.l.b16 %v2418
      %v2545 = vunpack.c.l.b16 %v2419
      %v2546 = vunpack.c.l.b16 %v2420
      %v2547 = vunpack.c.l.b16 %v2421
      %v2548 = vunpack.c.l.b16 %v2422
      %v2549 = vunpack.c.l.b16 %v2423
      %v2550 = vunpack.c.l.b16 %v2424
      %v2551 = vunpack.c.l.b16 %v2425
      %v2552 = vunpack.c.l.b16 %v2426
      %v2553 = vunpack.c.l.b16 %v2427
      %v2554 = vunpack.c.l.b16 %v2428
      %v2555 = vunpack.c.l.b16 %v2429
      %v2556 = vunpack.c.l.b16 %v2430
      %v2557 = vunpack.c.l.b16 %v2431
      %v2558 = vunpack.c.l.b16 %v2432
      %v2559 = vunpack.c.l.b16 %v2433
      %v2560 = vunpack.c.l.b16 %v2434
      %v2561 = vunpack.c.l.b16 %v2435
      %v2562 = vunpack.c.l.b16 %v2436
      %v2563 = vunpack.c.l.b16 %v2437
      %v2564 = vunpack.c.l.b16 %v2438
      %v2565 = vunpack.c.l.b16 %v2439
      %v2566 = vunpack.c.l.b16 %v2440
      %v2567 = vunpack.c.l.b16 %v2441
      %v2568 = vunpack.c.l.b16 %v2442
      %v2569 = vunpack.c.l.b16 %v2443
      %v2570 = vpack.c.b16 %v2539, %v2538
      %v2571 = vpack.c.b16 %v2541, %v2540
      %v2572 = vpack.c.b16 %v2543, %v2542
      %v2573 = vpack.c.b16 %v2545, %v2544
      %v2574 = vpack.c.b16 %v2547, %v2546
      %v2575 = vpack.c.b16 %v2549, %v2548
      %v2576 = vpack.c.b16 %v2551, %v2550
      %v2577 = vpack.c.b16 %v2553, %v2552
      %v2578 = vpack.c.b16 %v2555, %v2554
      %v2579 = vpack.c.b16 %v2557, %v2556
      %v2580 = vpack.c.b16 %v2559, %v2558
      %v2581 = vpack.c.b16 %v2561, %v2560
      %v2582 = vpack.c.b16 %v2563, %v2562
      %v2583 = vpack.c.b16 %v2565, %v2564
      %v2584 = vpack.c.b16 %v2567, %v2566
      %v2585 = vpack.c.b16 %v2569, %v2568
      %2602 = vmatprep.subr.bf16.mxu0 0
      %2603 = vmatpush1.bf16.msra.mxu0 %v2570
      %2604 = vmatprep.subr.bf16.mxu0 0
      %2605 = vmatpush1.bf16.msra.mxu0 %v2571
      %2606 = vmatprep.subr.bf16.mxu0 0
      %2607 = vmatpush1.bf16.msra.mxu0 %v2572
      %2608 = vmatprep.subr.bf16.mxu0 0
      %2609 = vmatpush1.bf16.msra.mxu0 %v2573
      %2610 = vmatprep.subr.bf16.mxu0 0
      %2611 = vmatpush1.bf16.msra.mxu0 %v2574
      %2612 = vmatprep.subr.bf16.mxu0 0
      %2613 = vmatpush1.bf16.msra.mxu0 %v2575
      %2614 = vmatprep.subr.bf16.mxu0 0
      %2615 = vmatpush1.bf16.msra.mxu0 %v2576
      %2616 = vmatprep.subr.bf16.mxu0 0
      %2617 = vmatpush1.bf16.msra.mxu0 %v2577
      %2618 = vmatprep.subr.bf16.mxu0 0
      %2619 = vmatpush1.bf16.msra.mxu0 %v2578
      %2620 = vmatprep.subr.bf16.mxu0 0
      %2621 = vmatpush1.bf16.msra.mxu0 %v2579
      %2622 = vmatprep.subr.bf16.mxu0 0
      %2623 = vmatpush1.bf16.msra.mxu0 %v2580
      %2624 = vmatprep.subr.bf16.mxu0 0
      %2625 = vmatpush1.bf16.msra.mxu0 %v2581
      %2626 = vmatprep.subr.bf16.mxu0 0
      %2627 = vmatpush1.bf16.msra.mxu0 %v2582
      %2628 = vmatprep.subr.bf16.mxu0 0
      %2629 = vmatpush1.bf16.msra.mxu0 %v2583
      %2630 = vmatprep.subr.bf16.mxu0 0
      %2631 = vmatpush1.bf16.msra.mxu0 %v2584
      %2632 = vmatprep.subr.bf16.mxu0 0
      %2633 = vmatpush1.bf16.msra.mxu0 %v2585
      %2634 = vmatprep.mubr.bf16.mxu0 %v2465
      %2635 = vmatmul.mubr.bf16.gmra.mrb[0].mxu0 %v2462
      %v2636 = vpop.f32.mrb[0].mxu0
      %v2637 = vadd.f32 0.0, %v2636
      %v2638 = vpop.f32.mrb[0].mxu0
      %v2639 = vpop.f32.mrb[0].mxu0
      %v2640 = vadd.f32 0.0, %v2639
      %v2641 = vpop.f32.mrb[0].mxu0
      %2642 = vmatprep.mubr.bf16.mxu0 %v2469
      %2643 = vmatmul.mubr.bf16.gmra.mrb[0].mxu0 %v2467
      %v2644 = vpop.f32.mrb[0].mxu0
      %v2645 = vadd.f32 0.0, %v2644
      %v2646 = vpop.f32.mrb[0].mxu0
      %v2647 = vpop.f32.mrb[0].mxu0
      %v2648 = vadd.f32 0.0, %v2647
      %v2649 = vpop.f32.mrb[0].mxu0
      %2650 = vmatprep.mubr.bf16.mxu0 %v2473
      %2651 = vmatmul.mubr.bf16.gmra.mrb[0].mxu0 %v2471
      %v2652 = vpop.f32.mrb[0].mxu0
      %v2653 = vadd.f32 0.0, %v2652
      %v2654 = vpop.f32.mrb[0].mxu0
      %v2655 = vpop.f32.mrb[0].mxu0
      %v2656 = vadd.f32 0.0, %v2655
      %v2657 = vpop.f32.mrb[0].mxu0
      %2658 = vmatprep.mubr.bf16.mxu0 %v2477
      %2659 = vmatmul.mubr.bf16.gmra.mrb[0].mxu0 %v2475
      %v2660 = vpop.f32.mrb[0].mxu0
      %v2661 = vadd.f32 0.0, %v2660
      %v2662 = vpop.f32.mrb[0].mxu0
      %v2663 = vpop.f32.mrb[0].mxu0
      %v2664 = vadd.f32 0.0, %v2663
      %v2665 = vpop.f32.mrb[0].mxu0
      %2666 = vmatprep.mubr.bf16.mxu0 %v2481
      %2667 = vmatmul.mubr.bf16.gmra.mrb[0].mxu0 %v2479
      %v2668 = vpop.f32.mrb[0].mxu0
      %v2669 = vadd.f32 0.0, %v2668
      %v2670 = vpop.f32.mrb[0].mxu0
      %v2671 = vpop.f32.mrb[0].mxu0
      %v2672 = vadd.f32 0.0, %v2671
      %v2673 = vpop.f32.mrb[0].mxu0
      %2674 = vmatprep.mubr.bf16.mxu0 %v2485
      %2675 = vmatmul.mubr.bf16.gmra.mrb[0].mxu0 %v2483
      %v2676 = vpop.f32.mrb[0].mxu0
      %v2677 = vadd.f32 0.0, %v2676
      %v2678 = vpop.f32.mrb[0].mxu0
      %v2679 = vpop.f32.mrb[0].mxu0
      %v2680 = vadd.f32 0.0, %v2679
      %v2681 = vpop.f32.mrb[0].mxu0
      %2682 = vmatprep.mubr.bf16.mxu0 %v2489
      %2683 = vmatmul.mubr.bf16.gmra.mrb[0].mxu0 %v2487
      %v2684 = vpop.f32.mrb[0].mxu0
      %v2685 = vadd.f32 0.0, %v2684
      %v2686 = vpop.f32.mrb[0].mxu0
      %v2687 = vpop.f32.mrb[0].mxu0
      %v2688 = vadd.f32 0.0, %v2687
      %v2689 = vpop.f32.mrb[0].mxu0
      %2690 = vmatprep.mubr.bf16.mxu0 %v2488
      %2691 = vmatmul.mubr.bf16.gmra.mrb[0].mxu0 %v2486
      %v2692 = vpop.f32.mrb[0].mxu0
      %v2693 = vadd.f32 0.0, %v2692
      %v2694 = vpop.f32.mrb[0].mxu0
      %v2695 = vpop.f32.mrb[0].mxu0
      %v2696 = vpop.f32.mrb[0].mxu0
      %2697 = vdwg.mxu0
      %v2698 = vadd.f32 %v2154, %v2637
      %v2699 = vadd.f32 %v2155, %v2640
      %v2700 = vadd.f32 %v2156, %v2645
      %v2701 = vadd.f32 %v2157, %v2648
      %v2702 = vadd.f32 %v2158, %v2653
      %v2703 = vadd.f32 %v2159, %v2656
      %v2704 = vadd.f32 %v2160, %v2661
      %v2705 = vadd.f32 %v2161, %v2664
      %v2706 = vadd.f32 %v2162, %v2669
      %v2707 = vadd.f32 %v2163, %v2672
      %v2708 = vadd.f32 %v2164, %v2677
      %v2709 = vadd.f32 %v2165, %v2680
      %v2710 = vadd.f32 %v2166, %v2685
      %v2711 = vadd.f32 %v2167, %v2688
      %v2712 = vadd.f32 %v2168, %v2693
      %v2713 = vld [vmem:[#allocation2 + $0x14] sm:$0xf]
      %v2714 = vld [vmem:[#allocation2 + $0x18] sm:$0xf]
      %v2715 = vld [vmem:[#allocation2 + $0x1c] sm:$0xf]
      %v2716 = vld [vmem:[#allocation2 + $0x20] sm:$0xf]
      %v2717 = vld [vmem:[#allocation2 + $0x24] sm:$0xf]
      %v2718 = vld [vmem:[#allocation2 + $0x28] sm:$0xf]
      %v2719 = vld [vmem:[#allocation2 + $0x2c] sm:$0xf]
      %v2720 = vld [vmem:[#allocation2 + $0x30] sm:$0xf]
      %v2721 = vld [vmem:[#allocation2 + $0x34] sm:$0xf]
      %v2722 = vld [vmem:[#allocation2 + $0x38] sm:$0xf]
      %v2723 = vld [vmem:[#allocation2 + $0x3c] sm:$0xf]
      %v2724 = vld [vmem:[#allocation2 + $0x40] sm:$0xf]
      %v2725 = vld [vmem:[#allocation2 + $0x44] sm:$0xf]
      %v2726 = vld [vmem:[#allocation2 + $0x48] sm:$0xf]
      %v2727 = vld [vmem:[#allocation2 + $0x4c] sm:$0xf]
      %v2728 = vld [vmem:[#allocation2 + $0x50] sm:$0x1]
      %v2729 = vld [vmem:[#allocation2 + $0x14] sm:$0xe]
      %v2730 = vld [vmem:[#allocation2 + $0x50] sm:$0x3]
      %v2731 = vpack.c.b16 %v2268, %v2267
      %v2732 = vpack.c.b16 %v2270, %v2269
      %v2733 = vpack.c.b16 %v2272, %v2271
      %v2734 = vpack.c.b16 %v2274, %v2273
      %v2735 = vpack.c.b16 %v2276, %v2275
      %v2736 = vpack.c.b16 %v2278, %v2277
      %v2737 = vpack.c.b16 %v2280, %v2279
      %v2738 = vpack.c.b16 %v2281, %v2281
      %v2755 = vunpack.c.l.b16 %v2713
      %v2756 = vunpack.c.l.b16 %v2714
      %v2757 = vunpack.c.l.b16 %v2715
      %v2758 = vunpack.c.l.b16 %v2716
      %v2759 = vunpack.c.l.b16 %v2717
      %v2760 = vunpack.c.l.b16 %v2718
      %v2761 = vunpack.c.l.b16 %v2719
      %v2762 = vunpack.c.l.b16 %v2720
      %v2763 = vunpack.c.l.b16 %v2721
      %v2764 = vunpack.c.l.b16 %v2722
      %v2765 = vunpack.c.l.b16 %v2723
      %v2766 = vunpack.c.l.b16 %v2724
      %v2767 = vunpack.c.l.b16 %v2725
      %v2768 = vunpack.c.l.b16 %v2726
      %v2769 = vunpack.c.l.b16 %v2727
      %v2770 = vunpack.c.l.b16 %v2728
      %v2771 = vpack.c.b16 %v2756, %v2755
      %v2772 = vpack.c.b16 %v2758, %v2757
      %v2773 = vpack.c.b16 %v2760, %v2759
      %v2774 = vpack.c.b16 %v2762, %v2761
      %v2775 = vpack.c.b16 %v2764, %v2763
      %v2776 = vpack.c.b16 %v2766, %v2765
      %v2777 = vpack.c.b16 %v2768, %v2767
      %v2778 = vpack.c.b16 %v2770, %v2769
      %v2780 = vshrl.u32 %v2771, 16
      %v2782 = vshll.u32 %v2771, 16
      %v2784 = vrot.slane %v2782, 1
      %v2785 = vor.u32 %v2780, %v2784
      %v2787 = vshll.u32 %v2772, 16
      %v2789 = vrot.slane %v2787, 1
      %v2790 = vsel %vm662, %v2785, %v2789
      %v2791 = vshrl.u32 %v2772, 16
      %v2793 = vor.u32 %v2791, %v2789
      %v2795 = vshll.u32 %v2773, 16
      %v2797 = vrot.slane %v2795, 1
      %v2798 = vsel %vm662, %v2793, %v2797
      %v2799 = vshrl.u32 %v2773, 16
      %v2801 = vor.u32 %v2799, %v2797
      %v2803 = vshll.u32 %v2774, 16
      %v2805 = vrot.slane %v2803, 1
      %v2806 = vsel %vm662, %v2801, %v2805
      %v2807 = vshrl.u32 %v2774, 16
      %v2809 = vor.u32 %v2807, %v2805
      %v2811 = vshll.u32 %v2775, 16
      %v2813 = vrot.slane %v2811, 1
      %v2814 = vsel %vm662, %v2809, %v2813
      %v2815 = vshrl.u32 %v2775, 16
      %v2817 = vor.u32 %v2815, %v2813
      %v2819 = vshll.u32 %v2776, 16
      %v2821 = vrot.slane %v2819, 1
      %v2822 = vsel %vm662, %v2817, %v2821
      %v2823 = vshrl.u32 %v2776, 16
      %v2825 = vor.u32 %v2823, %v2821
      %v2827 = vshll.u32 %v2777, 16
      %v2829 = vrot.slane %v2827, 1
      %v2830 = vsel %vm662, %v2825, %v2829
      %v2831 = vshrl.u32 %v2777, 16
      %v2833 = vor.u32 %v2831, %v2829
      %v2835 = vshll.u32 %v2778, 16
      %v2837 = vrot.slane %v2835, 1
      %v2838 = vsel %vm662, %v2833, %v2837
      %v2839 = vshrl.u32 %v2778, 16
      %v2841 = vor.u32 %v2839, %v2837
      %2842 = vrot.lane.b32.xlu0 %v2790, 64
      %v2843 = vpop.permute.xlu0 %2842
      %2844 = vrot.lane.b32.xlu0 %v2798, 64
      %v2845 = vpop.permute.xlu0 %2844
      %2846 = vrot.lane.b32.xlu0 %v2806, 64
      %v2847 = vpop.permute.xlu0 %2846
      %2848 = vrot.lane.b32.xlu0 %v2814, 64
      %v2849 = vpop.permute.xlu0 %2848
      %2850 = vrot.lane.b32.xlu0 %v2822, 64
      %v2851 = vpop.permute.xlu0 %2850
      %2852 = vrot.lane.b32.xlu0 %v2830, 64
      %v2853 = vpop.permute.xlu0 %2852
      %2854 = vrot.lane.b32.xlu0 %v2838, 64
      %v2855 = vpop.permute.xlu0 %2854
      %2856 = vrot.lane.b32.xlu0 %v2841, 64
      %v2857 = vpop.permute.xlu0 %2856
      %v2859 = vunpack.c.l.b16 %v2729
      %v2860 = vpack.c.b16 %v2756, %v2859
      %v2861 = vrot.slane %v2860, 1
      %v2862 = vrot.slane %v2772, 1
      %v2863 = vsel %vm745, %v2861, %v2862
      %v2864 = vrot.slane %v2773, 1
      %v2865 = vsel %vm745, %v2862, %v2864
      %v2866 = vrot.slane %v2774, 1
      %v2867 = vsel %vm745, %v2864, %v2866
      %v2868 = vrot.slane %v2775, 1
      %v2869 = vsel %vm745, %v2866, %v2868
      %v2870 = vrot.slane %v2776, 1
      %v2871 = vsel %vm745, %v2868, %v2870
      %v2872 = vrot.slane %v2777, 1
      %v2873 = vsel %vm745, %v2870, %v2872
      %v2874 = vrot.slane %v2778, 1
      %v2875 = vsel %vm745, %v2872, %v2874
      %v2877 = vunpack.c.l.b16 %v2730
      %v2878 = vpack.c.b16 %v2877, %v2769
      %v2880 = vshrl.u32 %v2860, 16
      %v2882 = vrot.slane %v2880, 1
      %v2883 = vshll.u32 %v2860, 16
      %v2885 = vrot.slane %v2883, 2
      %v2886 = vor.u32 %v2882, %v2885
      %v2887 = vrot.slane %v2791, 1
      %v2888 = vrot.slane %v2787, 2
      %v2889 = vor.u32 %v2887, %v2888
      %v2890 = vsel %vm764, %v2886, %v2889
      %v2891 = vrot.slane %v2799, 1
      %v2892 = vrot.slane %v2795, 2
      %v2893 = vor.u32 %v2891, %v2892
      %v2894 = vsel %vm764, %v2889, %v2893
      %v2895 = vrot.slane %v2807, 1
      %v2896 = vrot.slane %v2803, 2
      %v2897 = vor.u32 %v2895, %v2896
      %v2898 = vsel %vm764, %v2893, %v2897
      %v2899 = vrot.slane %v2815, 1
      %v2900 = vrot.slane %v2811, 2
      %v2901 = vor.u32 %v2899, %v2900
      %v2902 = vsel %vm764, %v2897, %v2901
      %v2903 = vrot.slane %v2823, 1
      %v2904 = vrot.slane %v2819, 2
      %v2905 = vor.u32 %v2903, %v2904
      %v2906 = vsel %vm764, %v2901, %v2905
      %v2907 = vrot.slane %v2831, 1
      %v2908 = vrot.slane %v2827, 2
      %v2909 = vor.u32 %v2907, %v2908
      %v2910 = vsel %vm764, %v2905, %v2909
      %v2912 = vshrl.u32 %v2878, 16
      %v2914 = vrot.slane %v2912, 1
      %v2915 = vshll.u32 %v2878, 16
      %v2917 = vrot.slane %v2915, 2
      %v2918 = vor.u32 %v2914, %v2917
      %v2919 = vsel %vm764, %v2909, %v2918
      %2920 = vrot.lane.b32.xlu0 %v2890, 64
      %v2921 = vpop.permute.xlu0 %2920
      %2922 = vrot.lane.b32.xlu0 %v2894, 64
      %v2923 = vpop.permute.xlu0 %2922
      %2924 = vrot.lane.b32.xlu0 %v2898, 64
      %v2925 = vpop.permute.xlu0 %2924
      %2926 = vrot.lane.b32.xlu0 %v2902, 64
      %v2927 = vpop.permute.xlu0 %2926
      %2928 = vrot.lane.b32.xlu0 %v2906, 64
      %v2929 = vpop.permute.xlu0 %2928
      %2930 = vrot.lane.b32.xlu0 %v2910, 64
      %v2931 = vpop.permute.xlu0 %2930
      %2932 = vrot.lane.b32.xlu0 %v2919, 64
      %v2933 = vpop.permute.xlu0 %2932
      %2934 = vrot.lane.b32.xlu0 %v2918, 64
      %v2935 = vpop.permute.xlu0 %2934
      %v2938 = vsel %vm822, %v2731, %v2843
      %v2942 = vsel %vm822, %v2732, %v2845
      %v2946 = vsel %vm822, %v2733, %v2847
      %v2950 = vsel %vm822, %v2734, %v2849
      %v2954 = vsel %vm822, %v2735, %v2851
      %v2958 = vsel %vm822, %v2736, %v2853
      %v2962 = vsel %vm822, %v2737, %v2855
      %v2966 = vsel %vm822, %v2738, %v2857
      %v2970 = vsel %vm822, %v2863, %v2921
      %v2974 = vsel %vm822, %v2865, %v2923
      %v2978 = vsel %vm822, %v2867, %v2925
      %v2982 = vsel %vm822, %v2869, %v2927
      %v2986 = vsel %vm822, %v2871, %v2929
      %v2990 = vsel %vm822, %v2873, %v2931
      %v2994 = vsel %vm822, %v2875, %v2933
      %v2998 = vsel %vm822, %v2874, %v2935
      %v3000 = vld [vmem:[%s2 + $0x200] sm:$0xf]
      %v3001 = vld [vmem:[%s2 + $0x204] sm:$0xf]
      %v3002 = vld [vmem:[%s2 + $0x208] sm:$0xf]
      %v3003 = vld [vmem:[%s2 + $0x20c] sm:$0xf]
      %v3004 = vld [vmem:[%s2 + $0x210] sm:$0xf]
      %v3005 = vld [vmem:[%s2 + $0x214] sm:$0xf]
      %v3006 = vld [vmem:[%s2 + $0x218] sm:$0xf]
      %v3007 = vld [vmem:[%s2 + $0x21c] sm:$0xf]
      %v3008 = vld [vmem:[%s2 + $0x220] sm:$0xf]
      %v3009 = vld [vmem:[%s2 + $0x224] sm:$0xf]
      %v3010 = vld [vmem:[%s2 + $0x228] sm:$0xf]
      %v3011 = vld [vmem:[%s2 + $0x22c] sm:$0xf]
      %v3012 = vld [vmem:[%s2 + $0x230] sm:$0xf]
      %v3013 = vld [vmem:[%s2 + $0x234] sm:$0xf]
      %v3014 = vld [vmem:[%s2 + $0x238] sm:$0xf]
      %v3015 = vld [vmem:[%s2 + $0x23c] sm:$0xf]
      %v3016 = vld [vmem:[%s2 + $0x240] sm:$0xf]
      %v3017 = vld [vmem:[%s2 + $0x244] sm:$0xf]
      %v3018 = vld [vmem:[%s2 + $0x248] sm:$0xf]
      %v3019 = vld [vmem:[%s2 + $0x24c] sm:$0xf]
      %v3020 = vld [vmem:[%s2 + $0x250] sm:$0xf]
      %v3021 = vld [vmem:[%s2 + $0x254] sm:$0xf]
      %v3022 = vld [vmem:[%s2 + $0x258] sm:$0xf]
      %v3023 = vld [vmem:[%s2 + $0x25c] sm:$0xf]
      %v3024 = vld [vmem:[%s2 + $0x260] sm:$0xf]
      %v3025 = vld [vmem:[%s2 + $0x264] sm:$0xf]
      %v3026 = vld [vmem:[%s2 + $0x268] sm:$0xf]
      %v3027 = vld [vmem:[%s2 + $0x26c] sm:$0xf]
      %v3028 = vld [vmem:[%s2 + $0x270] sm:$0xf]
      %v3029 = vld [vmem:[%s2 + $0x274] sm:$0xf]
      %v3030 = vld [vmem:[%s2 + $0x278] sm:$0xf]
      %v3031 = vld [vmem:[%s2 + $0x27c] sm:$0xf]
      %v3064 = vunpack.c.l.b16 %v3000
      %v3065 = vunpack.c.l.b16 %v3001
      %v3066 = vunpack.c.l.b16 %v3002
      %v3067 = vunpack.c.l.b16 %v3003
      %v3068 = vunpack.c.l.b16 %v3004
      %v3069 = vunpack.c.l.b16 %v3005
      %v3070 = vunpack.c.l.b16 %v3006
      %v3071 = vunpack.c.l.b16 %v3007
      %v3072 = vunpack.c.l.b16 %v3008
      %v3073 = vunpack.c.l.b16 %v3009
      %v3074 = vunpack.c.l.b16 %v3010
      %v3075 = vunpack.c.l.b16 %v3011
      %v3076 = vunpack.c.l.b16 %v3012
      %v3077 = vunpack.c.l.b16 %v3013
      %v3078 = vunpack.c.l.b16 %v3014
      %v3079 = vunpack.c.l.b16 %v3015
      %v3080 = vunpack.c.l.b16 %v3016
      %v3081 = vunpack.c.l.b16 %v3017
      %v3082 = vunpack.c.l.b16 %v3018
      %v3083 = vunpack.c.l.b16 %v3019
      %v3084 = vunpack.c.l.b16 %v3020
      %v3085 = vunpack.c.l.b16 %v3021
      %v3086 = vunpack.c.l.b16 %v3022
      %v3087 = vunpack.c.l.b16 %v3023
      %v3088 = vunpack.c.l.b16 %v3024
      %v3089 = vunpack.c.l.b16 %v3025
      %v3090 = vunpack.c.l.b16 %v3026
      %v3091 = vunpack.c.l.b16 %v3027
      %v3092 = vunpack.c.l.b16 %v3028
      %v3093 = vunpack.c.l.b16 %v3029
      %v3094 = vunpack.c.l.b16 %v3030
      %v3095 = vunpack.c.l.b16 %v3031
      %v3096 = vpack.c.b16 %v3065, %v3064
      %v3097 = vpack.c.b16 %v3067, %v3066
      %v3098 = vpack.c.b16 %v3069, %v3068
      %v3099 = vpack.c.b16 %v3071, %v3070
      %v3100 = vpack.c.b16 %v3073, %v3072
      %v3101 = vpack.c.b16 %v3075, %v3074
      %v3102 = vpack.c.b16 %v3077, %v3076
      %v3103 = vpack.c.b16 %v3079, %v3078
      %v3104 = vpack.c.b16 %v3081, %v3080
      %v3105 = vpack.c.b16 %v3083, %v3082
      %v3106 = vpack.c.b16 %v3085, %v3084
      %v3107 = vpack.c.b16 %v3087, %v3086
      %v3108 = vpack.c.b16 %v3089, %v3088
      %v3109 = vpack.c.b16 %v3091, %v3090
      %v3110 = vpack.c.b16 %v3093, %v3092
      %v3111 = vpack.c.b16 %v3095, %v3094
      %3128 = vmatprep.subr.bf16.mxu0 0
      %3129 = vmatpush1.bf16.msra.mxu0 %v3096
      %3130 = vmatprep.subr.bf16.mxu0 0
      %3131 = vmatpush1.bf16.msra.mxu0 %v3097
      %3132 = vmatprep.subr.bf16.mxu0 0
      %3133 = vmatpush1.bf16.msra.mxu0 %v3098
      %3134 = vmatprep.subr.bf16.mxu0 0
      %3135 = vmatpush1.bf16.msra.mxu0 %v3099
      %3136 = vmatprep.subr.bf16.mxu0 0
      %3137 = vmatpush1.bf16.msra.mxu0 %v3100
      %3138 = vmatprep.subr.bf16.mxu0 0
      %3139 = vmatpush1.bf16.msra.mxu0 %v3101
      %3140 = vmatprep.subr.bf16.mxu0 0
      %3141 = vmatpush1.bf16.msra.mxu0 %v3102
      %3142 = vmatprep.subr.bf16.mxu0 0
      %3143 = vmatpush1.bf16.msra.mxu0 %v3103
      %3144 = vmatprep.subr.bf16.mxu0 0
      %3145 = vmatpush1.bf16.msra.mxu0 %v3104
      %3146 = vmatprep.subr.bf16.mxu0 0
      %3147 = vmatpush1.bf16.msra.mxu0 %v3105
      %3148 = vmatprep.subr.bf16.mxu0 0
      %3149 = vmatpush1.bf16.msra.mxu0 %v3106
      %3150 = vmatprep.subr.bf16.mxu0 0
      %3151 = vmatpush1.bf16.msra.mxu0 %v3107
      %3152 = vmatprep.subr.bf16.mxu0 0
      %3153 = vmatpush1.bf16.msra.mxu0 %v3108
      %3154 = vmatprep.subr.bf16.mxu0 0
      %3155 = vmatpush1.bf16.msra.mxu0 %v3109
      %3156 = vmatprep.subr.bf16.mxu0 0
      %3157 = vmatpush1.bf16.msra.mxu0 %v3110
      %3158 = vmatprep.subr.bf16.mxu0 0
      %3159 = vmatpush1.bf16.msra.mxu0 %v3111
      %3160 = vmatprep.mubr.bf16.mxu0 %v2970
      %3161 = vmatmul.mubr.bf16.gmra.mrb[0].mxu0 %v2938
      %v3162 = vpop.f32.mrb[0].mxu0
      %v3163 = vadd.f32 0.0, %v3162
      %v3164 = vpop.f32.mrb[0].mxu0
      %v3165 = vpop.f32.mrb[0].mxu0
      %v3166 = vadd.f32 0.0, %v3165
      %v3167 = vpop.f32.mrb[0].mxu0
      %3168 = vmatprep.mubr.bf16.mxu0 %v2974
      %3169 = vmatmul.mubr.bf16.gmra.mrb[0].mxu0 %v2942
      %v3170 = vpop.f32.mrb[0].mxu0
      %v3171 = vadd.f32 0.0, %v3170
      %v3172 = vpop.f32.mrb[0].mxu0
      %v3173 = vpop.f32.mrb[0].mxu0
      %v3174 = vadd.f32 0.0, %v3173
      %v3175 = vpop.f32.mrb[0].mxu0
      %3176 = vmatprep.mubr.bf16.mxu0 %v2978
      %3177 = vmatmul.mubr.bf16.gmra.mrb[0].mxu0 %v2946
      %v3178 = vpop.f32.mrb[0].mxu0
      %v3179 = vadd.f32 0.0, %v3178
      %v3180 = vpop.f32.mrb[0].mxu0
      %v3181 = vpop.f32.mrb[0].mxu0
      %v3182 = vadd.f32 0.0, %v3181
      %v3183 = vpop.f32.mrb[0].mxu0
      %3184 = vmatprep.mubr.bf16.mxu0 %v2982
      %3185 = vmatmul.mubr.bf16.gmra.mrb[0].mxu0 %v2950
      %v3186 = vpop.f32.mrb[0].mxu0
      %v3187 = vadd.f32 0.0, %v3186
      %v3188 = vpop.f32.mrb[0].mxu0
      %v3189 = vpop.f32.mrb[0].mxu0
      %v3190 = vadd.f32 0.0, %v3189
      %v3191 = vpop.f32.mrb[0].mxu0
      %3192 = vmatprep.mubr.bf16.mxu0 %v2986
      %3193 = vmatmul.mubr.bf16.gmra.mrb[0].mxu0 %v2954
      %v3194 = vpop.f32.mrb[0].mxu0
      %v3195 = vadd.f32 0.0, %v3194
      %v3196 = vpop.f32.mrb[0].mxu0
      %v3197 = vpop.f32.mrb[0].mxu0
      %v3198 = vadd.f32 0.0, %v3197
      %v3199 = vpop.f32.mrb[0].mxu0
      %3200 = vmatprep.mubr.bf16.mxu0 %v2990
      %3201 = vmatmul.mubr.bf16.gmra.mrb[0].mxu0 %v2958
      %v3202 = vpop.f32.mrb[0].mxu0
      %v3203 = vadd.f32 0.0, %v3202
      %v3204 = vpop.f32.mrb[0].mxu0
      %v3205 = vpop.f32.mrb[0].mxu0
      %v3206 = vadd.f32 0.0, %v3205
      %v3207 = vpop.f32.mrb[0].mxu0
      %3208 = vmatprep.mubr.bf16.mxu0 %v2994
      %3209 = vmatmul.mubr.bf16.gmra.mrb[0].mxu0 %v2962
      %v3210 = vpop.f32.mrb[0].mxu0
      %v3211 = vadd.f32 0.0, %v3210
      %v3212 = vpop.f32.mrb[0].mxu0
      %v3213 = vpop.f32.mrb[0].mxu0
      %v3214 = vadd.f32 0.0, %v3213
      %v3215 = vpop.f32.mrb[0].mxu0
      %3216 = vmatprep.mubr.bf16.mxu0 %v2998
      %3217 = vmatmul.mubr.bf16.gmra.mrb[0].mxu0 %v2966
      %v3218 = vpop.f32.mrb[0].mxu0
      %v3219 = vadd.f32 0.0, %v3218
      %v3220 = vpop.f32.mrb[0].mxu0
      %v3221 = vpop.f32.mrb[0].mxu0
      %v3222 = vpop.f32.mrb[0].mxu0
      %3223 = vdwg.mxu0
      %v3224 = vadd.f32 %v2698, %v3163
      %v3225 = vadd.f32 %v2699, %v3166
      %v3226 = vadd.f32 %v2700, %v3171
      %v3227 = vadd.f32 %v2701, %v3174
      %v3228 = vadd.f32 %v2702, %v3179
      %v3229 = vadd.f32 %v2703, %v3182
      %v3230 = vadd.f32 %v2704, %v3187
      %v3231 = vadd.f32 %v2705, %v3190
      %v3232 = vadd.f32 %v2706, %v3195
      %v3233 = vadd.f32 %v2707, %v3198
      %v3234 = vadd.f32 %v2708, %v3203
      %v3235 = vadd.f32 %v2709, %v3206
      %v3236 = vadd.f32 %v2710, %v3211
      %v3237 = vadd.f32 %v2711, %v3214
      %v3238 = vadd.f32 %v2712, %v3219
      %v3239 = vld [vmem:[#allocation2 + $0x18] sm:$0xc]
      %v3240 = vld [vmem:[#allocation2 + $0x1c] sm:$0xf]
      %v3241 = vld [vmem:[#allocation2 + $0x20] sm:$0xf]
      %v3242 = vld [vmem:[#allocation2 + $0x24] sm:$0xf]
      %v3243 = vld [vmem:[#allocation2 + $0x28] sm:$0xf]
      %v3244 = vld [vmem:[#allocation2 + $0x2c] sm:$0xf]
      %v3245 = vld [vmem:[#allocation2 + $0x30] sm:$0xf]
      %v3246 = vld [vmem:[#allocation2 + $0x34] sm:$0xf]
      %v3247 = vld [vmem:[#allocation2 + $0x38] sm:$0xf]
      %v3248 = vld [vmem:[#allocation2 + $0x3c] sm:$0xf]
      %v3249 = vld [vmem:[#allocation2 + $0x40] sm:$0xf]
      %v3250 = vld [vmem:[#allocation2 + $0x44] sm:$0xf]
      %v3251 = vld [vmem:[#allocation2 + $0x48] sm:$0xf]
      %v3252 = vld [vmem:[#allocation2 + $0x4c] sm:$0xf]
      %v3253 = vld [vmem:[#allocation2 + $0x50] sm:$0xf]
      %v3254 = vld [vmem:[#allocation2 + $0x54] sm:$0x3]
      %v3255 = vld [vmem:[#allocation2 + $0x54] sm:$0x7]
      %v3256 = vld [vmem:[#allocation2 + $0x18] sm:$0x8]
      %v3257 = vld [vmem:[#allocation2 + $0x54] sm:$0xf]
      %v3274 = vunpack.c.l.b16 %v3239
      %v3275 = vunpack.c.l.b16 %v3240
      %v3276 = vunpack.c.l.b16 %v3241
      %v3277 = vunpack.c.l.b16 %v3242
      %v3278 = vunpack.c.l.b16 %v3243
      %v3279 = vunpack.c.l.b16 %v3244
      %v3280 = vunpack.c.l.b16 %v3245
      %v3281 = vunpack.c.l.b16 %v3246
      %v3282 = vunpack.c.l.b16 %v3247
      %v3283 = vunpack.c.l.b16 %v3248
      %v3284 = vunpack.c.l.b16 %v3249
      %v3285 = vunpack.c.l.b16 %v3250
      %v3286 = vunpack.c.l.b16 %v3251
      %v3287 = vunpack.c.l.b16 %v3252
      %v3288 = vunpack.c.l.b16 %v3253
      %v3289 = vunpack.c.l.b16 %v3254
      %v3290 = vpack.c.b16 %v3275, %v3274
      %v3291 = vpack.c.b16 %v3277, %v3276
      %v3292 = vpack.c.b16 %v3279, %v3278
      %v3293 = vpack.c.b16 %v3281, %v3280
      %v3294 = vpack.c.b16 %v3283, %v3282
      %v3295 = vpack.c.b16 %v3285, %v3284
      %v3296 = vpack.c.b16 %v3287, %v3286
      %v3297 = vpack.c.b16 %v3289, %v3288
      %v3299 = vunpack.c.l.b16 %v3255
      %v3300 = vpack.c.b16 %v3299, %v3288
      %v3302 = vshrl.u32 %v3290, 16
      %v3304 = vshll.u32 %v3290, 16
      %v3306 = vrot.slane %v3304, 1
      %v3307 = vor.u32 %v3302, %v3306
      %v3309 = vshll.u32 %v3291, 16
      %v3311 = vrot.slane %v3309, 1
      %v3312 = vsel %vm662, %v3307, %v3311
      %v3313 = vshrl.u32 %v3291, 16
      %v3315 = vor.u32 %v3313, %v3311
      %v3317 = vshll.u32 %v3292, 16
      %v3319 = vrot.slane %v3317, 1
      %v3320 = vsel %vm662, %v3315, %v3319
      %v3321 = vshrl.u32 %v3292, 16
      %v3323 = vor.u32 %v3321, %v3319
      %v3325 = vshll.u32 %v3293, 16
      %v3327 = vrot.slane %v3325, 1
      %v3328 = vsel %vm662, %v3323, %v3327
      %v3329 = vshrl.u32 %v3293, 16
      %v3331 = vor.u32 %v3329, %v3327
      %v3333 = vshll.u32 %v3294, 16
      %v3335 = vrot.slane %v3333, 1
      %v3336 = vsel %vm662, %v3331, %v3335
      %v3337 = vshrl.u32 %v3294, 16
      %v3339 = vor.u32 %v3337, %v3335
      %v3341 = vshll.u32 %v3295, 16
      %v3343 = vrot.slane %v3341, 1
      %v3344 = vsel %vm662, %v3339, %v3343
      %v3345 = vshrl.u32 %v3295, 16
      %v3347 = vor.u32 %v3345, %v3343
      %v3349 = vshll.u32 %v3296, 16
      %v3351 = vrot.slane %v3349, 1
      %v3352 = vsel %vm662, %v3347, %v3351
      %v3353 = vshrl.u32 %v3296, 16
      %v3355 = vor.u32 %v3353, %v3351
      %v3357 = vshll.u32 %v3300, 16
      %v3359 = vrot.slane %v3357, 1
      %v3360 = vsel %vm662, %v3355, %v3359
      %v3361 = vshrl.u32 %v3300, 16
      %v3363 = vor.u32 %v3361, %v3359
      %3364 = vrot.lane.b32.xlu0 %v3312, 64
      %v3365 = vpop.permute.xlu0 %3364
      %3366 = vrot.lane.b32.xlu0 %v3320, 64
      %v3367 = vpop.permute.xlu0 %3366
      %3368 = vrot.lane.b32.xlu0 %v3328, 64
      %v3369 = vpop.permute.xlu0 %3368
      %3370 = vrot.lane.b32.xlu0 %v3336, 64
      %v3371 = vpop.permute.xlu0 %3370
      %3372 = vrot.lane.b32.xlu0 %v3344, 64
      %v3373 = vpop.permute.xlu0 %3372
      %3374 = vrot.lane.b32.xlu0 %v3352, 64
      %v3375 = vpop.permute.xlu0 %3374
      %3376 = vrot.lane.b32.xlu0 %v3360, 64
      %v3377 = vpop.permute.xlu0 %3376
      %3378 = vrot.lane.b32.xlu0 %v3363, 64
      %v3379 = vpop.permute.xlu0 %3378
      %v3381 = vunpack.c.l.b16 %v3256
      %v3382 = vpack.c.b16 %v3275, %v3381
      %v3383 = vrot.slane %v3382, 1
      %v3384 = vrot.slane %v3291, 1
      %v3385 = vsel %vm745, %v3383, %v3384
      %v3386 = vrot.slane %v3292, 1
      %v3387 = vsel %vm745, %v3384, %v3386
      %v3388 = vrot.slane %v3293, 1
      %v3389 = vsel %vm745, %v3386, %v3388
      %v3390 = vrot.slane %v3294, 1
      %v3391 = vsel %vm745, %v3388, %v3390
      %v3392 = vrot.slane %v3295, 1
      %v3393 = vsel %vm745, %v3390, %v3392
      %v3394 = vrot.slane %v3296, 1
      %v3395 = vsel %vm745, %v3392, %v3394
      %v3396 = vrot.slane %v3300, 1
      %v3397 = vsel %vm745, %v3394, %v3396
      %v3399 = vunpack.c.l.b16 %v3257
      %v3400 = vpack.c.b16 %v3399, %v3288
      %v3402 = vshrl.u32 %v3382, 16
      %v3404 = vrot.slane %v3402, 1
      %v3405 = vshll.u32 %v3382, 16
      %v3407 = vrot.slane %v3405, 2
      %v3408 = vor.u32 %v3404, %v3407
      %v3409 = vrot.slane %v3313, 1
      %v3410 = vrot.slane %v3309, 2
      %v3411 = vor.u32 %v3409, %v3410
      %v3412 = vsel %vm764, %v3408, %v3411
      %v3413 = vrot.slane %v3321, 1
      %v3414 = vrot.slane %v3317, 2
      %v3415 = vor.u32 %v3413, %v3414
      %v3416 = vsel %vm764, %v3411, %v3415
      %v3417 = vrot.slane %v3329, 1
      %v3418 = vrot.slane %v3325, 2
      %v3419 = vor.u32 %v3417, %v3418
      %v3420 = vsel %vm764, %v3415, %v3419
      %v3421 = vrot.slane %v3337, 1
      %v3422 = vrot.slane %v3333, 2
      %v3423 = vor.u32 %v3421, %v3422
      %v3424 = vsel %vm764, %v3419, %v3423
      %v3425 = vrot.slane %v3345, 1
      %v3426 = vrot.slane %v3341, 2
      %v3427 = vor.u32 %v3425, %v3426
      %v3428 = vsel %vm764, %v3423, %v3427
      %v3429 = vrot.slane %v3353, 1
      %v3430 = vrot.slane %v3349, 2
      %v3431 = vor.u32 %v3429, %v3430
      %v3432 = vsel %vm764, %v3427, %v3431
      %v3434 = vshrl.u32 %v3400, 16
      %v3436 = vrot.slane %v3434, 1
      %v3437 = vshll.u32 %v3400, 16
      %v3439 = vrot.slane %v3437, 2
      %v3440 = vor.u32 %v3436, %v3439
      %v3441 = vsel %vm764, %v3431, %v3440
      %3442 = vrot.lane.b32.xlu0 %v3412, 64
      %v3443 = vpop.permute.xlu0 %3442
      %3444 = vrot.lane.b32.xlu0 %v3416, 64
      %v3445 = vpop.permute.xlu0 %3444
      %3446 = vrot.lane.b32.xlu0 %v3420, 64
      %v3447 = vpop.permute.xlu0 %3446
      %3448 = vrot.lane.b32.xlu0 %v3424, 64
      %v3449 = vpop.permute.xlu0 %3448
      %3450 = vrot.lane.b32.xlu0 %v3428, 64
      %v3451 = vpop.permute.xlu0 %3450
      %3452 = vrot.lane.b32.xlu0 %v3432, 64
      %v3453 = vpop.permute.xlu0 %3452
      %3454 = vrot.lane.b32.xlu0 %v3441, 64
      %v3455 = vpop.permute.xlu0 %3454
      %3456 = vrot.lane.b32.xlu0 %v3440, 64
      %v3457 = vpop.permute.xlu0 %3456
      %v3459 = vsel %vm822, %v3290, %v3365
      %v3461 = vsel %vm822, %v3291, %v3367
      %v3463 = vsel %vm822, %v3292, %v3369
      %v3465 = vsel %vm822, %v3293, %v3371
      %v3467 = vsel %vm822, %v3294, %v3373
      %v3469 = vsel %vm822, %v3295, %v3375
      %v3471 = vsel %vm822, %v3296, %v3377
      %v3474 = vsel %vm822, %v3297, %v3379
      %v3477 = vsel %vm822, %v3385, %v3443
      %v3480 = vsel %vm822, %v3387, %v3445
      %v3483 = vsel %vm822, %v3389, %v3447
      %v3486 = vsel %vm822, %v3391, %v3449
      %v3489 = vsel %vm822, %v3393, %v3451
      %v3492 = vsel %vm822, %v3395, %v3453
      %v3495 = vsel %vm822, %v3397, %v3455
      %v3498 = vsel %vm822, %v3396, %v3457
      %v3499 = vld [vmem:[%s2 + $0x280] sm:$0xf]
      %v3500 = vld [vmem:[%s2 + $0x284] sm:$0xf]
      %v3501 = vld [vmem:[%s2 + $0x288] sm:$0xf]
      %v3502 = vld [vmem:[%s2 + $0x28c] sm:$0xf]
      %v3503 = vld [vmem:[%s2 + $0x290] sm:$0xf]
      %v3504 = vld [vmem:[%s2 + $0x294] sm:$0xf]
      %v3505 = vld [vmem:[%s2 + $0x298] sm:$0xf]
      %v3506 = vld [vmem:[%s2 + $0x29c] sm:$0xf]
      %v3507 = vld [vmem:[%s2 + $0x2a0] sm:$0xf]
      %v3508 = vld [vmem:[%s2 + $0x2a4] sm:$0xf]
      %v3509 = vld [vmem:[%s2 + $0x2a8] sm:$0xf]
      %v3510 = vld [vmem:[%s2 + $0x2ac] sm:$0xf]
      %v3511 = vld [vmem:[%s2 + $0x2b0] sm:$0xf]
      %v3512 = vld [vmem:[%s2 + $0x2b4] sm:$0xf]
      %v3513 = vld [vmem:[%s2 + $0x2b8] sm:$0xf]
      %v3514 = vld [vmem:[%s2 + $0x2bc] sm:$0xf]
      %v3515 = vld [vmem:[%s2 + $0x2c0] sm:$0xf]
      %v3516 = vld [vmem:[%s2 + $0x2c4] sm:$0xf]
      %v3517 = vld [vmem:[%s2 + $0x2c8] sm:$0xf]
      %v3518 = vld [vmem:[%s2 + $0x2cc] sm:$0xf]
      %v3519 = vld [vmem:[%s2 + $0x2d0] sm:$0xf]
      %v3520 = vld [vmem:[%s2 + $0x2d4] sm:$0xf]
      %v3521 = vld [vmem:[%s2 + $0x2d8] sm:$0xf]
      %v3522 = vld [vmem:[%s2 + $0x2dc] sm:$0xf]
      %v3523 = vld [vmem:[%s2 + $0x2e0] sm:$0xf]
      %v3524 = vld [vmem:[%s2 + $0x2e4] sm:$0xf]
      %v3525 = vld [vmem:[%s2 + $0x2e8] sm:$0xf]
      %v3526 = vld [vmem:[%s2 + $0x2ec] sm:$0xf]
      %v3527 = vld [vmem:[%s2 + $0x2f0] sm:$0xf]
      %v3528 = vld [vmem:[%s2 + $0x2f4] sm:$0xf]
      %v3529 = vld [vmem:[%s2 + $0x2f8] sm:$0xf]
      %v3530 = vld [vmem:[%s2 + $0x2fc] sm:$0xf]
      %v3547 = vrot.slane %v3459, 2
      %v3548 = vrot.slane %v3461, 2
      %v3549 = vsel %vm1181, %v3547, %v3548
      %v3550 = vrot.slane %v3477, 2
      %v3551 = vrot.slane %v3480, 2
      %v3552 = vsel %vm1181, %v3550, %v3551
      %v3553 = vrot.slane %v3463, 2
      %v3554 = vsel %vm1181, %v3548, %v3553
      %v3555 = vrot.slane %v3483, 2
      %v3556 = vsel %vm1181, %v3551, %v3555
      %v3557 = vrot.slane %v3465, 2
      %v3558 = vsel %vm1181, %v3553, %v3557
      %v3559 = vrot.slane %v3486, 2
      %v3560 = vsel %vm1181, %v3555, %v3559
      %v3561 = vrot.slane %v3467, 2
      %v3562 = vsel %vm1181, %v3557, %v3561
      %v3563 = vrot.slane %v3489, 2
      %v3564 = vsel %vm1181, %v3559, %v3563
      %v3565 = vrot.slane %v3469, 2
      %v3566 = vsel %vm1181, %v3561, %v3565
      %v3567 = vrot.slane %v3492, 2
      %v3568 = vsel %vm1181, %v3563, %v3567
      %v3569 = vrot.slane %v3471, 2
      %v3570 = vsel %vm1181, %v3565, %v3569
      %v3571 = vrot.slane %v3495, 2
      %v3572 = vsel %vm1181, %v3567, %v3571
      %v3573 = vrot.slane %v3474, 2
      %v3574 = vsel %vm1181, %v3569, %v3573
      %v3575 = vrot.slane %v3498, 2
      %v3576 = vsel %vm1181, %v3571, %v3575
      %v3625 = vunpack.c.l.b16 %v3499
      %v3626 = vunpack.c.l.b16 %v3500
      %v3627 = vunpack.c.l.b16 %v3501
      %v3628 = vunpack.c.l.b16 %v3502
      %v3629 = vunpack.c.l.b16 %v3503
      %v3630 = vunpack.c.l.b16 %v3504
      %v3631 = vunpack.c.l.b16 %v3505
      %v3632 = vunpack.c.l.b16 %v3506
      %v3633 = vunpack.c.l.b16 %v3507
      %v3634 = vunpack.c.l.b16 %v3508
      %v3635 = vunpack.c.l.b16 %v3509
      %v3636 = vunpack.c.l.b16 %v3510
      %v3637 = vunpack.c.l.b16 %v3511
      %v3638 = vunpack.c.l.b16 %v3512
      %v3639 = vunpack.c.l.b16 %v3513
      %v3640 = vunpack.c.l.b16 %v3514
      %v3641 = vunpack.c.l.b16 %v3515
      %v3642 = vunpack.c.l.b16 %v3516
      %v3643 = vunpack.c.l.b16 %v3517
      %v3644 = vunpack.c.l.b16 %v3518
      %v3645 = vunpack.c.l.b16 %v3519
      %v3646 = vunpack.c.l.b16 %v3520
      %v3647 = vunpack.c.l.b16 %v3521
      %v3648 = vunpack.c.l.b16 %v3522
      %v3649 = vunpack.c.l.b16 %v3523
      %v3650 = vunpack.c.l.b16 %v3524
      %v3651 = vunpack.c.l.b16 %v3525
      %v3652 = vunpack.c.l.b16 %v3526
      %v3653 = vunpack.c.l.b16 %v3527
      %v3654 = vunpack.c.l.b16 %v3528
      %v3655 = vunpack.c.l.b16 %v3529
      %v3656 = vunpack.c.l.b16 %v3530
      %v3657 = vpack.c.b16 %v3626, %v3625
      %v3658 = vpack.c.b16 %v3628, %v3627
      %v3659 = vpack.c.b16 %v3630, %v3629
      %v3660 = vpack.c.b16 %v3632, %v3631
      %v3661 = vpack.c.b16 %v3634, %v3633
      %v3662 = vpack.c.b16 %v3636, %v3635
      %v3663 = vpack.c.b16 %v3638, %v3637
      %v3664 = vpack.c.b16 %v3640, %v3639
      %v3665 = vpack.c.b16 %v3642, %v3641
      %v3666 = vpack.c.b16 %v3644, %v3643
      %v3667 = vpack.c.b16 %v3646, %v3645
      %v3668 = vpack.c.b16 %v3648, %v3647
      %v3669 = vpack.c.b16 %v3650, %v3649
      %v3670 = vpack.c.b16 %v3652, %v3651
      %v3671 = vpack.c.b16 %v3654, %v3653
      %v3672 = vpack.c.b16 %v3656, %v3655
      %3689 = vmatprep.subr.bf16.mxu0 0
      %3690 = vmatpush1.bf16.msra.mxu0 %v3657
      %3691 = vmatprep.subr.bf16.mxu0 0
      %3692 = vmatpush1.bf16.msra.mxu0 %v3658
      %3693 = vmatprep.subr.bf16.mxu0 0
      %3694 = vmatpush1.bf16.msra.mxu0 %v3659
      %3695 = vmatprep.subr.bf16.mxu0 0
      %3696 = vmatpush1.bf16.msra.mxu0 %v3660
      %3697 = vmatprep.subr.bf16.mxu0 0
      %3698 = vmatpush1.bf16.msra.mxu0 %v3661
      %3699 = vmatprep.subr.bf16.mxu0 0
      %3700 = vmatpush1.bf16.msra.mxu0 %v3662
      %3701 = vmatprep.subr.bf16.mxu0 0
      %3702 = vmatpush1.bf16.msra.mxu0 %v3663
      %3703 = vmatprep.subr.bf16.mxu0 0
      %3704 = vmatpush1.bf16.msra.mxu0 %v3664
      %3705 = vmatprep.subr.bf16.mxu0 0
      %3706 = vmatpush1.bf16.msra.mxu0 %v3665
      %3707 = vmatprep.subr.bf16.mxu0 0
      %3708 = vmatpush1.bf16.msra.mxu0 %v3666
      %3709 = vmatprep.subr.bf16.mxu0 0
      %3710 = vmatpush1.bf16.msra.mxu0 %v3667
      %3711 = vmatprep.subr.bf16.mxu0 0
      %3712 = vmatpush1.bf16.msra.mxu0 %v3668
      %3713 = vmatprep.subr.bf16.mxu0 0
      %3714 = vmatpush1.bf16.msra.mxu0 %v3669
      %3715 = vmatprep.subr.bf16.mxu0 0
      %3716 = vmatpush1.bf16.msra.mxu0 %v3670
      %3717 = vmatprep.subr.bf16.mxu0 0
      %3718 = vmatpush1.bf16.msra.mxu0 %v3671
      %3719 = vmatprep.subr.bf16.mxu0 0
      %3720 = vmatpush1.bf16.msra.mxu0 %v3672
      %3721 = vmatprep.mubr.bf16.mxu0 %v3552
      %3722 = vmatmul.mubr.bf16.gmra.mrb[0].mxu0 %v3549
      %v3723 = vpop.f32.mrb[0].mxu0
      %v3724 = vadd.f32 0.0, %v3723
      %v3725 = vpop.f32.mrb[0].mxu0
      %v3726 = vpop.f32.mrb[0].mxu0
      %v3727 = vadd.f32 0.0, %v3726
      %v3728 = vpop.f32.mrb[0].mxu0
      %3729 = vmatprep.mubr.bf16.mxu0 %v3556
      %3730 = vmatmul.mubr.bf16.gmra.mrb[0].mxu0 %v3554
      %v3731 = vpop.f32.mrb[0].mxu0
      %v3732 = vadd.f32 0.0, %v3731
      %v3733 = vpop.f32.mrb[0].mxu0
      %v3734 = vpop.f32.mrb[0].mxu0
      %v3735 = vadd.f32 0.0, %v3734
      %v3736 = vpop.f32.mrb[0].mxu0
      %3737 = vmatprep.mubr.bf16.mxu0 %v3560
      %3738 = vmatmul.mubr.bf16.gmra.mrb[0].mxu0 %v3558
      %v3739 = vpop.f32.mrb[0].mxu0
      %v3740 = vadd.f32 0.0, %v3739
      %v3741 = vpop.f32.mrb[0].mxu0
      %v3742 = vpop.f32.mrb[0].mxu0
      %v3743 = vadd.f32 0.0, %v3742
      %v3744 = vpop.f32.mrb[0].mxu0
      %3745 = vmatprep.mubr.bf16.mxu0 %v3564
      %3746 = vmatmul.mubr.bf16.gmra.mrb[0].mxu0 %v3562
      %v3747 = vpop.f32.mrb[0].mxu0
      %v3748 = vadd.f32 0.0, %v3747
      %v3749 = vpop.f32.mrb[0].mxu0
      %v3750 = vpop.f32.mrb[0].mxu0
      %v3751 = vadd.f32 0.0, %v3750
      %v3752 = vpop.f32.mrb[0].mxu0
      %3753 = vmatprep.mubr.bf16.mxu0 %v3568
      %3754 = vmatmul.mubr.bf16.gmra.mrb[0].mxu0 %v3566
      %v3755 = vpop.f32.mrb[0].mxu0
      %v3756 = vadd.f32 0.0, %v3755
      %v3757 = vpop.f32.mrb[0].mxu0
      %v3758 = vpop.f32.mrb[0].mxu0
      %v3759 = vadd.f32 0.0, %v3758
      %v3760 = vpop.f32.mrb[0].mxu0
      %3761 = vmatprep.mubr.bf16.mxu0 %v3572
      %3762 = vmatmul.mubr.bf16.gmra.mrb[0].mxu0 %v3570
      %v3763 = vpop.f32.mrb[0].mxu0
      %v3764 = vadd.f32 0.0, %v3763
      %v3765 = vpop.f32.mrb[0].mxu0
      %v3766 = vpop.f32.mrb[0].mxu0
      %v3767 = vadd.f32 0.0, %v3766
      %v3768 = vpop.f32.mrb[0].mxu0
      %3769 = vmatprep.mubr.bf16.mxu0 %v3576
      %3770 = vmatmul.mubr.bf16.gmra.mrb[0].mxu0 %v3574
      %v3771 = vpop.f32.mrb[0].mxu0
      %v3772 = vadd.f32 0.0, %v3771
      %v3773 = vpop.f32.mrb[0].mxu0
      %v3774 = vpop.f32.mrb[0].mxu0
      %v3775 = vadd.f32 0.0, %v3774
      %v3776 = vpop.f32.mrb[0].mxu0
      %3777 = vmatprep.mubr.bf16.mxu0 %v3575
      %3778 = vmatmul.mubr.bf16.gmra.mrb[0].mxu0 %v3573
      %v3779 = vpop.f32.mrb[0].mxu0
      %v3780 = vadd.f32 0.0, %v3779
      %v3781 = vpop.f32.mrb[0].mxu0
      %v3782 = vpop.f32.mrb[0].mxu0
      %v3783 = vpop.f32.mrb[0].mxu0
      %3784 = vdwg.mxu0
      %v3785 = vadd.f32 %v3224, %v3724
      %v3786 = vadd.f32 %v3225, %v3727
      %v3787 = vadd.f32 %v3226, %v3732
      %v3788 = vadd.f32 %v3227, %v3735
      %v3789 = vadd.f32 %v3228, %v3740
      %v3790 = vadd.f32 %v3229, %v3743
      %v3791 = vadd.f32 %v3230, %v3748
      %v3792 = vadd.f32 %v3231, %v3751
      %v3793 = vadd.f32 %v3232, %v3756
      %v3794 = vadd.f32 %v3233, %v3759
      %v3795 = vadd.f32 %v3234, %v3764
      %v3796 = vadd.f32 %v3235, %v3767
      %v3797 = vadd.f32 %v3236, %v3772
      %v3798 = vadd.f32 %v3237, %v3775
      %v3799 = vadd.f32 %v3238, %v3780
      %v3800 = vld [vmem:[%s2 + $0x300] sm:$0xf]
      %v3801 = vld [vmem:[%s2 + $0x304] sm:$0xf]
      %v3802 = vld [vmem:[%s2 + $0x308] sm:$0xf]
      %v3803 = vld [vmem:[%s2 + $0x30c] sm:$0xf]
      %v3804 = vld [vmem:[%s2 + $0x310] sm:$0xf]
      %v3805 = vld [vmem:[%s2 + $0x314] sm:$0xf]
      %v3806 = vld [vmem:[%s2 + $0x318] sm:$0xf]
      %v3807 = vld [vmem:[%s2 + $0x31c] sm:$0xf]
      %v3808 = vpack.c.b16 %v3276, %v3275
      %v3809 = vpack.c.b16 %v3278, %v3277
      %v3810 = vpack.c.b16 %v3280, %v3279
      %v3811 = vpack.c.b16 %v3282, %v3281
      %v3812 = vpack.c.b16 %v3284, %v3283
      %v3813 = vpack.c.b16 %v3286, %v3285
      %v3814 = vpack.c.b16 %v3288, %v3287
      %v3815 = vpack.c.b16 %v3399, %v3399
      %v3824 = vunpack.c.l.b16 %v3800
      %v3825 = vunpack.c.l.b16 %v3801
      %v3826 = vunpack.c.l.b16 %v3802
      %v3827 = vunpack.c.l.b16 %v3803
      %v3828 = vunpack.c.l.b16 %v3804
      %v3829 = vunpack.c.l.b16 %v3805
      %v3830 = vunpack.c.l.b16 %v3806
      %v3831 = vunpack.c.l.b16 %v3807
      %v3832 = vpack.c.b16 %v3825, %v3824
      %v3833 = vpack.c.b16 %v3827, %v3826
      %v3834 = vpack.c.b16 %v3829, %v3828
      %v3835 = vpack.c.b16 %v3831, %v3830
      %v3841 = vsel %vm822, %v3808, 0
      %v3844 = vsel %vm822, %v3809, 0
      %v3847 = vsel %vm822, %v3810, 0
      %v3850 = vsel %vm822, %v3811, 0
      %v3853 = vsel %vm822, %v3812, 0
      %v3856 = vsel %vm822, %v3813, 0
      %v3859 = vsel %vm822, %v3814, 0
      %v3862 = vsel %vm822, %v3815, 0
      %3864 = vmatprep.subr.bf16.mxu0 0
      %3865 = vmatpush1.bf16.msra.mxu0 %v3832
      %3866 = vmatprep.subr.bf16.mxu0 0
      %3867 = vmatpush1.bf16.msra.mxu0 %v3833
      %3868 = vmatprep.subr.bf16.mxu0 0
      %3869 = vmatpush1.bf16.msra.mxu0 %v3834
      %3870 = vmatprep.subr.bf16.mxu0 0
      %3871 = vmatpush1.bf16.msra.mxu0 %v3835
      %3872 = vmatprep.subr.bf16.mxu0 0
      %3873 = vmatpush1.bf16.msra.mxu0 0
      %3874 = vmatprep.subr.bf16.mxu0 0
      %3875 = vmatpush1.bf16.msra.mxu0 0
      %3876 = vmatprep.subr.bf16.mxu0 0
      %3877 = vmatpush1.bf16.msra.mxu0 0
      %3878 = vmatprep.subr.bf16.mxu0 0
      %3879 = vmatpush1.bf16.msra.mxu0 0
      %3880 = vmatprep.subr.bf16.mxu0 0
      %3881 = vmatpush1.bf16.msra.mxu0 0
      %3882 = vmatprep.subr.bf16.mxu0 0
      %3883 = vmatpush1.bf16.msra.mxu0 0
      %3884 = vmatprep.subr.bf16.mxu0 0
      %3885 = vmatpush1.bf16.msra.mxu0 0
      %3886 = vmatprep.subr.bf16.mxu0 0
      %3887 = vmatpush1.bf16.msra.mxu0 0
      %3888 = vmatprep.subr.bf16.mxu0 0
      %3889 = vmatpush1.bf16.msra.mxu0 0
      %3890 = vmatprep.subr.bf16.mxu0 0
      %3891 = vmatpush1.bf16.msra.mxu0 0
      %3892 = vmatprep.subr.bf16.mxu0 0
      %3893 = vmatpush1.bf16.msra.mxu0 0
      %3894 = vmatprep.subr.bf16.mxu0 0
      %3895 = vmatpush1.bf16.msra.mxu0 0
      %3896 = vmatprep.mubr.bf16.mxu0 0
      %3897 = vmatmul.mubr.bf16.gmra.mrb[0].mxu0 %v3841
      %v3898 = vpop.f32.mrb[0].mxu0
      %v3899 = vadd.f32 0.0, %v3898
      %v3900 = vpop.f32.mrb[0].mxu0
      %v3901 = vpop.f32.mrb[0].mxu0
      %v3902 = vadd.f32 0.0, %v3901
      %v3903 = vpop.f32.mrb[0].mxu0
      %3904 = vmatprep.mubr.bf16.mxu0 0
      %3905 = vmatmul.mubr.bf16.gmra.mrb[0].mxu0 %v3844
      %v3906 = vpop.f32.mrb[0].mxu0
      %v3907 = vadd.f32 0.0, %v3906
      %v3908 = vpop.f32.mrb[0].mxu0
      %v3909 = vpop.f32.mrb[0].mxu0
      %v3910 = vadd.f32 0.0, %v3909
      %v3911 = vpop.f32.mrb[0].mxu0
      %3912 = vmatprep.mubr.bf16.mxu0 0
      %3913 = vmatmul.mubr.bf16.gmra.mrb[0].mxu0 %v3847
      %v3914 = vpop.f32.mrb[0].mxu0
      %v3915 = vadd.f32 0.0, %v3914
      %v3916 = vpop.f32.mrb[0].mxu0
      %v3917 = vpop.f32.mrb[0].mxu0
      %v3918 = vadd.f32 0.0, %v3917
      %v3919 = vpop.f32.mrb[0].mxu0
      %3920 = vmatprep.mubr.bf16.mxu0 0
      %3921 = vmatmul.mubr.bf16.gmra.mrb[0].mxu0 %v3850
      %v3922 = vpop.f32.mrb[0].mxu0
      %v3923 = vadd.f32 0.0, %v3922
      %v3924 = vpop.f32.mrb[0].mxu0
      %v3925 = vpop.f32.mrb[0].mxu0
      %v3926 = vadd.f32 0.0, %v3925
      %v3927 = vpop.f32.mrb[0].mxu0
      %3928 = vmatprep.mubr.bf16.mxu0 0
      %3929 = vmatmul.mubr.bf16.gmra.mrb[0].mxu0 %v3853
      %v3930 = vpop.f32.mrb[0].mxu0
      %v3931 = vadd.f32 0.0, %v3930
      %v3932 = vpop.f32.mrb[0].mxu0
      %v3933 = vpop.f32.mrb[0].mxu0
      %v3934 = vadd.f32 0.0, %v3933
      %v3935 = vpop.f32.mrb[0].mxu0
      %3936 = vmatprep.mubr.bf16.mxu0 0
      %3937 = vmatmul.mubr.bf16.gmra.mrb[0].mxu0 %v3856
      %v3938 = vpop.f32.mrb[0].mxu0
      %v3939 = vadd.f32 0.0, %v3938
      %v3940 = vpop.f32.mrb[0].mxu0
      %v3941 = vpop.f32.mrb[0].mxu0
      %v3942 = vadd.f32 0.0, %v3941
      %v3943 = vpop.f32.mrb[0].mxu0
      %3944 = vmatprep.mubr.bf16.mxu0 0
      %3945 = vmatmul.mubr.bf16.gmra.mrb[0].mxu0 %v3859
      %v3946 = vpop.f32.mrb[0].mxu0
      %v3947 = vadd.f32 0.0, %v3946
      %v3948 = vpop.f32.mrb[0].mxu0
      %v3949 = vpop.f32.mrb[0].mxu0
      %v3950 = vadd.f32 0.0, %v3949
      %v3951 = vpop.f32.mrb[0].mxu0
      %3952 = vmatprep.mubr.bf16.mxu0 0
      %3953 = vmatmul.mubr.bf16.gmra.mrb[0].mxu0 %v3862
      %v3954 = vpop.f32.mrb[0].mxu0
      %v3955 = vadd.f32 0.0, %v3954
      %v3956 = vpop.f32.mrb[0].mxu0
      %v3957 = vpop.f32.mrb[0].mxu0
      %v3958 = vpop.f32.mrb[0].mxu0
      %3959 = vdwg.mxu0
      %v3960 = vadd.f32 %v3785, %v3899
      %v3961 = vadd.f32 %v3786, %v3902
      %v3962 = vadd.f32 %v3787, %v3907
      %v3963 = vadd.f32 %v3788, %v3910
      %v3964 = vadd.f32 %v3789, %v3915
      %v3965 = vadd.f32 %v3790, %v3918
      %v3966 = vadd.f32 %v3791, %v3923
      %v3967 = vadd.f32 %v3792, %v3926
      %v3968 = vadd.f32 %v3793, %v3931
      %v3969 = vadd.f32 %v3794, %v3934
      %v3970 = vadd.f32 %v3795, %v3939
      %v3971 = vadd.f32 %v3796, %v3942
      %v3972 = vadd.f32 %v3797, %v3947
      %v3973 = vadd.f32 %v3798, %v3950
      %v3974 = vadd.f32 %v3799, %v3955
      %v3975 = vpack.c.bf16 %v3961, %v3960
      %v3976 = vpack.c.bf16 %v3963, %v3962
      %v3977 = vpack.c.bf16 %v3965, %v3964
      %v3978 = vpack.c.bf16 %v3967, %v3966
      %v3979 = vpack.c.bf16 %v3969, %v3968
      %v3980 = vpack.c.bf16 %v3971, %v3970
      %v3981 = vpack.c.bf16 %v3973, %v3972
      %v3982 = vpack.c.bf16 %v3974, %v3974
      %3983 = vst.msk [vmem:[#allocation3] sm:$0xff] %vm822, %v3975
      %3984 = vst.msk [vmem:[#allocation3 + $0x8] sm:$0xff] %vm822, %v3976
      %3985 = vst.msk [vmem:[#allocation3 + $0x10] sm:$0xff] %vm822, %v3977
      %3986 = vst.msk [vmem:[#allocation3 + $0x18] sm:$0xff] %vm822, %v3978
      %3987 = vst.msk [vmem:[#allocation3 + $0x20] sm:$0xff] %vm822, %v3979
      %3988 = vst.msk [vmem:[#allocation3 + $0x28] sm:$0xff] %vm822, %v3980
      %3989 = vst.msk [vmem:[#allocation3 + $0x30] sm:$0xff] %vm822, %v3981
      %3990 = vst.msk [vmem:[#allocation3 + $0x38] sm:$0xf] %vm580, %v3982
      %v3991 = vld [vmem:[#allocation3] sm:$0xff]
      %v3992 = vld [vmem:[#allocation3 + $0x8] sm:$0xff]
      %v3993 = vld [vmem:[#allocation3 + $0x10] sm:$0xff]
      %v3994 = vld [vmem:[#allocation3 + $0x18] sm:$0xff]
      %v3995 = vld [vmem:[#allocation3 + $0x20] sm:$0xff]
      %v3996 = vld [vmem:[#allocation3 + $0x28] sm:$0xf]
      %v3997 = vld [vmem:[#allocation3 + $0x28] sm:$0x1f]
      %v3998 = vld [vmem:[#allocation3] sm:$0xfe]
      %v3999 = vld [vmem:[#allocation3] sm:$0xc0]
      %v4000 = vld [vmem:[#allocation3 + $0x28] sm:$0xff]
      %v4001 = vld [vmem:[#allocation3 + $0x30] sm:$0x7]
      %v4003 = vshrl.u32 %v3991, 16
      %v4005 = vshll.u32 %v3991, 16
      %v4007 = vrot.slane %v4005, 1
      %v4008 = vor.u32 %v4003, %v4007
      %v4010 = vshll.u32 %v3992, 16
      %v4012 = vrot.slane %v4010, 1
      %v4013 = vsel %vm662, %v4008, %v4012
      %v4014 = vshrl.u32 %v3992, 16
      %v4016 = vor.u32 %v4014, %v4012
      %v4018 = vshll.u32 %v3993, 16
      %v4020 = vrot.slane %v4018, 1
      %v4021 = vsel %vm662, %v4016, %v4020
      %v4022 = vshrl.u32 %v3993, 16
      %v4024 = vor.u32 %v4022, %v4020
      %v4026 = vshll.u32 %v3994, 16
      %v4028 = vrot.slane %v4026, 1
      %v4029 = vsel %vm662, %v4024, %v4028
      %v4030 = vshrl.u32 %v3994, 16
      %v4032 = vor.u32 %v4030, %v4028
      %v4034 = vshll.u32 %v3995, 16
      %v4036 = vrot.slane %v4034, 1
      %v4037 = vsel %vm662, %v4032, %v4036
      %v4038 = vshrl.u32 %v3995, 16
      %v4040 = vor.u32 %v4038, %v4036
      %v4042 = vshll.u32 %v3997, 16
      %v4044 = vrot.slane %v4042, 1
      %v4045 = vsel %vm662, %v4040, %v4044
      %v4046 = vshrl.u32 %v3997, 16
      %v4048 = vor.u32 %v4046, %v4044
      %4049 = vrot.lane.b32.xlu0 %v4013, 64
      %v4050 = vpop.permute.xlu0 %4049
      %4051 = vrot.lane.b32.xlu0 %v4021, 64
      %v4052 = vpop.permute.xlu0 %4051
      %4053 = vrot.lane.b32.xlu0 %v4029, 64
      %v4054 = vpop.permute.xlu0 %4053
      %4055 = vrot.lane.b32.xlu0 %v4037, 64
      %v4056 = vpop.permute.xlu0 %4055
      %4057 = vrot.lane.b32.xlu0 %v4045, 64
      %v4058 = vpop.permute.xlu0 %4057
      %4059 = vrot.lane.b32.xlu0 %v4048, 64
      %v4060 = vpop.permute.xlu0 %4059
      %v4067 = vrot.slane %v3998, 1
      %v4068 = vrot.slane %v3992, 1
      %v4069 = vsel %vm745, %v4067, %v4068
      %v4070 = vrot.slane %v3993, 1
      %v4071 = vsel %vm745, %v4068, %v4070
      %v4072 = vrot.slane %v3994, 1
      %v4073 = vsel %vm745, %v4070, %v4072
      %v4074 = vrot.slane %v3995, 1
      %v4075 = vsel %vm745, %v4072, %v4074
      %v4076 = vrot.slane %v3997, 1
      %v4077 = vsel %vm745, %v4074, %v4076
      %vm4078 = vsmask.f32 1280
      %v4080 = vshrl.u32 %v3999, 16
      %v4082 = vrot.slane %v4080, 6
      %v4083 = vshll.u32 %v3999, 16
      %v4085 = vrot.slane %v4083, 7
      %v4086 = vor.u32 %v4082, %v4085
      %v4087 = vrot.slane %v4014, 6
      %v4088 = vrot.slane %v4010, 7
      %v4089 = vor.u32 %v4087, %v4088
      %v4090 = vsel %vm4078, %v4086, %v4089
      %v4091 = vrot.slane %v4022, 6
      %v4092 = vrot.slane %v4018, 7
      %v4093 = vor.u32 %v4091, %v4092
      %v4094 = vsel %vm4078, %v4089, %v4093
      %v4095 = vrot.slane %v4030, 6
      %v4096 = vrot.slane %v4026, 7
      %v4097 = vor.u32 %v4095, %v4096
      %v4098 = vsel %vm4078, %v4093, %v4097
      %v4099 = vrot.slane %v4038, 6
      %v4100 = vrot.slane %v4034, 7
      %v4101 = vor.u32 %v4099, %v4100
      %v4102 = vsel %vm4078, %v4097, %v4101
      %v4104 = vshrl.u32 %v4000, 16
      %v4106 = vrot.slane %v4104, 6
      %v4107 = vshll.u32 %v4000, 16
      %v4109 = vrot.slane %v4107, 7
      %v4110 = vor.u32 %v4106, %v4109
      %v4111 = vsel %vm4078, %v4101, %v4110
      %v4113 = vshrl.u32 %v4001, 16
      %v4115 = vrot.slane %v4113, 6
      %v4116 = vshll.u32 %v4001, 16
      %v4118 = vrot.slane %v4116, 7
      %v4119 = vor.u32 %v4115, %v4118
      %v4120 = vsel %vm4078, %v4110, %v4119
      %4121 = vrot.lane.b32.xlu0 %v4090, 64
      %v4122 = vpop.permute.xlu0 %4121
      %4123 = vrot.lane.b32.xlu0 %v4094, 64
      %v4124 = vpop.permute.xlu0 %4123
      %4125 = vrot.lane.b32.xlu0 %v4098, 64
      %v4126 = vpop.permute.xlu0 %4125
      %4127 = vrot.lane.b32.xlu0 %v4102, 64
      %v4128 = vpop.permute.xlu0 %4127
      %4129 = vrot.lane.b32.xlu0 %v4111, 64
      %v4130 = vpop.permute.xlu0 %4129
      %4131 = vrot.lane.b32.xlu0 %v4120, 64
      %v4132 = vpop.permute.xlu0 %4131
      %v4134 = vsel %vm822, %v3991, %v4050
      %v4137 = vsel %vm822, %v3992, %v4052
      %v4140 = vsel %vm822, %v3993, %v4054
      %v4143 = vsel %vm822, %v3994, %v4056
      %v4146 = vsel %vm822, %v3995, %v4058
      %v4150 = vsel %vm822, %v3996, %v4060
      %v4154 = vsel %vm822, %v4069, %v4122
      %v4158 = vsel %vm822, %v4071, %v4124
      %v4162 = vsel %vm822, %v4073, %v4126
      %v4166 = vsel %vm822, %v4075, %v4128
      %v4170 = vsel %vm822, %v4077, %v4130
      %v4174 = vsel %vm822, %v4076, %v4132
      %v4176 = vld [vmem:[%s3] sm:$0xf]
      %v4177 = vld [vmem:[%s3 + $0x4] sm:$0xf]
      %v4178 = vld [vmem:[%s3 + $0x8] sm:$0xf]
      %v4179 = vld [vmem:[%s3 + $0xc] sm:$0xf]
      %v4180 = vld [vmem:[%s3 + $0x10] sm:$0xf]
      %v4181 = vld [vmem:[%s3 + $0x14] sm:$0xf]
      %v4182 = vld [vmem:[%s3 + $0x18] sm:$0xf]
      %v4183 = vld [vmem:[%s3 + $0x1c] sm:$0xf]
      %v4184 = vld [vmem:[%s3 + $0x20] sm:$0xf]
      %v4185 = vld [vmem:[%s3 + $0x24] sm:$0xf]
      %v4186 = vld [vmem:[%s3 + $0x28] sm:$0xf]
      %v4187 = vld [vmem:[%s3 + $0x2c] sm:$0xf]
      %v4188 = vld [vmem:[%s3 + $0x30] sm:$0xf]
      %v4189 = vld [vmem:[%s3 + $0x34] sm:$0xf]
      %v4190 = vld [vmem:[%s3 + $0x38] sm:$0xf]
      %v4191 = vld [vmem:[%s3 + $0x3c] sm:$0xf]
      %v4192 = vld [vmem:[%s3 + $0x40] sm:$0xf]
      %v4193 = vld [vmem:[%s3 + $0x44] sm:$0xf]
      %v4194 = vld [vmem:[%s3 + $0x48] sm:$0xf]
      %v4195 = vld [vmem:[%s3 + $0x4c] sm:$0xf]
      %v4196 = vld [vmem:[%s3 + $0x50] sm:$0xf]
      %v4197 = vld [vmem:[%s3 + $0x54] sm:$0xf]
      %v4198 = vld [vmem:[%s3 + $0x58] sm:$0xf]
      %v4199 = vld [vmem:[%s3 + $0x5c] sm:$0xf]
      %v4200 = vld [vmem:[%s3 + $0x60] sm:$0xf]
      %v4201 = vld [vmem:[%s3 + $0x64] sm:$0xf]
      %v4202 = vld [vmem:[%s3 + $0x68] sm:$0xf]
      %v4203 = vld [vmem:[%s3 + $0x6c] sm:$0xf]
      %v4204 = vld [vmem:[%s3 + $0x70] sm:$0xf]
      %v4205 = vld [vmem:[%s3 + $0x74] sm:$0xf]
      %v4206 = vld [vmem:[%s3 + $0x78] sm:$0xf]
      %v4207 = vld [vmem:[%s3 + $0x7c] sm:$0xf]
      %v4208 = vld [vmem:[#allocation3] sm:$0x80]
      %v4209 = vld [vmem:[#allocation3 + $0x30] sm:$0xf]
      %v4210 = vld [vmem:[#allocation3 + $0x8] sm:$0xe0]
      %v4211 = vld [vmem:[#allocation3 + $0x30] sm:$0xff]
      %v4212 = vld [vmem:[#allocation3 + $0x38] sm:$0x1]
      %v4213 = vld [vmem:[#allocation3 + $0x38] sm:$0x3]
      %v4215 = vshrl.u32 %v4208, 16
      %v4217 = vsel %vm662, %v4215, %v4012
      %v4218 = vrot.slane %v4107, 1
      %v4219 = vsel %vm662, %v4040, %v4218
      %v4220 = vor.u32 %v4104, %v4218
      %v4222 = vshll.u32 %v4209, 16
      %v4224 = vrot.slane %v4222, 1
      %v4225 = vsel %vm662, %v4220, %v4224
      %v4226 = vshrl.u32 %v4209, 16
      %v4228 = vor.u32 %v4226, %v4224
      %4229 = vrot.lane.b32.xlu0 %v4217, 64
      %v4230 = vpop.permute.xlu0 %4229
      %4231 = vrot.lane.b32.xlu0 %v4219, 64
      %v4232 = vpop.permute.xlu0 %4231
      %4233 = vrot.lane.b32.xlu0 %v4225, 64
      %v4234 = vpop.permute.xlu0 %4233
      %4235 = vrot.lane.b32.xlu0 %v4228, 64
      %v4236 = vpop.permute.xlu0 %4235
      %vm4241 = vcmask 1041408
      %v4242 = vrot.slane %v4210, 6
      %v4243 = vrot.slane %v3993, 6
      %v4244 = vsel %vm4241, %v4242, %v4243
      %v4245 = vrot.slane %v3994, 6
      %v4246 = vsel %vm4241, %v4243, %v4245
      %v4247 = vrot.slane %v3995, 6
      %v4248 = vsel %vm4241, %v4245, %v4247
      %v4249 = vrot.slane %v4000, 6
      %v4250 = vsel %vm4241, %v4247, %v4249
      %v4251 = vrot.slane %v4211, 6
      %v4252 = vsel %vm4241, %v4249, %v4251
      %v4253 = vrot.slane %v4212, 6
      %v4254 = vsel %vm4241, %v4251, %v4253
      %v4256 = vshrl.u32 %v4210, 16
      %v4258 = vrot.slane %v4256, 6
      %v4259 = vshll.u32 %v4210, 16
      %v4261 = vrot.slane %v4259, 7
      %v4262 = vor.u32 %v4258, %v4261
      %v4263 = vsel %vm4078, %v4262, %v4093
      %v4265 = vshrl.u32 %v4211, 16
      %v4267 = vrot.slane %v4265, 6
      %v4268 = vshll.u32 %v4211, 16
      %v4270 = vrot.slane %v4268, 7
      %v4271 = vor.u32 %v4267, %v4270
      %v4272 = vsel %vm4078, %v4110, %v4271
      %v4274 = vshrl.u32 %v4213, 16
      %v4276 = vrot.slane %v4274, 6
      %v4277 = vshll.u32 %v4213, 16
      %v4279 = vrot.slane %v4277, 7
      %v4280 = vor.u32 %v4276, %v4279
      %v4281 = vsel %vm4078, %v4271, %v4280
      %4282 = vrot.lane.b32.xlu0 %v4262, 64
      %v4283 = vpop.permute.xlu0 %4282
      %4284 = vrot.lane.b32.xlu0 %v4263, 64
      %v4285 = vpop.permute.xlu0 %4284
      %4286 = vrot.lane.b32.xlu0 %v4272, 64
      %v4287 = vpop.permute.xlu0 %4286
      %4288 = vrot.lane.b32.xlu0 %v4281, 64
      %v4289 = vpop.permute.xlu0 %4288
      %v4291 = vsel %vm822, %v4208, %v4230
      %v4293 = vsel %vm822, %v3995, %v4232
      %v4295 = vsel %vm822, %v4000, %v4234
      %v4297 = vsel %vm822, %v4001, %v4236
      %v4300 = vsel %vm822, %v4242, %v4283
      %v4303 = vsel %vm822, %v4244, %v4285
      %v4305 = vsel %vm822, %v4246, %v4126
      %v4307 = vsel %vm822, %v4248, %v4128
      %v4309 = vsel %vm822, %v4250, %v4130
      %v4312 = vsel %vm822, %v4252, %v4287
      %v4315 = vsel %vm822, %v4254, %v4289
      %v4316 = vld [vmem:[%s3 + $0x80] sm:$0xf]
      %v4317 = vld [vmem:[%s3 + $0x84] sm:$0xf]
      %v4318 = vld [vmem:[%s3 + $0x88] sm:$0xf]
      %v4319 = vld [vmem:[%s3 + $0x8c] sm:$0xf]
      %v4320 = vld [vmem:[%s3 + $0x90] sm:$0xf]
      %v4321 = vld [vmem:[%s3 + $0x94] sm:$0xf]
      %v4322 = vld [vmem:[%s3 + $0x98] sm:$0xf]
      %v4323 = vld [vmem:[%s3 + $0x9c] sm:$0xf]
      %v4324 = vld [vmem:[%s3 + $0xa0] sm:$0xf]
      %v4325 = vld [vmem:[%s3 + $0xa4] sm:$0xf]
      %v4326 = vld [vmem:[%s3 + $0xa8] sm:$0xf]
      %v4327 = vld [vmem:[%s3 + $0xac] sm:$0xf]
      %v4328 = vld [vmem:[%s3 + $0xb0] sm:$0xf]
      %v4329 = vld [vmem:[%s3 + $0xb4] sm:$0xf]
      %v4330 = vld [vmem:[%s3 + $0xb8] sm:$0xf]
      %v4331 = vld [vmem:[%s3 + $0xbc] sm:$0xf]
      %v4332 = vld [vmem:[%s3 + $0xc0] sm:$0xf]
      %v4333 = vld [vmem:[%s3 + $0xc4] sm:$0xf]
      %v4334 = vld [vmem:[%s3 + $0xc8] sm:$0xf]
      %v4335 = vld [vmem:[%s3 + $0xcc] sm:$0xf]
      %v4336 = vld [vmem:[%s3 + $0xd0] sm:$0xf]
      %v4337 = vld [vmem:[%s3 + $0xd4] sm:$0xf]
      %v4338 = vld [vmem:[%s3 + $0xd8] sm:$0xf]
      %v4339 = vld [vmem:[%s3 + $0xdc] sm:$0xf]
      %v4340 = vld [vmem:[%s3 + $0xe0] sm:$0xf]
      %v4341 = vld [vmem:[%s3 + $0xe4] sm:$0xf]
      %v4342 = vld [vmem:[%s3 + $0xe8] sm:$0xf]
      %v4343 = vld [vmem:[%s3 + $0xec] sm:$0xf]
      %v4344 = vld [vmem:[%s3 + $0xf0] sm:$0xf]
      %v4345 = vld [vmem:[%s3 + $0xf4] sm:$0xf]
      %v4346 = vld [vmem:[%s3 + $0xf8] sm:$0xf]
      %v4347 = vld [vmem:[%s3 + $0xfc] sm:$0xf]
      %vm4362 = vcmask 1040384
      %v4363 = vrot.slane %v4291, 7
      %v4364 = vrot.slane %v4137, 7
      %v4365 = vsel %vm4362, %v4363, %v4364
      %v4366 = vrot.slane %v4300, 7
      %v4367 = vrot.slane %v4303, 7
      %v4368 = vsel %vm4362, %v4366, %v4367
      %v4369 = vrot.slane %v4140, 7
      %v4370 = vsel %vm4362, %v4364, %v4369
      %v4371 = vrot.slane %v4305, 7
      %v4372 = vsel %vm4362, %v4367, %v4371
      %v4373 = vrot.slane %v4143, 7
      %v4374 = vsel %vm4362, %v4369, %v4373
      %v4375 = vrot.slane %v4307, 7
      %v4376 = vsel %vm4362, %v4371, %v4375
      %v4377 = vrot.slane %v4293, 7
      %v4378 = vsel %vm4362, %v4373, %v4377
      %v4379 = vrot.slane %v4309, 7
      %v4380 = vsel %vm4362, %v4375, %v4379
      %v4381 = vrot.slane %v4295, 7
      %v4382 = vsel %vm4362, %v4377, %v4381
      %v4383 = vrot.slane %v4312, 7
      %v4384 = vsel %vm4362, %v4379, %v4383
      %v4385 = vrot.slane %v4297, 7
      %v4386 = vsel %vm4362, %v4381, %v4385
      %v4387 = vrot.slane %v4315, 7
      %v4388 = vsel %vm4362, %v4383, %v4387
      %v4433 = vunpack.c.l.b16 %v4316
      %v4434 = vunpack.c.l.b16 %v4317
      %v4435 = vunpack.c.l.b16 %v4318
      %v4436 = vunpack.c.l.b16 %v4319
      %v4437 = vunpack.c.l.b16 %v4320
      %v4438 = vunpack.c.l.b16 %v4321
      %v4439 = vunpack.c.l.b16 %v4322
      %v4440 = vunpack.c.l.b16 %v4323
      %v4441 = vunpack.c.l.b16 %v4324
      %v4442 = vunpack.c.l.b16 %v4325
      %v4443 = vunpack.c.l.b16 %v4326
      %v4444 = vunpack.c.l.b16 %v4327
      %v4445 = vunpack.c.l.b16 %v4328
      %v4446 = vunpack.c.l.b16 %v4329
      %v4447 = vunpack.c.l.b16 %v4330
      %v4448 = vunpack.c.l.b16 %v4331
      %v4449 = vunpack.c.l.b16 %v4332
      %v4450 = vunpack.c.l.b16 %v4333
      %v4451 = vunpack.c.l.b16 %v4334
      %v4452 = vunpack.c.l.b16 %v4335
      %v4453 = vunpack.c.l.b16 %v4336
      %v4454 = vunpack.c.l.b16 %v4337
      %v4455 = vunpack.c.l.b16 %v4338
      %v4456 = vunpack.c.l.b16 %v4339
      %v4457 = vunpack.c.l.b16 %v4340
      %v4458 = vunpack.c.l.b16 %v4341
      %v4459 = vunpack.c.l.b16 %v4342
      %v4460 = vunpack.c.l.b16 %v4343
      %v4461 = vunpack.c.l.b16 %v4344
      %v4462 = vunpack.c.l.b16 %v4345
      %v4463 = vunpack.c.l.b16 %v4346
      %v4464 = vunpack.c.l.b16 %v4347
      %v4465 = vpack.c.b16 %v4434, %v4433
      %v4466 = vpack.c.b16 %v4436, %v4435
      %v4467 = vpack.c.b16 %v4438, %v4437
      %v4468 = vpack.c.b16 %v4440, %v4439
      %v4469 = vpack.c.b16 %v4442, %v4441
      %v4470 = vpack.c.b16 %v4444, %v4443
      %v4471 = vpack.c.b16 %v4446, %v4445
      %v4472 = vpack.c.b16 %v4448, %v4447
      %v4473 = vpack.c.b16 %v4450, %v4449
      %v4474 = vpack.c.b16 %v4452, %v4451
      %v4475 = vpack.c.b16 %v4454, %v4453
      %v4476 = vpack.c.b16 %v4456, %v4455
      %v4477 = vpack.c.b16 %v4458, %v4457
      %v4478 = vpack.c.b16 %v4460, %v4459
      %v4479 = vpack.c.b16 %v4462, %v4461
      %v4480 = vpack.c.b16 %v4464, %v4463
      %4497 = vmatprep.subr.bf16.mxu0 0
      %4498 = vmatpush1.bf16.msra.mxu0 %v4465
      %4499 = vmatprep.subr.bf16.mxu0 0
      %4500 = vmatpush1.bf16.msra.mxu0 %v4466
      %4501 = vmatprep.subr.bf16.mxu0 0
      %4502 = vmatpush1.bf16.msra.mxu0 %v4467
      %4503 = vmatprep.subr.bf16.mxu0 0
      %4504 = vmatpush1.bf16.msra.mxu0 %v4468
      %4505 = vmatprep.subr.bf16.mxu0 0
      %4506 = vmatpush1.bf16.msra.mxu0 %v4469
      %4507 = vmatprep.subr.bf16.mxu0 0
      %4508 = vmatpush1.bf16.msra.mxu0 %v4470
      %4509 = vmatprep.subr.bf16.mxu0 0
      %4510 = vmatpush1.bf16.msra.mxu0 %v4471
      %4511 = vmatprep.subr.bf16.mxu0 0
      %4512 = vmatpush1.bf16.msra.mxu0 %v4472
      %4513 = vmatprep.subr.bf16.mxu0 0
      %4514 = vmatpush1.bf16.msra.mxu0 %v4473
      %4515 = vmatprep.subr.bf16.mxu0 0
      %4516 = vmatpush1.bf16.msra.mxu0 %v4474
      %4517 = vmatprep.subr.bf16.mxu0 0
      %4518 = vmatpush1.bf16.msra.mxu0 %v4475
      %4519 = vmatprep.subr.bf16.mxu0 0
      %4520 = vmatpush1.bf16.msra.mxu0 %v4476
      %4521 = vmatprep.subr.bf16.mxu0 0
      %4522 = vmatpush1.bf16.msra.mxu0 %v4477
      %4523 = vmatprep.subr.bf16.mxu0 0
      %4524 = vmatpush1.bf16.msra.mxu0 %v4478
      %4525 = vmatprep.subr.bf16.mxu0 0
      %4526 = vmatpush1.bf16.msra.mxu0 %v4479
      %4527 = vmatprep.subr.bf16.mxu0 0
      %4528 = vmatpush1.bf16.msra.mxu0 %v4480
      %4529 = vmatprep.mubr.bf16.mxu0 %v4368
      %4530 = vmatmul.mubr.bf16.gmra.mrb[0].mxu0 %v4365
      %v4531 = vpop.f32.mrb[0].mxu0
      %v4532 = vadd.f32 0.0, %v4531
      %v4533 = vpop.f32.mrb[0].mxu0
      %v4534 = vpop.f32.mrb[0].mxu0
      %v4535 = vadd.f32 0.0, %v4534
      %v4536 = vpop.f32.mrb[0].mxu0
      %4537 = vmatprep.mubr.bf16.mxu0 %v4372
      %4538 = vmatmul.mubr.bf16.gmra.mrb[0].mxu0 %v4370
      %v4539 = vpop.f32.mrb[0].mxu0
      %v4540 = vadd.f32 0.0, %v4539
      %v4541 = vpop.f32.mrb[0].mxu0
      %v4542 = vpop.f32.mrb[0].mxu0
      %v4543 = vadd.f32 0.0, %v4542
      %v4544 = vpop.f32.mrb[0].mxu0
      %4545 = vmatprep.mubr.bf16.mxu0 %v4376
      %4546 = vmatmul.mubr.bf16.gmra.mrb[0].mxu0 %v4374
      %v4547 = vpop.f32.mrb[0].mxu0
      %v4548 = vadd.f32 0.0, %v4547
      %v4549 = vpop.f32.mrb[0].mxu0
      %v4550 = vpop.f32.mrb[0].mxu0
      %v4551 = vadd.f32 0.0, %v4550
      %v4552 = vpop.f32.mrb[0].mxu0
      %4553 = vmatprep.mubr.bf16.mxu0 %v4380
      %4554 = vmatmul.mubr.bf16.gmra.mrb[0].mxu0 %v4378
      %v4555 = vpop.f32.mrb[0].mxu0
      %v4556 = vadd.f32 0.0, %v4555
      %v4557 = vpop.f32.mrb[0].mxu0
      %v4558 = vpop.f32.mrb[0].mxu0
      %v4559 = vadd.f32 0.0, %v4558
      %v4560 = vpop.f32.mrb[0].mxu0
      %4561 = vmatprep.mubr.bf16.mxu0 %v4384
      %4562 = vmatmul.mubr.bf16.gmra.mrb[0].mxu0 %v4382
      %v4563 = vpop.f32.mrb[0].mxu0
      %v4564 = vadd.f32 0.0, %v4563
      %v4565 = vpop.f32.mrb[0].mxu0
      %v4566 = vpop.f32.mrb[0].mxu0
      %v4567 = vadd.f32 0.0, %v4566
      %v4568 = vpop.f32.mrb[0].mxu0
      %4569 = vmatprep.mubr.bf16.mxu0 %v4388
      %4570 = vmatmul.mubr.bf16.gmra.mrb[0].mxu0 %v4386
      %v4571 = vpop.f32.mrb[0].mxu0
      %v4572 = vadd.f32 0.0, %v4571
      %v4573 = vpop.f32.mrb[0].mxu0
      %v4574 = vpop.f32.mrb[0].mxu0
      %v4575 = vpop.f32.mrb[0].mxu0
      %4576 = vdwg.mxu0
      %v4609 = vunpack.c.l.b16 %v4176
      %v4610 = vunpack.c.l.b16 %v4177
      %v4611 = vunpack.c.l.b16 %v4178
      %v4612 = vunpack.c.l.b16 %v4179
      %v4613 = vunpack.c.l.b16 %v4180
      %v4614 = vunpack.c.l.b16 %v4181
      %v4615 = vunpack.c.l.b16 %v4182
      %v4616 = vunpack.c.l.b16 %v4183
      %v4617 = vunpack.c.l.b16 %v4184
      %v4618 = vunpack.c.l.b16 %v4185
      %v4619 = vunpack.c.l.b16 %v4186
      %v4620 = vunpack.c.l.b16 %v4187
      %v4621 = vunpack.c.l.b16 %v4188
      %v4622 = vunpack.c.l.b16 %v4189
      %v4623 = vunpack.c.l.b16 %v4190
      %v4624 = vunpack.c.l.b16 %v4191
      %v4625 = vunpack.c.l.b16 %v4192
      %v4626 = vunpack.c.l.b16 %v4193
      %v4627 = vunpack.c.l.b16 %v4194
      %v4628 = vunpack.c.l.b16 %v4195
      %v4629 = vunpack.c.l.b16 %v4196
      %v4630 = vunpack.c.l.b16 %v4197
      %v4631 = vunpack.c.l.b16 %v4198
      %v4632 = vunpack.c.l.b16 %v4199
      %v4633 = vunpack.c.l.b16 %v4200
      %v4634 = vunpack.c.l.b16 %v4201
      %v4635 = vunpack.c.l.b16 %v4202
      %v4636 = vunpack.c.l.b16 %v4203
      %v4637 = vunpack.c.l.b16 %v4204
      %v4638 = vunpack.c.l.b16 %v4205
      %v4639 = vunpack.c.l.b16 %v4206
      %v4640 = vunpack.c.l.b16 %v4207
      %v4641 = vpack.c.b16 %v4610, %v4609
      %v4642 = vpack.c.b16 %v4612, %v4611
      %v4643 = vpack.c.b16 %v4614, %v4613
      %v4644 = vpack.c.b16 %v4616, %v4615
      %v4645 = vpack.c.b16 %v4618, %v4617
      %v4646 = vpack.c.b16 %v4620, %v4619
      %v4647 = vpack.c.b16 %v4622, %v4621
      %v4648 = vpack.c.b16 %v4624, %v4623
      %v4649 = vpack.c.b16 %v4626, %v4625
      %v4650 = vpack.c.b16 %v4628, %v4627
      %v4651 = vpack.c.b16 %v4630, %v4629
      %v4652 = vpack.c.b16 %v4632, %v4631
      %v4653 = vpack.c.b16 %v4634, %v4633
      %v4654 = vpack.c.b16 %v4636, %v4635
      %v4655 = vpack.c.b16 %v4638, %v4637
      %v4656 = vpack.c.b16 %v4640, %v4639
      %4673 = vmatprep.subr.bf16.mxu0 0
      %4674 = vmatpush1.bf16.msra.mxu0 %v4641
      %4675 = vmatprep.subr.bf16.mxu0 0
      %4676 = vmatpush1.bf16.msra.mxu0 %v4642
      %4677 = vmatprep.subr.bf16.mxu0 0
      %4678 = vmatpush1.bf16.msra.mxu0 %v4643
      %4679 = vmatprep.subr.bf16.mxu0 0
      %4680 = vmatpush1.bf16.msra.mxu0 %v4644
      %4681 = vmatprep.subr.bf16.mxu0 0
      %4682 = vmatpush1.bf16.msra.mxu0 %v4645
      %4683 = vmatprep.subr.bf16.mxu0 0
      %4684 = vmatpush1.bf16.msra.mxu0 %v4646
      %4685 = vmatprep.subr.bf16.mxu0 0
      %4686 = vmatpush1.bf16.msra.mxu0 %v4647
      %4687 = vmatprep.subr.bf16.mxu0 0
      %4688 = vmatpush1.bf16.msra.mxu0 %v4648
      %4689 = vmatprep.subr.bf16.mxu0 0
      %4690 = vmatpush1.bf16.msra.mxu0 %v4649
      %4691 = vmatprep.subr.bf16.mxu0 0
      %4692 = vmatpush1.bf16.msra.mxu0 %v4650
      %4693 = vmatprep.subr.bf16.mxu0 0
      %4694 = vmatpush1.bf16.msra.mxu0 %v4651
      %4695 = vmatprep.subr.bf16.mxu0 0
      %4696 = vmatpush1.bf16.msra.mxu0 %v4652
      %4697 = vmatprep.subr.bf16.mxu0 0
      %4698 = vmatpush1.bf16.msra.mxu0 %v4653
      %4699 = vmatprep.subr.bf16.mxu0 0
      %4700 = vmatpush1.bf16.msra.mxu0 %v4654
      %4701 = vmatprep.subr.bf16.mxu0 0
      %4702 = vmatpush1.bf16.msra.mxu0 %v4655
      %4703 = vmatprep.subr.bf16.mxu0 0
      %4704 = vmatpush1.bf16.msra.mxu0 %v4656
      %4705 = vmatprep.mubr.bf16.mxu0 %v4154
      %4706 = vmatmul.mubr.bf16.gmra.mrb[0].mxu0 %v4134
      %v4707 = vpop.f32.mrb[0].mxu0
      %v4708 = vadd.f32 %v4532, %v4707
      %v4709 = vpop.f32.mrb[0].mxu0
      %v4710 = vpop.f32.mrb[0].mxu0
      %v4711 = vadd.f32 %v4535, %v4710
      %v4712 = vpop.f32.mrb[0].mxu0
      %4713 = vmatprep.mubr.bf16.mxu0 %v4158
      %4714 = vmatmul.mubr.bf16.gmra.mrb[0].mxu0 %v4137
      %v4715 = vpop.f32.mrb[0].mxu0
      %v4716 = vadd.f32 %v4540, %v4715
      %v4717 = vpop.f32.mrb[0].mxu0
      %v4718 = vpop.f32.mrb[0].mxu0
      %v4719 = vadd.f32 %v4543, %v4718
      %v4720 = vpop.f32.mrb[0].mxu0
      %4721 = vmatprep.mubr.bf16.mxu0 %v4162
      %4722 = vmatmul.mubr.bf16.gmra.mrb[0].mxu0 %v4140
      %v4723 = vpop.f32.mrb[0].mxu0
      %v4724 = vadd.f32 %v4548, %v4723
      %v4725 = vpop.f32.mrb[0].mxu0
      %v4726 = vpop.f32.mrb[0].mxu0
      %v4727 = vadd.f32 %v4551, %v4726
      %v4728 = vpop.f32.mrb[0].mxu0
      %4729 = vmatprep.mubr.bf16.mxu0 %v4166
      %4730 = vmatmul.mubr.bf16.gmra.mrb[0].mxu0 %v4143
      %v4731 = vpop.f32.mrb[0].mxu0
      %v4732 = vadd.f32 %v4556, %v4731
      %v4733 = vpop.f32.mrb[0].mxu0
      %v4734 = vpop.f32.mrb[0].mxu0
      %v4735 = vadd.f32 %v4559, %v4734
      %v4736 = vpop.f32.mrb[0].mxu0
      %4737 = vmatprep.mubr.bf16.mxu0 %v4170
      %4738 = vmatmul.mubr.bf16.gmra.mrb[0].mxu0 %v4146
      %v4739 = vpop.f32.mrb[0].mxu0
      %v4740 = vadd.f32 %v4564, %v4739
      %v4741 = vpop.f32.mrb[0].mxu0
      %v4742 = vpop.f32.mrb[0].mxu0
      %v4743 = vadd.f32 %v4567, %v4742
      %v4744 = vpop.f32.mrb[0].mxu0
      %4745 = vmatprep.mubr.bf16.mxu0 %v4174
      %4746 = vmatmul.mubr.bf16.gmra.mrb[0].mxu0 %v4150
      %v4747 = vpop.f32.mrb[0].mxu0
      %v4748 = vadd.f32 %v4572, %v4747
      %v4749 = vpop.f32.mrb[0].mxu0
      %v4750 = vpop.f32.mrb[0].mxu0
      %v4751 = vpop.f32.mrb[0].mxu0
      %4752 = vdwg.mxu0
      %v4753 = vld [vmem:[#allocation3 + $0x8] sm:$0xc0]
      %v4754 = vld [vmem:[%s3 + $0x100] sm:$0xf]
      %v4755 = vld [vmem:[%s3 + $0x104] sm:$0xf]
      %v4756 = vld [vmem:[%s3 + $0x108] sm:$0xf]
      %v4757 = vld [vmem:[%s3 + $0x10c] sm:$0xf]
      %v4758 = vld [vmem:[%s3 + $0x110] sm:$0xf]
      %v4759 = vld [vmem:[%s3 + $0x114] sm:$0xf]
      %v4760 = vld [vmem:[%s3 + $0x118] sm:$0xf]
      %v4761 = vld [vmem:[%s3 + $0x11c] sm:$0xf]
      %v4764 = vrot.slane %v4753, 6
      %v4765 = vsel %vm4241, %v4764, %v4243
      %v4766 = vrot.slane %v4213, 6
      %v4767 = vsel %vm4241, %v4251, %v4766
      %v4776 = vunpack.c.l.b16 %v4754
      %v4777 = vunpack.c.l.b16 %v4755
      %v4778 = vunpack.c.l.b16 %v4756
      %v4779 = vunpack.c.l.b16 %v4757
      %v4780 = vunpack.c.l.b16 %v4758
      %v4781 = vunpack.c.l.b16 %v4759
      %v4782 = vunpack.c.l.b16 %v4760
      %v4783 = vunpack.c.l.b16 %v4761
      %v4784 = vpack.c.b16 %v4777, %v4776
      %v4785 = vpack.c.b16 %v4779, %v4778
      %v4786 = vpack.c.b16 %v4781, %v4780
      %v4787 = vpack.c.b16 %v4783, %v4782
      %v4793 = vsel %vm822, %v4765, 0
      %v4795 = vsel %vm822, %v4246, 0
      %v4797 = vsel %vm822, %v4248, 0
      %v4799 = vsel %vm822, %v4250, 0
      %v4801 = vsel %vm822, %v4252, 0
      %v4804 = vsel %vm822, %v4767, 0
      %4806 = vmatprep.subr.bf16.mxu0 0
      %4807 = vmatpush1.bf16.msra.mxu0 %v4784
      %4808 = vmatprep.subr.bf16.mxu0 0
      %4809 = vmatpush1.bf16.msra.mxu0 %v4785
      %4810 = vmatprep.subr.bf16.mxu0 0
      %4811 = vmatpush1.bf16.msra.mxu0 %v4786
      %4812 = vmatprep.subr.bf16.mxu0 0
      %4813 = vmatpush1.bf16.msra.mxu0 %v4787
      %4814 = vmatprep.subr.bf16.mxu0 0
      %4815 = vmatpush1.bf16.msra.mxu0 0
      %4816 = vmatprep.subr.bf16.mxu0 0
      %4817 = vmatpush1.bf16.msra.mxu0 0
      %4818 = vmatprep.subr.bf16.mxu0 0
      %4819 = vmatpush1.bf16.msra.mxu0 0
      %4820 = vmatprep.subr.bf16.mxu0 0
      %4821 = vmatpush1.bf16.msra.mxu0 0
      %4822 = vmatprep.subr.bf16.mxu0 0
      %4823 = vmatpush1.bf16.msra.mxu0 0
      %4824 = vmatprep.subr.bf16.mxu0 0
      %4825 = vmatpush1.bf16.msra.mxu0 0
      %4826 = vmatprep.subr.bf16.mxu0 0
      %4827 = vmatpush1.bf16.msra.mxu0 0
      %4828 = vmatprep.subr.bf16.mxu0 0
      %4829 = vmatpush1.bf16.msra.mxu0 0
      %4830 = vmatprep.subr.bf16.mxu0 0
      %4831 = vmatpush1.bf16.msra.mxu0 0
      %4832 = vmatprep.subr.bf16.mxu0 0
      %4833 = vmatpush1.bf16.msra.mxu0 0
      %4834 = vmatprep.subr.bf16.mxu0 0
      %4835 = vmatpush1.bf16.msra.mxu0 0
      %4836 = vmatprep.subr.bf16.mxu0 0
      %4837 = vmatpush1.bf16.msra.mxu0 0
      %4838 = vmatprep.mubr.bf16.mxu0 0
      %4839 = vmatmul.mubr.bf16.gmra.mrb[0].mxu0 %v4793
      %v4840 = vpop.f32.mrb[0].mxu0
      %v4841 = vadd.f32 0.0, %v4840
      %v4842 = vpop.f32.mrb[0].mxu0
      %v4843 = vpop.f32.mrb[0].mxu0
      %v4844 = vadd.f32 0.0, %v4843
      %v4845 = vpop.f32.mrb[0].mxu0
      %4846 = vmatprep.mubr.bf16.mxu0 0
      %4847 = vmatmul.mubr.bf16.gmra.mrb[0].mxu0 %v4795
      %v4848 = vpop.f32.mrb[0].mxu0
      %v4849 = vadd.f32 0.0, %v4848
      %v4850 = vpop.f32.mrb[0].mxu0
      %v4851 = vpop.f32.mrb[0].mxu0
      %v4852 = vadd.f32 0.0, %v4851
      %v4853 = vpop.f32.mrb[0].mxu0
      %4854 = vmatprep.mubr.bf16.mxu0 0
      %4855 = vmatmul.mubr.bf16.gmra.mrb[0].mxu0 %v4797
      %v4856 = vpop.f32.mrb[0].mxu0
      %v4857 = vadd.f32 0.0, %v4856
      %v4858 = vpop.f32.mrb[0].mxu0
      %v4859 = vpop.f32.mrb[0].mxu0
      %v4860 = vadd.f32 0.0, %v4859
      %v4861 = vpop.f32.mrb[0].mxu0
      %4862 = vmatprep.mubr.bf16.mxu0 0
      %4863 = vmatmul.mubr.bf16.gmra.mrb[0].mxu0 %v4799
      %v4864 = vpop.f32.mrb[0].mxu0
      %v4865 = vadd.f32 0.0, %v4864
      %v4866 = vpop.f32.mrb[0].mxu0
      %v4867 = vpop.f32.mrb[0].mxu0
      %v4868 = vadd.f32 0.0, %v4867
      %v4869 = vpop.f32.mrb[0].mxu0
      %4870 = vmatprep.mubr.bf16.mxu0 0
      %4871 = vmatmul.mubr.bf16.gmra.mrb[0].mxu0 %v4801
      %v4872 = vpop.f32.mrb[0].mxu0
      %v4873 = vadd.f32 0.0, %v4872
      %v4874 = vpop.f32.mrb[0].mxu0
      %v4875 = vpop.f32.mrb[0].mxu0
      %v4876 = vadd.f32 0.0, %v4875
      %v4877 = vpop.f32.mrb[0].mxu0
      %4878 = vmatprep.mubr.bf16.mxu0 0
      %4879 = vmatmul.mubr.bf16.gmra.mrb[0].mxu0 %v4804
      %v4880 = vpop.f32.mrb[0].mxu0
      %v4881 = vadd.f32 0.0, %v4880
      %v4882 = vpop.f32.mrb[0].mxu0
      %v4883 = vpop.f32.mrb[0].mxu0
      %v4884 = vpop.f32.mrb[0].mxu0
      %4885 = vdwg.mxu0
      %v4886 = vadd.f32 %v4708, %v4841
      %v4887 = vadd.f32 %v4711, %v4844
      %v4888 = vadd.f32 %v4716, %v4849
      %v4889 = vadd.f32 %v4719, %v4852
      %v4890 = vadd.f32 %v4724, %v4857
      %v4891 = vadd.f32 %v4727, %v4860
      %v4892 = vadd.f32 %v4732, %v4865
      %v4893 = vadd.f32 %v4735, %v4868
      %v4894 = vadd.f32 %v4740, %v4873
      %v4895 = vadd.f32 %v4743, %v4876
      %v4896 = vadd.f32 %v4748, %v4881
      %v4897 = vld [vmem:[%s4] sm:$0x1]
      %v4899 = vlaneseq
      %v4900 = vshrl.u32 %v4899, 7
      %v4901 = vsub.s32 0, %v4900
      %v4902 = vrot.slane %v4897, %v4901
      %v4904 = vmul.f32 %v4886, %v4902
      %v4905 = vmul.f32 %v4887, %v4902
      %v4906 = vmul.f32 %v4888, %v4902
      %v4907 = vmul.f32 %v4889, %v4902
      %v4908 = vmul.f32 %v4890, %v4902
      %v4909 = vmul.f32 %v4891, %v4902
      %v4910 = vmul.f32 %v4892, %v4902
      %v4911 = vmul.f32 %v4893, %v4902
      %v4912 = vmul.f32 %v4894, %v4902
      %v4913 = vmul.f32 %v4895, %v4902
      %v4914 = vmul.f32 %v4896, %v4902
      %v4915 = vsel %vm822, %v4904, 0.0
      %4916 = vadd.xlane.f32.xlu0 %v4915
      %v4917 = vpop.xlane.xlu0 %4916
      %v4918 = vsel %vm822, %v4905, 0.0
      %4919 = vadd.xlane.f32.xlu0 %v4918
      %v4920 = vpop.xlane.xlu0 %4919
      %v4921 = vsel %vm822, %v4906, 0.0
      %4922 = vadd.xlane.f32.xlu0 %v4921
      %v4923 = vpop.xlane.xlu0 %4922
      %v4924 = vsel %vm822, %v4907, 0.0
      %4925 = vadd.xlane.f32.xlu0 %v4924
      %v4926 = vpop.xlane.xlu0 %4925
      %v4927 = vsel %vm822, %v4908, 0.0
      %4928 = vadd.xlane.f32.xlu0 %v4927
      %v4929 = vpop.xlane.xlu0 %4928
      %v4930 = vsel %vm822, %v4909, 0.0
      %4931 = vadd.xlane.f32.xlu0 %v4930
      %v4932 = vpop.xlane.xlu0 %4931
      %v4933 = vsel %vm822, %v4910, 0.0
      %4934 = vadd.xlane.f32.xlu0 %v4933
      %v4935 = vpop.xlane.xlu0 %4934
      %v4936 = vsel %vm822, %v4911, 0.0
      %4937 = vadd.xlane.f32.xlu0 %v4936
      %v4938 = vpop.xlane.xlu0 %4937
      %v4939 = vsel %vm822, %v4912, 0.0
      %4940 = vadd.xlane.f32.xlu0 %v4939
      %v4941 = vpop.xlane.xlu0 %4940
      %v4942 = vsel %vm822, %v4913, 0.0
      %4943 = vadd.xlane.f32.xlu0 %v4942
      %v4944 = vpop.xlane.xlu0 %4943
      %v4945 = vsel %vm822, %v4914, 0.0
      %4946 = vadd.xlane.f32.xlu0 %v4945
      %v4947 = vpop.xlane.xlu0 %4946
      %vm4948 = vcmask 7168
      %4949 = vst.msk [vmem:[%s224] sm:$0xff] %vm4948, %v4917
      %4950 = vst.msk [vmem:[%s224 + $0x8] sm:$0xff] %vm4948, %v4920
      %4951 = vst.msk [vmem:[%s224 + $0x10] sm:$0xff] %vm4948, %v4923
      %4952 = vst.msk [vmem:[%s224 + $0x18] sm:$0xff] %vm4948, %v4926
      %4953 = vst.msk [vmem:[%s224 + $0x20] sm:$0xff] %vm4948, %v4929
      %4954 = vst.msk [vmem:[%s224 + $0x28] sm:$0xff] %vm4948, %v4932
      %4955 = vst.msk [vmem:[%s224 + $0x30] sm:$0xff] %vm4948, %v4935
      %4956 = vst.msk [vmem:[%s224 + $0x38] sm:$0xff] %vm4948, %v4938
      %4957 = vst.msk [vmem:[%s224 + $0x40] sm:$0xff] %vm4948, %v4941
      %4958 = vst.msk [vmem:[%s224 + $0x48] sm:$0xff] %vm4948, %v4944
      %4959 = vst.msk [vmem:[%s224 + $0x50] sm:$0xff] %vm4948, %v4947
      %p4960 = scmp.lt.s32.totalorder %s16, 5
      %s4961 = scalar_select %p4960, %s16, 5
      %s4962 = smul.addr %s4961, 11
      %s4963 = smul.addr %s4962, 8
      %s4964 = scalar_lea.vmem %s5, %s4963
      // Predicated region
      $region41: #{generator_dn_x4_forward.1} parent=39 // pred_check
        %p4965 = pneg %p144
      $region42: #{generator_dn_x4_forward.1} parent=39 // pred_check_branch
        %4967 = sbr.rel (%p4965) target = $region44
      $region43: #{generator_dn_x4_forward.1} parent=39 // pred_region
        _
      $region44: #{generator_dn_x4_forward.1} parent=39 // pred_fallthru
        _
    $region40: #{generator_dn_x4_forward.1} parent=5 // pred_fallthru
      _
    %p4968 = scmp.le.s32.totalorder 2, %s11
    // Predicated region
    $region45: #{generator_dn_x4_forward.1} parent=5 // pred_check
      %p4969 = pneg %p4968
    $region46: #{generator_dn_x4_forward.1} parent=5 // pred_check_branch
      %4971 = sbr.rel (%p4969) target = $region48
    $region47: #{generator_dn_x4_forward.1} parent=5 // pred_region
      %s4972 = ssub.s32 %s11, 2
      // Predicated region
      $region49: #{generator_dn_x4_forward.1} parent=47 // pred_check
        %p4973 = pneg %p150
      $region50: #{generator_dn_x4_forward.1} parent=47 // pred_check_branch
        %4975 = sbr.rel (%p4973) target = $region52
      $region51: #{generator_dn_x4_forward.1} parent=47 // pred_region
        %p4976 = scmp.lt.s32.totalorder %s17, 5
        %s4977 = scalar_select %p4976, %s17, 5
        %s4978 = smul.addr %s4977, 11
        %s4979 = smul.addr %s4978, 8
        %s4980 = scalar_lea.vmem %s5, %s4979
      $region52: #{generator_dn_x4_forward.1} parent=47 // pred_fallthru
        _
    $region48: #{generator_dn_x4_forward.1} parent=5 // pred_fallthru
      _
  $region6: #{generator_dn_x4_forward.1} parent=0 // loop_footer
    %s15 = sadd.s32 1, %s11
  $region7: #{generator_dn_x4_forward.1} parent=0 // loop_footer_branch
    %10 = sbr.rel target = $region3
  $region8: #{generator_dn_x4_forward.1} parent=0 // loop_exit
    _

</llo_original>
